<compile_context>
chip_gen: v5e
topology: v5e:2x2
jax: 0.10.0
libtpu: 0.0.40
codegen_flags: <defaults>
</compile_context>

<pallas_src>
import jax
import jax.numpy as jnp
from jax.experimental import pallas as pl
from jax.experimental.pallas import tpu as pltpu


# ---------------------------------------------------------------------------
# Fused GhostBottleneck (s=1) forward
# ---------------------------------------------------------------------------
def _pick_batch_block(n, hw):
    """Images per grid step: target >=512 matmul rows, keep >=2 grid steps."""
    target = max(1, 512 // hw)
    divisors = [d for d in range(1, n + 1) if n % d == 0]
    good = [d for d in divisors if d <= target and n // d >= 2]
    okay = [d for d in divisors if d <= target]
    return max(good or okay or [1])


@jax.jit
def ghost_bottleneck_forward(x_nchw, kp):
    """x_nchw: (N, C1, H, W) f32; kp: prepped params (prep_ghost_params).

    Returns the GhostBottleneck(s=1) output as (N, C2, H, W) bfloat16.
    """
    N, C1, H, W = x_nchw.shape
    chh = C1 // 2                        # input half-width  (= c1 // 2)
    ch1 = kp["w1d"].shape[1] // W        # GhostConv1 half-width (= c2 // 4)
    ch2 = kp["w2d"].shape[1] // W        # GhostConv2 half-width (= c2 // 2)
    C2 = 2 * ch2
    assert C1 == C2 and chh == ch2, "s=1 GhostBottleneck requires c1 == c2"
    assert kp["w1bd"].shape == (2 * W * chh, W * ch1), "params built for other W"

    Wchh, Wc1, Wc2 = W * chh, W * ch1, W * ch2
    Wp1, Wp2 = (W + 4) * ch1, (W + 4) * ch2
    nb = _pick_batch_block(N, H * W)
    steps = N // nb

    # Lane-dense packed input: (2, N, H, W*chh) f32, channels fastest per pixel.
    x_pk = (x_nchw.reshape(N, 2, chh, H, W)
            .transpose(1, 0, 3, 4, 2)
            .reshape(2, N, H, Wchh))

    def kernel(x_ref, w1bd_ref, b1p_ref, w1d_ref, b1d_ref,
               w2bd_ref, b2p_ref, w2d_ref, b2d_ref,
               o_ref, pad1_ref, pad2_ref):
        f32 = jnp.float32
        bf16 = jnp.bfloat16

        x0 = x_ref[0]                                    # (nb, H, W*chh) f32
        x1 = x_ref[1]                                    # residual stays f32

        # -- GhostConv1.cv1: 1x1 conv (+folded BN) + SiLU ------------- MXU --
        lhs1 = jnp.concatenate(
            [x0.reshape(nb * H, Wchh), x1.reshape(nb * H, Wchh)],
            axis=-1).astype(bf16)                        # (nb*H, W*C1)
        y1a = jnp.dot(lhs1, w1bd_ref[...], preferred_element_type=f32)
        y1a = y1a + b1p_ref[0]
        y1a = y1a * jax.nn.sigmoid(y1a)                  # SiLU, (nb*H, W*ch1)

        # -- GhostConv1.cv2: 5x5 depthwise (+folded BN) + SiLU -------- VPU --
        z1 = jnp.zeros((nb, H, 2 * ch1), f32)
        pad1_ref[:, 2:2 + H, :] = jnp.concatenate(
            [z1, y1a.reshape(nb, H, Wc1), z1], axis=-1)
        zrow1 = jnp.zeros((nb, 2, Wp1), f32)
        pad1_ref[:, 0:2, :] = zrow1
        pad1_ref[:, H + 2:H + 4, :] = zrow1
        acc1 = jnp.zeros((nb, H, Wc1), f32)
        for dy in range(5):                              # static unrolled taps
            rows = pad1_ref[:, dy:dy + H, :]             # (nb, H, (W+4)*ch1)
            for dx in range(5):
                acc1 = acc1 + (rows[:, :, dx * ch1:dx * ch1 + Wc1]
                               * w1d_ref[5 * dy + dx])
        y1b = acc1 + b1d_ref[0]
        y1b = y1b * jax.nn.sigmoid(y1b)                  # (nb, H, W*ch1)

        # -- GhostConv2.cv1: 1x1 conv (+folded BN), no act ------------ MXU --
        # concat([y1a, y1b]) folded into one matmul via the stacked
        # block-diagonal weight.
        lhs2 = jnp.concatenate(
            [y1a.astype(bf16), y1b.reshape(nb * H, Wc1).astype(bf16)],
            axis=-1)                                     # (nb*H, 2*W*ch1)
        y2a = jnp.dot(lhs2, w2bd_ref[...], preferred_element_type=f32)
        y2a = y2a + b2p_ref[0]
        y2a_img = y2a.reshape(nb, H, Wc2)

        # -- GhostConv2.cv2: 5x5 depthwise (+folded BN), no act ------- VPU --
        z2 = jnp.zeros((nb, H, 2 * ch2), f32)
        pad2_ref[:, 2:2 + H, :] = jnp.concatenate([z2, y2a_img, z2], axis=-1)
        zrow2 = jnp.zeros((nb, 2, Wp2), f32)
        pad2_ref[:, 0:2, :] = zrow2
        pad2_ref[:, H + 2:H + 4, :] = zrow2
        acc2 = jnp.zeros((nb, H, Wc2), f32)
        for dy in range(5):
            rows = pad2_ref[:, dy:dy + H, :]             # (nb, H, (W+4)*ch2)
            for dx in range(5):
                acc2 = acc2 + (rows[:, :, dx * ch2:dx * ch2 + Wc2]
                               * w2d_ref[5 * dy + dx])
        y2b = acc2 + b2d_ref[0]                          # (nb, H, W*ch2)

        # -- channel concat + identity shortcut (f32 x), lane-dense stores ---
        o_ref[0] = (y2a_img + x0).astype(o_ref.dtype)
        o_ref[1] = (y2b + x1).astype(o_ref.dtype)

    def wspec(shape):
        return pl.BlockSpec(shape, lambda n: (0, 0))

    out_pk = pl.pallas_call(
        kernel,
        out_shape=jax.ShapeDtypeStruct((2, N, H, Wc2), jnp.bfloat16),
        grid_spec=pltpu.PrefetchScalarGridSpec(
            num_scalar_prefetch=0,
            grid=(steps,),
            in_specs=[
                pl.BlockSpec((2, nb, H, Wchh), lambda n: (0, n, 0, 0)),
                wspec((2 * Wchh, Wc1)),        # w1bd (block-diag, bf16)
                wspec((1, Wc1)),               # b1p
                wspec((25, Wc1)),              # w1d taps (tiled over W)
                wspec((1, Wc1)),               # b1d
                wspec((2 * Wc1, Wc2)),         # w2bd (block-diag, bf16)
                wspec((1, Wc2)),               # b2p
                wspec((25, Wc2)),              # w2d taps (tiled over W)
                wspec((1, Wc2)),               # b2d
            ],
            out_specs=pl.BlockSpec((2, nb, H, Wc2), lambda n: (0, n, 0, 0)),
            scratch_shapes=[
                pltpu.VMEM((nb, H + 4, Wp1), jnp.float32),
                pltpu.VMEM((nb, H + 4, Wp2), jnp.float32),
            ],
        ),
        compiler_params=pltpu.CompilerParams(
            dimension_semantics=("parallel",),
            vmem_limit_bytes=32 * 1024 * 1024,
        ),
    )(
        x_pk,
        kp["w1bd"], kp["b1p"], kp["w1d"], kp["b1d"],
        kp["w2bd"], kp["b2p"], kp["w2d"], kp["b2d"],
    )

    # (2, N, H, W*ch2) -> (N, C2, H, W); output channel index = half*ch2 + c.
    out = (out_pk.reshape(2, N, H, W, ch2)
           .transpose(1, 0, 4, 2, 3)
           .reshape(N, C2, H, W))
    return out


# ---------------------------------------------------------------------------
# Synthetic parameters (mirroring the PyTorch module) + BN folding / packing
# ---------------------------------------------------------------------------
def make_conv_bn_params(key, cin, cout, k, depthwise=False):
    kw, kg, kb, km, kv = jax.random.split(key, 5)
    wshape = (cout, 1, k, k) if depthwise else (cout, cin, k, k)
    w = jax.random.normal(kw, wshape, jnp.float32) * 0.1
    gamma = 1.0 + 0.1 * jax.random.normal(kg, (cout,), jnp.float32)
    beta = 0.1 * jax.random.normal(kb, (cout,), jnp.float32)
    mean = 0.1 * jax.random.normal(km, (cout,), jnp.float32)
    var = 1.0 + 0.1 * jnp.abs(jax.random.normal(kv, (cout,), jnp.float32))
    return dict(w=w, gamma=gamma, beta=beta, mean=mean, var=var)


def make_ghost_bottleneck_params(key, c1, c2):
    assert c1 == c2 and c2 % 4 == 0
    ch1 = (c2 // 2) // 2     # GhostConv1 half-width
    ch2 = c2 // 2            # GhostConv2 half-width
    k1, k2, k3, k4 = jax.random.split(key, 4)
    return dict(
        pw1=make_conv_bn_params(k1, c1, ch1, 1),
        dw1=make_conv_bn_params(k2, ch1, ch1, 5, depthwise=True),
        pw2=make_conv_bn_params(k3, 2 * ch1, ch2, 1),
        dw2=make_conv_bn_params(k4, ch2, ch2, 5, depthwise=True),
    )


def prep_ghost_params(raw, W, eps=1e-5):
    """Fold BN (eval mode) into the conv weights, then pack everything into
    the lane-dense layout the kernel uses:
      * pointwise weights -> block-diagonal kron(I_W, W) bf16 MXU weights,
      * depthwise taps / biases -> rows tiled W times across the lane dim.
    """
    def fold(p):
        scale = p["gamma"] / jnp.sqrt(p["var"] + eps)
        bias = p["beta"] - p["mean"] * scale
        return scale, bias

    def pointwise(p):
        scale, bias = fold(p)
        w = p["w"][:, :, 0, 0]                              # (cout, cin) OI
        return (w * scale[:, None]).T, bias                 # (cin, cout), (cout,)

    def depthwise(p):
        scale, bias = fold(p)
        w = p["w"][:, 0, :, :] * scale[:, None, None]       # (c, 5, 5)
        taps = jnp.transpose(w, (1, 2, 0)).reshape(25, -1)  # tap t = dy*5 + dx
        return taps, bias

    w1p, b1p = pointwise(raw["pw1"])    # (C1, ch1), (ch1,)
    w1d, b1d = depthwise(raw["dw1"])    # (25, ch1), (ch1,)
    w2p, b2p = pointwise(raw["pw2"])    # (2*ch1, ch2), (ch2,)
    w2d, b2d = depthwise(raw["dw2"])    # (25, ch2), (ch2,)

    C1, ch1 = w1p.shape
    chh = C1 // 2
    eye = jnp.eye(W, dtype=jnp.float32)

    def blockdiag_split(wfull, half):
        # Stacked [kron(I_W, top-half); kron(I_W, bottom-half)] so the packed
        # LHS concat([half0, half1]) hits the right rows.
        return jnp.concatenate(
            [jnp.kron(eye, wfull[:half]), jnp.kron(eye, wfull[half:])], axis=0)

    return dict(
        w1bd=blockdiag_split(w1p, chh).astype(jnp.bfloat16),   # (2*W*chh, W*ch1)
        b1p=jnp.tile(b1p, W).reshape(1, -1),                   # (1, W*ch1)
        w1d=jnp.tile(w1d, (1, W)),                             # (25, W*ch1)
        b1d=jnp.tile(b1d, W).reshape(1, -1),                   # (1, W*ch1)
        w2bd=blockdiag_split(w2p, ch1).astype(jnp.bfloat16),   # (2*W*ch1, W*ch2)
        b2p=jnp.tile(b2p, W).reshape(1, -1),                   # (1, W*ch2)
        w2d=jnp.tile(w2d, (1, W)),                             # (25, W*ch2)
        b2d=jnp.tile(b2d, W).reshape(1, -1),                   # (1, W*ch2)
    )


# ---------------------------------------------------------------------------
# Pure-JAX reference (literal conv -> BN -> act, f32, HIGHEST precision)
# ---------------------------------------------------------------------------
def _ref_conv_bn(x_nhwc, p, k, groups, act, eps=1e-5):
    w_hwio = jnp.transpose(p["w"], (2, 3, 1, 0))        # OIHW -> HWIO
    y = jax.lax.conv_general_dilated(
        x_nhwc, w_hwio, window_strides=(1, 1),
        padding=[(k // 2, k // 2), (k // 2, k // 2)],
        dimension_numbers=("NHWC", "HWIO", "NHWC"),
        feature_group_count=groups,
        precision=jax.lax.Precision.HIGHEST,
    )
    scale = p["gamma"] / jnp.sqrt(p["var"] + eps)
    y = (y - p["mean"]) * scale + p["beta"]
    if act:
        y = y * jax.nn.sigmoid(y)                       # SiLU
    return y


@jax.jit
def ghost_bottleneck_ref(x_nchw, raw):
    x = jnp.transpose(x_nchw, (0, 2, 3, 1))
    # GhostConv 1 (act=SiLU)
    y1a = _ref_conv_bn(x, raw["pw1"], 1, 1, True)
    y1b = _ref_conv_bn(y1a, raw["dw1"], 5, y1a.shape[-1], True)
    y1 = jnp.concatenate([y1a, y1b], axis=-1)
    # GhostConv 2 (act=Identity)
    y2a = _ref_conv_bn(y1, raw["pw2"], 1, 1, False)
    y2b = _ref_conv_bn(y2a, raw["dw2"], 5, y2a.shape[-1], False)
    y2 = jnp.concatenate([y2a, y2b], axis=-1)
    out = y2 + x                                        # identity shortcut
    return jnp.transpose(out, (0, 3, 1, 2))


# ---------------------------------------------------------------------------
if __name__ == "__main__":
    # GhostBottleneck(c1=32, c2=32, k=3, s=1): batch=2, spatial 16x16.
    N, C, H, W = 2, 32, 16, 16

    key = jax.random.PRNGKey(0)
    kx, kparam = jax.random.split(key)
    x = jax.random.normal(kx, (N, C, H, W), jnp.float32)

    raw = make_ghost_bottleneck_params(kparam, C, C)
    kparams = prep_ghost_params(raw, W)

    out = jax.block_until_ready(ghost_bottleneck_forward(x, kparams))
    assert out.shape == (N, C, H, W), out.shape

    ref = jax.block_until_ready(ghost_bottleneck_ref(x, raw))
    out_f32 = out.astype(jnp.float32)
    max_err = float(jnp.max(jnp.abs(out_f32 - ref)))
    # bf16 MXU operands + bf16 output vs f32 reference -> modest tolerance.
    assert jnp.allclose(out_f32, ref, atol=5e-2, rtol=5e-2), max_err

    print("KERNEL_OK")
</pallas_src>

<mosaic_0001>
module attributes {stable_mosaic.version = 11 : i64} {
  func.func @kernel(%arg0: i32, %arg1: memref<2x1x16x256xf32, #tpu.memory_space<vmem>>, %arg2: memref<512x128xbf16, #tpu.memory_space<vmem>>, %arg3: memref<1x128xf32, #tpu.memory_space<vmem>>, %arg4: memref<25x128xf32, #tpu.memory_space<vmem>>, %arg5: memref<1x128xf32, #tpu.memory_space<vmem>>, %arg6: memref<256x256xbf16, #tpu.memory_space<vmem>>, %arg7: memref<1x256xf32, #tpu.memory_space<vmem>>, %arg8: memref<25x256xf32, #tpu.memory_space<vmem>>, %arg9: memref<1x256xf32, #tpu.memory_space<vmem>>, %arg10: memref<2x1x16x256xbf16, #tpu.memory_space<vmem>>, %arg11: memref<1x20x160xf32, #tpu.memory_space<vmem>>, %arg12: memref<1x20x320xf32, #tpu.memory_space<vmem>>) attributes {dimension_semantics = [#tpu.dimension_semantics<parallel>], iteration_bounds = array<i64: 2>, scalar_prefetch = 0 : i64, scratch_operands = 2 : i64, tpu.core_type = #tpu.core_type<tc>, window_params = [{transform_indices = @transform_0, window_bounds = array<i64: 2, 1, 16, 256>}, {pipeline_mode = #tpu.pipeline_mode<synchronous>, transform_indices = @transform_1, window_bounds = array<i64: 512, 128>}, {pipeline_mode = #tpu.pipeline_mode<synchronous>, transform_indices = @transform_2, window_bounds = array<i64: 1, 128>}, {pipeline_mode = #tpu.pipeline_mode<synchronous>, transform_indices = @transform_3, window_bounds = array<i64: 25, 128>}, {pipeline_mode = #tpu.pipeline_mode<synchronous>, transform_indices = @transform_4, window_bounds = array<i64: 1, 128>}, {pipeline_mode = #tpu.pipeline_mode<synchronous>, transform_indices = @transform_5, window_bounds = array<i64: 256, 256>}, {pipeline_mode = #tpu.pipeline_mode<synchronous>, transform_indices = @transform_6, window_bounds = array<i64: 1, 256>}, {pipeline_mode = #tpu.pipeline_mode<synchronous>, transform_indices = @transform_7, window_bounds = array<i64: 25, 256>}, {pipeline_mode = #tpu.pipeline_mode<synchronous>, transform_indices = @transform_8, window_bounds = array<i64: 1, 256>}, {transform_indices = @transform_9, window_bounds = array<i64: 2, 1, 16, 256>}]} {
    %c0 = arith.constant 0 : index
    %c0_0 = arith.constant 0 : index
    %c0_1 = arith.constant 0 : index
    %c0_2 = arith.constant 0 : index
    %0 = vector.load %arg1[%c0, %c0_0, %c0_1, %c0_2] : memref<2x1x16x256xf32, #tpu.memory_space<vmem>>, vector<1x1x16x256xf32>
    %1 = vector.shape_cast %0 : vector<1x1x16x256xf32> to vector<1x16x256xf32>
    %c1 = arith.constant 1 : index
    %c0_3 = arith.constant 0 : index
    %c0_4 = arith.constant 0 : index
    %c0_5 = arith.constant 0 : index
    %2 = vector.load %arg1[%c1, %c0_3, %c0_4, %c0_5] : memref<2x1x16x256xf32, #tpu.memory_space<vmem>>, vector<1x1x16x256xf32>
    %3 = vector.shape_cast %2 : vector<1x1x16x256xf32> to vector<1x16x256xf32>
    %4 = vector.shape_cast %1 : vector<1x16x256xf32> to vector<16x256xf32>
    %5 = vector.shape_cast %3 : vector<1x16x256xf32> to vector<16x256xf32>
    %6 = tpu.concatenate %4, %5 in 1 : vector<16x256xf32>, vector<16x256xf32> -> vector<16x512xf32>
    %7 = arith.truncf %6 : vector<16x512xf32> to vector<16x512xbf16>
    %c0_6 = arith.constant 0 : index
    %c0_7 = arith.constant 0 : index
    %8 = vector.load %arg2[%c0_6, %c0_7] : memref<512x128xbf16, #tpu.memory_space<vmem>>, vector<512x128xbf16>
    %cst = arith.constant dense<0.000000e+00> : vector<16x128xf32>
    %9 = tpu.matmul %7, %8, %cst {dimension_numbers = #tpu.dot_dimension_numbers<[1], [0], [0], [1], [0, 0, 1, 1], [], []>} : vector<16x512xbf16>, vector<512x128xbf16>, vector<16x128xf32> -> vector<16x128xf32>
    %c0_8 = arith.constant 0 : index
    %c0_9 = arith.constant 0 : index
    %10 = vector.load %arg3[%c0_8, %c0_9] : memref<1x128xf32, #tpu.memory_space<vmem>>, vector<1x128xf32>
    %11 = vector.shape_cast %10 : vector<1x128xf32> to vector<128xf32>
    %12 = vector.shape_cast %11 : vector<128xf32> to vector<1x128xf32>
    %13 = vector.broadcast %12 : vector<1x128xf32> to vector<16x128xf32>
    %14 = arith.addf %9, %13 : vector<16x128xf32>
    %15 = arith.negf %14 : vector<16x128xf32>
    %16 = math.exp %15 : vector<16x128xf32>
    %cst_10 = arith.constant 1.000000e+00 : f32
    %17 = vector.broadcast %cst_10 : f32 to vector<16x128xf32>
    %18 = arith.addf %17, %16 : vector<16x128xf32>
    %19 = arith.divf %17, %18 : vector<16x128xf32>
    %20 = arith.mulf %14, %19 : vector<16x128xf32>
    %cst_11 = arith.constant 0.000000e+00 : f32
    %21 = vector.broadcast %cst_11 : f32 to vector<1x16x16xf32>
    %22 = vector.shape_cast %20 : vector<16x128xf32> to vector<1x16x128xf32>
    %23 = tpu.concatenate %21, %22, %21 in 2 : vector<1x16x16xf32>, vector<1x16x128xf32>, vector<1x16x16xf32> -> vector<1x16x160xf32>
    %c0_12 = arith.constant 0 : index
    %c2 = arith.constant 2 : index
    %c0_13 = arith.constant 0 : index
    %24 = vector.load %arg11[%c0_12, %c2, %c0_13] : memref<1x20x160xf32, #tpu.memory_space<vmem>>, vector<1x16x160xf32>
    tpu.vector_store %arg11[%c0_12, %c2, %c0_13], %23 {strides = array<i32>} : memref<1x20x160xf32, #tpu.memory_space<vmem>>, vector<1x16x160xf32>,
    %cst_14 = arith.constant 0.000000e+00 : f32
    %25 = vector.broadcast %cst_14 : f32 to vector<1x2x160xf32>
    %c0_15 = arith.constant 0 : index
    %c0_16 = arith.constant 0 : index
    %c0_17 = arith.constant 0 : index
    %26 = vector.load %arg11[%c0_15, %c0_16, %c0_17] : memref<1x20x160xf32, #tpu.memory_space<vmem>>, vector<1x2x160xf32>
    tpu.vector_store %arg11[%c0_15, %c0_16, %c0_17], %25 {strides = array<i32>} : memref<1x20x160xf32, #tpu.memory_space<vmem>>, vector<1x2x160xf32>,
    %c0_18 = arith.constant 0 : index
    %c18 = arith.constant 18 : index
    %c0_19 = arith.constant 0 : index
    %27 = vector.load %arg11[%c0_18, %c18, %c0_19] : memref<1x20x160xf32, #tpu.memory_space<vmem>>, vector<1x2x160xf32>
    tpu.vector_store %arg11[%c0_18, %c18, %c0_19], %25 {strides = array<i32>} : memref<1x20x160xf32, #tpu.memory_space<vmem>>, vector<1x2x160xf32>,
    %cst_20 = arith.constant 0.000000e+00 : f32
    %28 = vector.broadcast %cst_20 : f32 to vector<1x16x128xf32>
    %c0_21 = arith.constant 0 : index
    %c0_22 = arith.constant 0 : index
    %c0_23 = arith.constant 0 : index
    %29 = vector.load %arg11[%c0_21, %c0_22, %c0_23] : memref<1x20x160xf32, #tpu.memory_space<vmem>>, vector<1x16x160xf32>
    %30 = vector.extract_strided_slice %29 {offsets = [0, 0, 0], sizes = [1, 16, 128], strides = [1, 1, 1]} : vector<1x16x160xf32> to vector<1x16x128xf32>
    %c0_24 = arith.constant 0 : index
    %c0_25 = arith.constant 0 : index
    %31 = vector.load %arg4[%c0_24, %c0_25] : memref<25x128xf32, #tpu.memory_space<vmem>>, vector<1x128xf32>
    %32 = vector.shape_cast %31 : vector<1x128xf32> to vector<128xf32>
    %33 = vector.shape_cast %32 : vector<128xf32> to vector<1x1x128xf32>
    %34 = vector.broadcast %33 : vector<1x1x128xf32> to vector<1x16x128xf32>
    %35 = arith.mulf %30, %34 : vector<1x16x128xf32>
    %36 = arith.addf %28, %35 : vector<1x16x128xf32>
    %37 = vector.extract_strided_slice %29 {offsets = [0, 0, 8], sizes = [1, 16, 128], strides = [1, 1, 1]} : vector<1x16x160xf32> to vector<1x16x128xf32>
    %c1_26 = arith.constant 1 : index
    %c0_27 = arith.constant 0 : index
    %38 = vector.load %arg4[%c1_26, %c0_27] : memref<25x128xf32, #tpu.memory_space<vmem>>, vector<1x128xf32>
    %39 = vector.shape_cast %38 : vector<1x128xf32> to vector<128xf32>
    %40 = vector.shape_cast %39 : vector<128xf32> to vector<1x1x128xf32>
    %41 = vector.broadcast %40 : vector<1x1x128xf32> to vector<1x16x128xf32>
    %42 = arith.mulf %37, %41 : vector<1x16x128xf32>
    %43 = arith.addf %36, %42 : vector<1x16x128xf32>
    %44 = vector.extract_strided_slice %29 {offsets = [0, 0, 16], sizes = [1, 16, 128], strides = [1, 1, 1]} : vector<1x16x160xf32> to vector<1x16x128xf32>
    %c2_28 = arith.constant 2 : index
    %c0_29 = arith.constant 0 : index
    %45 = vector.load %arg4[%c2_28, %c0_29] : memref<25x128xf32, #tpu.memory_space<vmem>>, vector<1x128xf32>
    %46 = vector.shape_cast %45 : vector<1x128xf32> to vector<128xf32>
    %47 = vector.shape_cast %46 : vector<128xf32> to vector<1x1x128xf32>
    %48 = vector.broadcast %47 : vector<1x1x128xf32> to vector<1x16x128xf32>
    %49 = arith.mulf %44, %48 : vector<1x16x128xf32>
    %50 = arith.addf %43, %49 : vector<1x16x128xf32>
    %51 = vector.extract_strided_slice %29 {offsets = [0, 0, 24], sizes = [1, 16, 128], strides = [1, 1, 1]} : vector<1x16x160xf32> to vector<1x16x128xf32>
    %c3 = arith.constant 3 : index
    %c0_30 = arith.constant 0 : index
    %52 = vector.load %arg4[%c3, %c0_30] : memref<25x128xf32, #tpu.memory_space<vmem>>, vector<1x128xf32>
    %53 = vector.shape_cast %52 : vector<1x128xf32> to vector<128xf32>
    %54 = vector.shape_cast %53 : vector<128xf32> to vector<1x1x128xf32>
    %55 = vector.broadcast %54 : vector<1x1x128xf32> to vector<1x16x128xf32>
    %56 = arith.mulf %51, %55 : vector<1x16x128xf32>
    %57 = arith.addf %50, %56 : vector<1x16x128xf32>
    %58 = vector.extract_strided_slice %29 {offsets = [0, 0, 32], sizes = [1, 16, 128], strides = [1, 1, 1]} : vector<1x16x160xf32> to vector<1x16x128xf32>
    %c4 = arith.constant 4 : index
    %c0_31 = arith.constant 0 : index
    %59 = vector.load %arg4[%c4, %c0_31] : memref<25x128xf32, #tpu.memory_space<vmem>>, vector<1x128xf32>
    %60 = vector.shape_cast %59 : vector<1x128xf32> to vector<128xf32>
    %61 = vector.shape_cast %60 : vector<128xf32> to vector<1x1x128xf32>
    %62 = vector.broadcast %61 : vector<1x1x128xf32> to vector<1x16x128xf32>
    %63 = arith.mulf %58, %62 : vector<1x16x128xf32>
    %64 = arith.addf %57, %63 : vector<1x16x128xf32>
    %c0_32 = arith.constant 0 : index
    %c1_33 = arith.constant 1 : index
    %c0_34 = arith.constant 0 : index
    %65 = vector.load %arg11[%c0_32, %c1_33, %c0_34] : memref<1x20x160xf32, #tpu.memory_space<vmem>>, vector<1x16x160xf32>
    %66 = vector.extract_strided_slice %65 {offsets = [0, 0, 0], sizes = [1, 16, 128], strides = [1, 1, 1]} : vector<1x16x160xf32> to vector<1x16x128xf32>
    %c5 = arith.constant 5 : index
    %c0_35 = arith.constant 0 : index
    %67 = vector.load %arg4[%c5, %c0_35] : memref<25x128xf32, #tpu.memory_space<vmem>>, vector<1x128xf32>
    %68 = vector.shape_cast %67 : vector<1x128xf32> to vector<128xf32>
    %69 = vector.shape_cast %68 : vector<128xf32> to vector<1x1x128xf32>
    %70 = vector.broadcast %69 : vector<1x1x128xf32> to vector<1x16x128xf32>
    %71 = arith.mulf %66, %70 : vector<1x16x128xf32>
    %72 = arith.addf %64, %71 : vector<1x16x128xf32>
    %73 = vector.extract_strided_slice %65 {offsets = [0, 0, 8], sizes = [1, 16, 128], strides = [1, 1, 1]} : vector<1x16x160xf32> to vector<1x16x128xf32>
    %c6 = arith.constant 6 : index
    %c0_36 = arith.constant 0 : index
    %74 = vector.load %arg4[%c6, %c0_36] : memref<25x128xf32, #tpu.memory_space<vmem>>, vector<1x128xf32>
    %75 = vector.shape_cast %74 : vector<1x128xf32> to vector<128xf32>
    %76 = vector.shape_cast %75 : vector<128xf32> to vector<1x1x128xf32>
    %77 = vector.broadcast %76 : vector<1x1x128xf32> to vector<1x16x128xf32>
    %78 = arith.mulf %73, %77 : vector<1x16x128xf32>
    %79 = arith.addf %72, %78 : vector<1x16x128xf32>
    %80 = vector.extract_strided_slice %65 {offsets = [0, 0, 16], sizes = [1, 16, 128], strides = [1, 1, 1]} : vector<1x16x160xf32> to vector<1x16x128xf32>
    %c7 = arith.constant 7 : index
    %c0_37 = arith.constant 0 : index
    %81 = vector.load %arg4[%c7, %c0_37] : memref<25x128xf32, #tpu.memory_space<vmem>>, vector<1x128xf32>
    %82 = vector.shape_cast %81 : vector<1x128xf32> to vector<128xf32>
    %83 = vector.shape_cast %82 : vector<128xf32> to vector<1x1x128xf32>
    %84 = vector.broadcast %83 : vector<1x1x128xf32> to vector<1x16x128xf32>
    %85 = arith.mulf %80, %84 : vector<1x16x128xf32>
    %86 = arith.addf %79, %85 : vector<1x16x128xf32>
    %87 = vector.extract_strided_slice %65 {offsets = [0, 0, 24], sizes = [1, 16, 128], strides = [1, 1, 1]} : vector<1x16x160xf32> to vector<1x16x128xf32>
    %c8 = arith.constant 8 : index
    %c0_38 = arith.constant 0 : index
    %88 = vector.load %arg4[%c8, %c0_38] : memref<25x128xf32, #tpu.memory_space<vmem>>, vector<1x128xf32>
    %89 = vector.shape_cast %88 : vector<1x128xf32> to vector<128xf32>
    %90 = vector.shape_cast %89 : vector<128xf32> to vector<1x1x128xf32>
    %91 = vector.broadcast %90 : vector<1x1x128xf32> to vector<1x16x128xf32>
    %92 = arith.mulf %87, %91 : vector<1x16x128xf32>
    %93 = arith.addf %86, %92 : vector<1x16x128xf32>
    %94 = vector.extract_strided_slice %65 {offsets = [0, 0, 32], sizes = [1, 16, 128], strides = [1, 1, 1]} : vector<1x16x160xf32> to vector<1x16x128xf32>
    %c9 = arith.constant 9 : index
    %c0_39 = arith.constant 0 : index
    %95 = vector.load %arg4[%c9, %c0_39] : memref<25x128xf32, #tpu.memory_space<vmem>>, vector<1x128xf32>
    %96 = vector.shape_cast %95 : vector<1x128xf32> to vector<128xf32>
    %97 = vector.shape_cast %96 : vector<128xf32> to vector<1x1x128xf32>
    %98 = vector.broadcast %97 : vector<1x1x128xf32> to vector<1x16x128xf32>
    %99 = arith.mulf %94, %98 : vector<1x16x128xf32>
    %100 = arith.addf %93, %99 : vector<1x16x128xf32>
    %c0_40 = arith.constant 0 : index
    %c2_41 = arith.constant 2 : index
    %c0_42 = arith.constant 0 : index
    %101 = vector.load %arg11[%c0_40, %c2_41, %c0_42] : memref<1x20x160xf32, #tpu.memory_space<vmem>>, vector<1x16x160xf32>
    %102 = vector.extract_strided_slice %101 {offsets = [0, 0, 0], sizes = [1, 16, 128], strides = [1, 1, 1]} : vector<1x16x160xf32> to vector<1x16x128xf32>
    %c10 = arith.constant 10 : index
    %c0_43 = arith.constant 0 : index
    %103 = vector.load %arg4[%c10, %c0_43] : memref<25x128xf32, #tpu.memory_space<vmem>>, vector<1x128xf32>
    %104 = vector.shape_cast %103 : vector<1x128xf32> to vector<128xf32>
    %105 = vector.shape_cast %104 : vector<128xf32> to vector<1x1x128xf32>
    %106 = vector.broadcast %105 : vector<1x1x128xf32> to vector<1x16x128xf32>
    %107 = arith.mulf %102, %106 : vector<1x16x128xf32>
    %108 = arith.addf %100, %107 : vector<1x16x128xf32>
    %109 = vector.extract_strided_slice %101 {offsets = [0, 0, 8], sizes = [1, 16, 128], strides = [1, 1, 1]} : vector<1x16x160xf32> to vector<1x16x128xf32>
    %c11 = arith.constant 11 : index
    %c0_44 = arith.constant 0 : index
    %110 = vector.load %arg4[%c11, %c0_44] : memref<25x128xf32, #tpu.memory_space<vmem>>, vector<1x128xf32>
    %111 = vector.shape_cast %110 : vector<1x128xf32> to vector<128xf32>
    %112 = vector.shape_cast %111 : vector<128xf32> to vector<1x1x128xf32>
    %113 = vector.broadcast %112 : vector<1x1x128xf32> to vector<1x16x128xf32>
    %114 = arith.mulf %109, %113 : vector<1x16x128xf32>
    %115 = arith.addf %108, %114 : vector<1x16x128xf32>
    %116 = vector.extract_strided_slice %101 {offsets = [0, 0, 16], sizes = [1, 16, 128], strides = [1, 1, 1]} : vector<1x16x160xf32> to vector<1x16x128xf32>
    %c12 = arith.constant 12 : index
    %c0_45 = arith.constant 0 : index
    %117 = vector.load %arg4[%c12, %c0_45] : memref<25x128xf32, #tpu.memory_space<vmem>>, vector<1x128xf32>
    %118 = vector.shape_cast %117 : vector<1x128xf32> to vector<128xf32>
    %119 = vector.shape_cast %118 : vector<128xf32> to vector<1x1x128xf32>
    %120 = vector.broadcast %119 : vector<1x1x128xf32> to vector<1x16x128xf32>
    %121 = arith.mulf %116, %120 : vector<1x16x128xf32>
    %122 = arith.addf %115, %121 : vector<1x16x128xf32>
    %123 = vector.extract_strided_slice %101 {offsets = [0, 0, 24], sizes = [1, 16, 128], strides = [1, 1, 1]} : vector<1x16x160xf32> to vector<1x16x128xf32>
    %c13 = arith.constant 13 : index
    %c0_46 = arith.constant 0 : index
    %124 = vector.load %arg4[%c13, %c0_46] : memref<25x128xf32, #tpu.memory_space<vmem>>, vector<1x128xf32>
    %125 = vector.shape_cast %124 : vector<1x128xf32> to vector<128xf32>
    %126 = vector.shape_cast %125 : vector<128xf32> to vector<1x1x128xf32>
    %127 = vector.broadcast %126 : vector<1x1x128xf32> to vector<1x16x128xf32>
    %128 = arith.mulf %123, %127 : vector<1x16x128xf32>
    %129 = arith.addf %122, %128 : vector<1x16x128xf32>
    %130 = vector.extract_strided_slice %101 {offsets = [0, 0, 32], sizes = [1, 16, 128], strides = [1, 1, 1]} : vector<1x16x160xf32> to vector<1x16x128xf32>
    %c14 = arith.constant 14 : index
    %c0_47 = arith.constant 0 : index
    %131 = vector.load %arg4[%c14, %c0_47] : memref<25x128xf32, #tpu.memory_space<vmem>>, vector<1x128xf32>
    %132 = vector.shape_cast %131 : vector<1x128xf32> to vector<128xf32>
    %133 = vector.shape_cast %132 : vector<128xf32> to vector<1x1x128xf32>
    %134 = vector.broadcast %133 : vector<1x1x128xf32> to vector<1x16x128xf32>
    %135 = arith.mulf %130, %134 : vector<1x16x128xf32>
    %136 = arith.addf %129, %135 : vector<1x16x128xf32>
    %c0_48 = arith.constant 0 : index
    %c3_49 = arith.constant 3 : index
    %c0_50 = arith.constant 0 : index
    %137 = vector.load %arg11[%c0_48, %c3_49, %c0_50] : memref<1x20x160xf32, #tpu.memory_space<vmem>>, vector<1x16x160xf32>
    %138 = vector.extract_strided_slice %137 {offsets = [0, 0, 0], sizes = [1, 16, 128], strides = [1, 1, 1]} : vector<1x16x160xf32> to vector<1x16x128xf32>
    %c15 = arith.constant 15 : index
    %c0_51 = arith.constant 0 : index
    %139 = vector.load %arg4[%c15, %c0_51] : memref<25x128xf32, #tpu.memory_space<vmem>>, vector<1x128xf32>
    %140 = vector.shape_cast %139 : vector<1x128xf32> to vector<128xf32>
    %141 = vector.shape_cast %140 : vector<128xf32> to vector<1x1x128xf32>
    %142 = vector.broadcast %141 : vector<1x1x128xf32> to vector<1x16x128xf32>
    %143 = arith.mulf %138, %142 : vector<1x16x128xf32>
    %144 = arith.addf %136, %143 : vector<1x16x128xf32>
    %145 = vector.extract_strided_slice %137 {offsets = [0, 0, 8], sizes = [1, 16, 128], strides = [1, 1, 1]} : vector<1x16x160xf32> to vector<1x16x128xf32>
    %c16 = arith.constant 16 : index
    %c0_52 = arith.constant 0 : index
    %146 = vector.load %arg4[%c16, %c0_52] : memref<25x128xf32, #tpu.memory_space<vmem>>, vector<1x128xf32>
    %147 = vector.shape_cast %146 : vector<1x128xf32> to vector<128xf32>
    %148 = vector.shape_cast %147 : vector<128xf32> to vector<1x1x128xf32>
    %149 = vector.broadcast %148 : vector<1x1x128xf32> to vector<1x16x128xf32>
    %150 = arith.mulf %145, %149 : vector<1x16x128xf32>
    %151 = arith.addf %144, %150 : vector<1x16x128xf32>
    %152 = vector.extract_strided_slice %137 {offsets = [0, 0, 16], sizes = [1, 16, 128], strides = [1, 1, 1]} : vector<1x16x160xf32> to vector<1x16x128xf32>
    %c17 = arith.constant 17 : index
    %c0_53 = arith.constant 0 : index
    %153 = vector.load %arg4[%c17, %c0_53] : memref<25x128xf32, #tpu.memory_space<vmem>>, vector<1x128xf32>
    %154 = vector.shape_cast %153 : vector<1x128xf32> to vector<128xf32>
    %155 = vector.shape_cast %154 : vector<128xf32> to vector<1x1x128xf32>
    %156 = vector.broadcast %155 : vector<1x1x128xf32> to vector<1x16x128xf32>
    %157 = arith.mulf %152, %156 : vector<1x16x128xf32>
    %158 = arith.addf %151, %157 : vector<1x16x128xf32>
    %159 = vector.extract_strided_slice %137 {offsets = [0, 0, 24], sizes = [1, 16, 128], strides = [1, 1, 1]} : vector<1x16x160xf32> to vector<1x16x128xf32>
    %c18_54 = arith.constant 18 : index
    %c0_55 = arith.constant 0 : index
    %160 = vector.load %arg4[%c18_54, %c0_55] : memref<25x128xf32, #tpu.memory_space<vmem>>, vector<1x128xf32>
    %161 = vector.shape_cast %160 : vector<1x128xf32> to vector<128xf32>
    %162 = vector.shape_cast %161 : vector<128xf32> to vector<1x1x128xf32>
    %163 = vector.broadcast %162 : vector<1x1x128xf32> to vector<1x16x128xf32>
    %164 = arith.mulf %159, %163 : vector<1x16x128xf32>
    %165 = arith.addf %158, %164 : vector<1x16x128xf32>
    %166 = vector.extract_strided_slice %137 {offsets = [0, 0, 32], sizes = [1, 16, 128], strides = [1, 1, 1]} : vector<1x16x160xf32> to vector<1x16x128xf32>
    %c19 = arith.constant 19 : index
    %c0_56 = arith.constant 0 : index
    %167 = vector.load %arg4[%c19, %c0_56] : memref<25x128xf32, #tpu.memory_space<vmem>>, vector<1x128xf32>
    %168 = vector.shape_cast %167 : vector<1x128xf32> to vector<128xf32>
    %169 = vector.shape_cast %168 : vector<128xf32> to vector<1x1x128xf32>
    %170 = vector.broadcast %169 : vector<1x1x128xf32> to vector<1x16x128xf32>
    %171 = arith.mulf %166, %170 : vector<1x16x128xf32>
    %172 = arith.addf %165, %171 : vector<1x16x128xf32>
    %c0_57 = arith.constant 0 : index
    %c4_58 = arith.constant 4 : index
    %c0_59 = arith.constant 0 : index
    %173 = vector.load %arg11[%c0_57, %c4_58, %c0_59] : memref<1x20x160xf32, #tpu.memory_space<vmem>>, vector<1x16x160xf32>
    %174 = vector.extract_strided_slice %173 {offsets = [0, 0, 0], sizes = [1, 16, 128], strides = [1, 1, 1]} : vector<1x16x160xf32> to vector<1x16x128xf32>
    %c20 = arith.constant 20 : index
    %c0_60 = arith.constant 0 : index
    %175 = vector.load %arg4[%c20, %c0_60] : memref<25x128xf32, #tpu.memory_space<vmem>>, vector<1x128xf32>
    %176 = vector.shape_cast %175 : vector<1x128xf32> to vector<128xf32>
    %177 = vector.shape_cast %176 : vector<128xf32> to vector<1x1x128xf32>
    %178 = vector.broadcast %177 : vector<1x1x128xf32> to vector<1x16x128xf32>
    %179 = arith.mulf %174, %178 : vector<1x16x128xf32>
    %180 = arith.addf %172, %179 : vector<1x16x128xf32>
    %181 = vector.extract_strided_slice %173 {offsets = [0, 0, 8], sizes = [1, 16, 128], strides = [1, 1, 1]} : vector<1x16x160xf32> to vector<1x16x128xf32>
    %c21 = arith.constant 21 : index
    %c0_61 = arith.constant 0 : index
    %182 = vector.load %arg4[%c21, %c0_61] : memref<25x128xf32, #tpu.memory_space<vmem>>, vector<1x128xf32>
    %183 = vector.shape_cast %182 : vector<1x128xf32> to vector<128xf32>
    %184 = vector.shape_cast %183 : vector<128xf32> to vector<1x1x128xf32>
    %185 = vector.broadcast %184 : vector<1x1x128xf32> to vector<1x16x128xf32>
    %186 = arith.mulf %181, %185 : vector<1x16x128xf32>
    %187 = arith.addf %180, %186 : vector<1x16x128xf32>
    %188 = vector.extract_strided_slice %173 {offsets = [0, 0, 16], sizes = [1, 16, 128], strides = [1, 1, 1]} : vector<1x16x160xf32> to vector<1x16x128xf32>
    %c22 = arith.constant 22 : index
    %c0_62 = arith.constant 0 : index
    %189 = vector.load %arg4[%c22, %c0_62] : memref<25x128xf32, #tpu.memory_space<vmem>>, vector<1x128xf32>
    %190 = vector.shape_cast %189 : vector<1x128xf32> to vector<128xf32>
    %191 = vector.shape_cast %190 : vector<128xf32> to vector<1x1x128xf32>
    %192 = vector.broadcast %191 : vector<1x1x128xf32> to vector<1x16x128xf32>
    %193 = arith.mulf %188, %192 : vector<1x16x128xf32>
    %194 = arith.addf %187, %193 : vector<1x16x128xf32>
    %195 = vector.extract_strided_slice %173 {offsets = [0, 0, 24], sizes = [1, 16, 128], strides = [1, 1, 1]} : vector<1x16x160xf32> to vector<1x16x128xf32>
    %c23 = arith.constant 23 : index
    %c0_63 = arith.constant 0 : index
    %196 = vector.load %arg4[%c23, %c0_63] : memref<25x128xf32, #tpu.memory_space<vmem>>, vector<1x128xf32>
    %197 = vector.shape_cast %196 : vector<1x128xf32> to vector<128xf32>
    %198 = vector.shape_cast %197 : vector<128xf32> to vector<1x1x128xf32>
    %199 = vector.broadcast %198 : vector<1x1x128xf32> to vector<1x16x128xf32>
    %200 = arith.mulf %195, %199 : vector<1x16x128xf32>
    %201 = arith.addf %194, %200 : vector<1x16x128xf32>
    %202 = vector.extract_strided_slice %173 {offsets = [0, 0, 32], sizes = [1, 16, 128], strides = [1, 1, 1]} : vector<1x16x160xf32> to vector<1x16x128xf32>
    %c24 = arith.constant 24 : index
    %c0_64 = arith.constant 0 : index
    %203 = vector.load %arg4[%c24, %c0_64] : memref<25x128xf32, #tpu.memory_space<vmem>>, vector<1x128xf32>
    %204 = vector.shape_cast %203 : vector<1x128xf32> to vector<128xf32>
    %205 = vector.shape_cast %204 : vector<128xf32> to vector<1x1x128xf32>
    %206 = vector.broadcast %205 : vector<1x1x128xf32> to vector<1x16x128xf32>
    %207 = arith.mulf %202, %206 : vector<1x16x128xf32>
    %208 = arith.addf %201, %207 : vector<1x16x128xf32>
    %c0_65 = arith.constant 0 : index
    %c0_66 = arith.constant 0 : index
    %209 = vector.load %arg5[%c0_65, %c0_66] : memref<1x128xf32, #tpu.memory_space<vmem>>, vector<1x128xf32>
    %210 = vector.shape_cast %209 : vector<1x128xf32> to vector<128xf32>
    %211 = vector.shape_cast %210 : vector<128xf32> to vector<1x1x128xf32>
    %212 = vector.broadcast %211 : vector<1x1x128xf32> to vector<1x16x128xf32>
    %213 = arith.addf %208, %212 : vector<1x16x128xf32>
    %214 = arith.negf %213 : vector<1x16x128xf32>
    %215 = math.exp %214 : vector<1x16x128xf32>
    %cst_67 = arith.constant 1.000000e+00 : f32
    %216 = vector.broadcast %cst_67 : f32 to vector<1x16x128xf32>
    %217 = arith.addf %216, %215 : vector<1x16x128xf32>
    %218 = arith.divf %216, %217 : vector<1x16x128xf32>
    %219 = arith.mulf %213, %218 : vector<1x16x128xf32>
    %220 = arith.truncf %20 : vector<16x128xf32> to vector<16x128xbf16>
    %221 = vector.shape_cast %219 : vector<1x16x128xf32> to vector<16x128xf32>
    %222 = arith.truncf %221 : vector<16x128xf32> to vector<16x128xbf16>
    %223 = tpu.concatenate %220, %222 in 1 : vector<16x128xbf16>, vector<16x128xbf16> -> vector<16x256xbf16>
    %c0_68 = arith.constant 0 : index
    %c0_69 = arith.constant 0 : index
    %224 = vector.load %arg6[%c0_68, %c0_69] : memref<256x256xbf16, #tpu.memory_space<vmem>>, vector<256x256xbf16>
    %cst_70 = arith.constant dense<0.000000e+00> : vector<16x256xf32>
    %225 = tpu.matmul %223, %224, %cst_70 {dimension_numbers = #tpu.dot_dimension_numbers<[1], [0], [0], [1], [0, 0, 1, 1], [], []>} : vector<16x256xbf16>, vector<256x256xbf16>, vector<16x256xf32> -> vector<16x256xf32>
    %c0_71 = arith.constant 0 : index
    %c0_72 = arith.constant 0 : index
    %226 = vector.load %arg7[%c0_71, %c0_72] : memref<1x256xf32, #tpu.memory_space<vmem>>, vector<1x256xf32>
    %227 = vector.shape_cast %226 : vector<1x256xf32> to vector<256xf32>
    %228 = vector.shape_cast %227 : vector<256xf32> to vector<1x256xf32>
    %229 = vector.broadcast %228 : vector<1x256xf32> to vector<16x256xf32>
    %230 = arith.addf %225, %229 : vector<16x256xf32>
    %231 = vector.shape_cast %230 : vector<16x256xf32> to vector<1x16x256xf32>
    %cst_73 = arith.constant 0.000000e+00 : f32
    %232 = vector.broadcast %cst_73 : f32 to vector<1x16x32xf32>
    %233 = tpu.concatenate %232, %231, %232 in 2 : vector<1x16x32xf32>, vector<1x16x256xf32>, vector<1x16x32xf32> -> vector<1x16x320xf32>
    %c0_74 = arith.constant 0 : index
    %c2_75 = arith.constant 2 : index
    %c0_76 = arith.constant 0 : index
    %234 = vector.load %arg12[%c0_74, %c2_75, %c0_76] : memref<1x20x320xf32, #tpu.memory_space<vmem>>, vector<1x16x320xf32>
    tpu.vector_store %arg12[%c0_74, %c2_75, %c0_76], %233 {strides = array<i32>} : memref<1x20x320xf32, #tpu.memory_space<vmem>>, vector<1x16x320xf32>,
    %cst_77 = arith.constant 0.000000e+00 : f32
    %235 = vector.broadcast %cst_77 : f32 to vector<1x2x320xf32>
    %c0_78 = arith.constant 0 : index
    %c0_79 = arith.constant 0 : index
    %c0_80 = arith.constant 0 : index
    %236 = vector.load %arg12[%c0_78, %c0_79, %c0_80] : memref<1x20x320xf32, #tpu.memory_space<vmem>>, vector<1x2x320xf32>
    tpu.vector_store %arg12[%c0_78, %c0_79, %c0_80], %235 {strides = array<i32>} : memref<1x20x320xf32, #tpu.memory_space<vmem>>, vector<1x2x320xf32>,
    %c0_81 = arith.constant 0 : index
    %c18_82 = arith.constant 18 : index
    %c0_83 = arith.constant 0 : index
    %237 = vector.load %arg12[%c0_81, %c18_82, %c0_83] : memref<1x20x320xf32, #tpu.memory_space<vmem>>, vector<1x2x320xf32>
    tpu.vector_store %arg12[%c0_81, %c18_82, %c0_83], %235 {strides = array<i32>} : memref<1x20x320xf32, #tpu.memory_space<vmem>>, vector<1x2x320xf32>,
    %cst_84 = arith.constant 0.000000e+00 : f32
    %238 = vector.broadcast %cst_84 : f32 to vector<1x16x256xf32>
    %c0_85 = arith.constant 0 : index
    %c0_86 = arith.constant 0 : index
    %c0_87 = arith.constant 0 : index
    %239 = vector.load %arg12[%c0_85, %c0_86, %c0_87] : memref<1x20x320xf32, #tpu.memory_space<vmem>>, vector<1x16x320xf32>
    %240 = vector.extract_strided_slice %239 {offsets = [0, 0, 0], sizes = [1, 16, 256], strides = [1, 1, 1]} : vector<1x16x320xf32> to vector<1x16x256xf32>
    %c0_88 = arith.constant 0 : index
    %c0_89 = arith.constant 0 : index
    %241 = vector.load %arg8[%c0_88, %c0_89] : memref<25x256xf32, #tpu.memory_space<vmem>>, vector<1x256xf32>
    %242 = vector.shape_cast %241 : vector<1x256xf32> to vector<256xf32>
    %243 = vector.shape_cast %242 : vector<256xf32> to vector<1x1x256xf32>
    %244 = vector.broadcast %243 : vector<1x1x256xf32> to vector<1x16x256xf32>
    %245 = arith.mulf %240, %244 : vector<1x16x256xf32>
    %246 = arith.addf %238, %245 : vector<1x16x256xf32>
    %247 = vector.extract_strided_slice %239 {offsets = [0, 0, 16], sizes = [1, 16, 256], strides = [1, 1, 1]} : vector<1x16x320xf32> to vector<1x16x256xf32>
    %c1_90 = arith.constant 1 : index
    %c0_91 = arith.constant 0 : index
    %248 = vector.load %arg8[%c1_90, %c0_91] : memref<25x256xf32, #tpu.memory_space<vmem>>, vector<1x256xf32>
    %249 = vector.shape_cast %248 : vector<1x256xf32> to vector<256xf32>
    %250 = vector.shape_cast %249 : vector<256xf32> to vector<1x1x256xf32>
    %251 = vector.broadcast %250 : vector<1x1x256xf32> to vector<1x16x256xf32>
    %252 = arith.mulf %247, %251 : vector<1x16x256xf32>
    %253 = arith.addf %246, %252 : vector<1x16x256xf32>
    %254 = vector.extract_strided_slice %239 {offsets = [0, 0, 32], sizes = [1, 16, 256], strides = [1, 1, 1]} : vector<1x16x320xf32> to vector<1x16x256xf32>
    %c2_92 = arith.constant 2 : index
    %c0_93 = arith.constant 0 : index
    %255 = vector.load %arg8[%c2_92, %c0_93] : memref<25x256xf32, #tpu.memory_space<vmem>>, vector<1x256xf32>
    %256 = vector.shape_cast %255 : vector<1x256xf32> to vector<256xf32>
    %257 = vector.shape_cast %256 : vector<256xf32> to vector<1x1x256xf32>
    %258 = vector.broadcast %257 : vector<1x1x256xf32> to vector<1x16x256xf32>
    %259 = arith.mulf %254, %258 : vector<1x16x256xf32>
    %260 = arith.addf %253, %259 : vector<1x16x256xf32>
    %261 = vector.extract_strided_slice %239 {offsets = [0, 0, 48], sizes = [1, 16, 256], strides = [1, 1, 1]} : vector<1x16x320xf32> to vector<1x16x256xf32>
    %c3_94 = arith.constant 3 : index
    %c0_95 = arith.constant 0 : index
    %262 = vector.load %arg8[%c3_94, %c0_95] : memref<25x256xf32, #tpu.memory_space<vmem>>, vector<1x256xf32>
    %263 = vector.shape_cast %262 : vector<1x256xf32> to vector<256xf32>
    %264 = vector.shape_cast %263 : vector<256xf32> to vector<1x1x256xf32>
    %265 = vector.broadcast %264 : vector<1x1x256xf32> to vector<1x16x256xf32>
    %266 = arith.mulf %261, %265 : vector<1x16x256xf32>
    %267 = arith.addf %260, %266 : vector<1x16x256xf32>
    %268 = vector.extract_strided_slice %239 {offsets = [0, 0, 64], sizes = [1, 16, 256], strides = [1, 1, 1]} : vector<1x16x320xf32> to vector<1x16x256xf32>
    %c4_96 = arith.constant 4 : index
    %c0_97 = arith.constant 0 : index
    %269 = vector.load %arg8[%c4_96, %c0_97] : memref<25x256xf32, #tpu.memory_space<vmem>>, vector<1x256xf32>
    %270 = vector.shape_cast %269 : vector<1x256xf32> to vector<256xf32>
    %271 = vector.shape_cast %270 : vector<256xf32> to vector<1x1x256xf32>
    %272 = vector.broadcast %271 : vector<1x1x256xf32> to vector<1x16x256xf32>
    %273 = arith.mulf %268, %272 : vector<1x16x256xf32>
    %274 = arith.addf %267, %273 : vector<1x16x256xf32>
    %c0_98 = arith.constant 0 : index
    %c1_99 = arith.constant 1 : index
    %c0_100 = arith.constant 0 : index
    %275 = vector.load %arg12[%c0_98, %c1_99, %c0_100] : memref<1x20x320xf32, #tpu.memory_space<vmem>>, vector<1x16x320xf32>
    %276 = vector.extract_strided_slice %275 {offsets = [0, 0, 0], sizes = [1, 16, 256], strides = [1, 1, 1]} : vector<1x16x320xf32> to vector<1x16x256xf32>
    %c5_101 = arith.constant 5 : index
    %c0_102 = arith.constant 0 : index
    %277 = vector.load %arg8[%c5_101, %c0_102] : memref<25x256xf32, #tpu.memory_space<vmem>>, vector<1x256xf32>
    %278 = vector.shape_cast %277 : vector<1x256xf32> to vector<256xf32>
    %279 = vector.shape_cast %278 : vector<256xf32> to vector<1x1x256xf32>
    %280 = vector.broadcast %279 : vector<1x1x256xf32> to vector<1x16x256xf32>
    %281 = arith.mulf %276, %280 : vector<1x16x256xf32>
    %282 = arith.addf %274, %281 : vector<1x16x256xf32>
    %283 = vector.extract_strided_slice %275 {offsets = [0, 0, 16], sizes = [1, 16, 256], strides = [1, 1, 1]} : vector<1x16x320xf32> to vector<1x16x256xf32>
    %c6_103 = arith.constant 6 : index
    %c0_104 = arith.constant 0 : index
    %284 = vector.load %arg8[%c6_103, %c0_104] : memref<25x256xf32, #tpu.memory_space<vmem>>, vector<1x256xf32>
    %285 = vector.shape_cast %284 : vector<1x256xf32> to vector<256xf32>
    %286 = vector.shape_cast %285 : vector<256xf32> to vector<1x1x256xf32>
    %287 = vector.broadcast %286 : vector<1x1x256xf32> to vector<1x16x256xf32>
    %288 = arith.mulf %283, %287 : vector<1x16x256xf32>
    %289 = arith.addf %282, %288 : vector<1x16x256xf32>
    %290 = vector.extract_strided_slice %275 {offsets = [0, 0, 32], sizes = [1, 16, 256], strides = [1, 1, 1]} : vector<1x16x320xf32> to vector<1x16x256xf32>
    %c7_105 = arith.constant 7 : index
    %c0_106 = arith.constant 0 : index
    %291 = vector.load %arg8[%c7_105, %c0_106] : memref<25x256xf32, #tpu.memory_space<vmem>>, vector<1x256xf32>
    %292 = vector.shape_cast %291 : vector<1x256xf32> to vector<256xf32>
    %293 = vector.shape_cast %292 : vector<256xf32> to vector<1x1x256xf32>
    %294 = vector.broadcast %293 : vector<1x1x256xf32> to vector<1x16x256xf32>
    %295 = arith.mulf %290, %294 : vector<1x16x256xf32>
    %296 = arith.addf %289, %295 : vector<1x16x256xf32>
    %297 = vector.extract_strided_slice %275 {offsets = [0, 0, 48], sizes = [1, 16, 256], strides = [1, 1, 1]} : vector<1x16x320xf32> to vector<1x16x256xf32>
    %c8_107 = arith.constant 8 : index
    %c0_108 = arith.constant 0 : index
    %298 = vector.load %arg8[%c8_107, %c0_108] : memref<25x256xf32, #tpu.memory_space<vmem>>, vector<1x256xf32>
    %299 = vector.shape_cast %298 : vector<1x256xf32> to vector<256xf32>
    %300 = vector.shape_cast %299 : vector<256xf32> to vector<1x1x256xf32>
    %301 = vector.broadcast %300 : vector<1x1x256xf32> to vector<1x16x256xf32>
    %302 = arith.mulf %297, %301 : vector<1x16x256xf32>
    %303 = arith.addf %296, %302 : vector<1x16x256xf32>
    %304 = vector.extract_strided_slice %275 {offsets = [0, 0, 64], sizes = [1, 16, 256], strides = [1, 1, 1]} : vector<1x16x320xf32> to vector<1x16x256xf32>
    %c9_109 = arith.constant 9 : index
    %c0_110 = arith.constant 0 : index
    %305 = vector.load %arg8[%c9_109, %c0_110] : memref<25x256xf32, #tpu.memory_space<vmem>>, vector<1x256xf32>
    %306 = vector.shape_cast %305 : vector<1x256xf32> to vector<256xf32>
    %307 = vector.shape_cast %306 : vector<256xf32> to vector<1x1x256xf32>
    %308 = vector.broadcast %307 : vector<1x1x256xf32> to vector<1x16x256xf32>
    %309 = arith.mulf %304, %308 : vector<1x16x256xf32>
    %310 = arith.addf %303, %309 : vector<1x16x256xf32>
    %c0_111 = arith.constant 0 : index
    %c2_112 = arith.constant 2 : index
    %c0_113 = arith.constant 0 : index
    %311 = vector.load %arg12[%c0_111, %c2_112, %c0_113] : memref<1x20x320xf32, #tpu.memory_space<vmem>>, vector<1x16x320xf32>
    %312 = vector.extract_strided_slice %311 {offsets = [0, 0, 0], sizes = [1, 16, 256], strides = [1, 1, 1]} : vector<1x16x320xf32> to vector<1x16x256xf32>
    %c10_114 = arith.constant 10 : index
    %c0_115 = arith.constant 0 : index
    %313 = vector.load %arg8[%c10_114, %c0_115] : memref<25x256xf32, #tpu.memory_space<vmem>>, vector<1x256xf32>
    %314 = vector.shape_cast %313 : vector<1x256xf32> to vector<256xf32>
    %315 = vector.shape_cast %314 : vector<256xf32> to vector<1x1x256xf32>
    %316 = vector.broadcast %315 : vector<1x1x256xf32> to vector<1x16x256xf32>
    %317 = arith.mulf %312, %316 : vector<1x16x256xf32>
    %318 = arith.addf %310, %317 : vector<1x16x256xf32>
    %319 = vector.extract_strided_slice %311 {offsets = [0, 0, 16], sizes = [1, 16, 256], strides = [1, 1, 1]} : vector<1x16x320xf32> to vector<1x16x256xf32>
    %c11_116 = arith.constant 11 : index
    %c0_117 = arith.constant 0 : index
    %320 = vector.load %arg8[%c11_116, %c0_117] : memref<25x256xf32, #tpu.memory_space<vmem>>, vector<1x256xf32>
    %321 = vector.shape_cast %320 : vector<1x256xf32> to vector<256xf32>
    %322 = vector.shape_cast %321 : vector<256xf32> to vector<1x1x256xf32>
    %323 = vector.broadcast %322 : vector<1x1x256xf32> to vector<1x16x256xf32>
    %324 = arith.mulf %319, %323 : vector<1x16x256xf32>
    %325 = arith.addf %318, %324 : vector<1x16x256xf32>
    %326 = vector.extract_strided_slice %311 {offsets = [0, 0, 32], sizes = [1, 16, 256], strides = [1, 1, 1]} : vector<1x16x320xf32> to vector<1x16x256xf32>
    %c12_118 = arith.constant 12 : index
    %c0_119 = arith.constant 0 : index
    %327 = vector.load %arg8[%c12_118, %c0_119] : memref<25x256xf32, #tpu.memory_space<vmem>>, vector<1x256xf32>
    %328 = vector.shape_cast %327 : vector<1x256xf32> to vector<256xf32>
    %329 = vector.shape_cast %328 : vector<256xf32> to vector<1x1x256xf32>
    %330 = vector.broadcast %329 : vector<1x1x256xf32> to vector<1x16x256xf32>
    %331 = arith.mulf %326, %330 : vector<1x16x256xf32>
    %332 = arith.addf %325, %331 : vector<1x16x256xf32>
    %333 = vector.extract_strided_slice %311 {offsets = [0, 0, 48], sizes = [1, 16, 256], strides = [1, 1, 1]} : vector<1x16x320xf32> to vector<1x16x256xf32>
    %c13_120 = arith.constant 13 : index
    %c0_121 = arith.constant 0 : index
    %334 = vector.load %arg8[%c13_120, %c0_121] : memref<25x256xf32, #tpu.memory_space<vmem>>, vector<1x256xf32>
    %335 = vector.shape_cast %334 : vector<1x256xf32> to vector<256xf32>
    %336 = vector.shape_cast %335 : vector<256xf32> to vector<1x1x256xf32>
    %337 = vector.broadcast %336 : vector<1x1x256xf32> to vector<1x16x256xf32>
    %338 = arith.mulf %333, %337 : vector<1x16x256xf32>
    %339 = arith.addf %332, %338 : vector<1x16x256xf32>
    %340 = vector.extract_strided_slice %311 {offsets = [0, 0, 64], sizes = [1, 16, 256], strides = [1, 1, 1]} : vector<1x16x320xf32> to vector<1x16x256xf32>
    %c14_122 = arith.constant 14 : index
    %c0_123 = arith.constant 0 : index
    %341 = vector.load %arg8[%c14_122, %c0_123] : memref<25x256xf32, #tpu.memory_space<vmem>>, vector<1x256xf32>
    %342 = vector.shape_cast %341 : vector<1x256xf32> to vector<256xf32>
    %343 = vector.shape_cast %342 : vector<256xf32> to vector<1x1x256xf32>
    %344 = vector.broadcast %343 : vector<1x1x256xf32> to vector<1x16x256xf32>
    %345 = arith.mulf %340, %344 : vector<1x16x256xf32>
    %346 = arith.addf %339, %345 : vector<1x16x256xf32>
    %c0_124 = arith.constant 0 : index
    %c3_125 = arith.constant 3 : index
    %c0_126 = arith.constant 0 : index
    %347 = vector.load %arg12[%c0_124, %c3_125, %c0_126] : memref<1x20x320xf32, #tpu.memory_space<vmem>>, vector<1x16x320xf32>
    %348 = vector.extract_strided_slice %347 {offsets = [0, 0, 0], sizes = [1, 16, 256], strides = [1, 1, 1]} : vector<1x16x320xf32> to vector<1x16x256xf32>
    %c15_127 = arith.constant 15 : index
    %c0_128 = arith.constant 0 : index
    %349 = vector.load %arg8[%c15_127, %c0_128] : memref<25x256xf32, #tpu.memory_space<vmem>>, vector<1x256xf32>
    %350 = vector.shape_cast %349 : vector<1x256xf32> to vector<256xf32>
    %351 = vector.shape_cast %350 : vector<256xf32> to vector<1x1x256xf32>
    %352 = vector.broadcast %351 : vector<1x1x256xf32> to vector<1x16x256xf32>
    %353 = arith.mulf %348, %352 : vector<1x16x256xf32>
    %354 = arith.addf %346, %353 : vector<1x16x256xf32>
    %355 = vector.extract_strided_slice %347 {offsets = [0, 0, 16], sizes = [1, 16, 256], strides = [1, 1, 1]} : vector<1x16x320xf32> to vector<1x16x256xf32>
    %c16_129 = arith.constant 16 : index
    %c0_130 = arith.constant 0 : index
    %356 = vector.load %arg8[%c16_129, %c0_130] : memref<25x256xf32, #tpu.memory_space<vmem>>, vector<1x256xf32>
    %357 = vector.shape_cast %356 : vector<1x256xf32> to vector<256xf32>
    %358 = vector.shape_cast %357 : vector<256xf32> to vector<1x1x256xf32>
    %359 = vector.broadcast %358 : vector<1x1x256xf32> to vector<1x16x256xf32>
    %360 = arith.mulf %355, %359 : vector<1x16x256xf32>
    %361 = arith.addf %354, %360 : vector<1x16x256xf32>
    %362 = vector.extract_strided_slice %347 {offsets = [0, 0, 32], sizes = [1, 16, 256], strides = [1, 1, 1]} : vector<1x16x320xf32> to vector<1x16x256xf32>
    %c17_131 = arith.constant 17 : index
    %c0_132 = arith.constant 0 : index
    %363 = vector.load %arg8[%c17_131, %c0_132] : memref<25x256xf32, #tpu.memory_space<vmem>>, vector<1x256xf32>
    %364 = vector.shape_cast %363 : vector<1x256xf32> to vector<256xf32>
    %365 = vector.shape_cast %364 : vector<256xf32> to vector<1x1x256xf32>
    %366 = vector.broadcast %365 : vector<1x1x256xf32> to vector<1x16x256xf32>
    %367 = arith.mulf %362, %366 : vector<1x16x256xf32>
    %368 = arith.addf %361, %367 : vector<1x16x256xf32>
    %369 = vector.extract_strided_slice %347 {offsets = [0, 0, 48], sizes = [1, 16, 256], strides = [1, 1, 1]} : vector<1x16x320xf32> to vector<1x16x256xf32>
    %c18_133 = arith.constant 18 : index
    %c0_134 = arith.constant 0 : index
    %370 = vector.load %arg8[%c18_133, %c0_134] : memref<25x256xf32, #tpu.memory_space<vmem>>, vector<1x256xf32>
    %371 = vector.shape_cast %370 : vector<1x256xf32> to vector<256xf32>
    %372 = vector.shape_cast %371 : vector<256xf32> to vector<1x1x256xf32>
    %373 = vector.broadcast %372 : vector<1x1x256xf32> to vector<1x16x256xf32>
    %374 = arith.mulf %369, %373 : vector<1x16x256xf32>
    %375 = arith.addf %368, %374 : vector<1x16x256xf32>
    %376 = vector.extract_strided_slice %347 {offsets = [0, 0, 64], sizes = [1, 16, 256], strides = [1, 1, 1]} : vector<1x16x320xf32> to vector<1x16x256xf32>
    %c19_135 = arith.constant 19 : index
    %c0_136 = arith.constant 0 : index
    %377 = vector.load %arg8[%c19_135, %c0_136] : memref<25x256xf32, #tpu.memory_space<vmem>>, vector<1x256xf32>
    %378 = vector.shape_cast %377 : vector<1x256xf32> to vector<256xf32>
    %379 = vector.shape_cast %378 : vector<256xf32> to vector<1x1x256xf32>
    %380 = vector.broadcast %379 : vector<1x1x256xf32> to vector<1x16x256xf32>
    %381 = arith.mulf %376, %380 : vector<1x16x256xf32>
    %382 = arith.addf %375, %381 : vector<1x16x256xf32>
    %c0_137 = arith.constant 0 : index
    %c4_138 = arith.constant 4 : index
    %c0_139 = arith.constant 0 : index
    %383 = vector.load %arg12[%c0_137, %c4_138, %c0_139] : memref<1x20x320xf32, #tpu.memory_space<vmem>>, vector<1x16x320xf32>
    %384 = vector.extract_strided_slice %383 {offsets = [0, 0, 0], sizes = [1, 16, 256], strides = [1, 1, 1]} : vector<1x16x320xf32> to vector<1x16x256xf32>
    %c20_140 = arith.constant 20 : index
    %c0_141 = arith.constant 0 : index
    %385 = vector.load %arg8[%c20_140, %c0_141] : memref<25x256xf32, #tpu.memory_space<vmem>>, vector<1x256xf32>
    %386 = vector.shape_cast %385 : vector<1x256xf32> to vector<256xf32>
    %387 = vector.shape_cast %386 : vector<256xf32> to vector<1x1x256xf32>
    %388 = vector.broadcast %387 : vector<1x1x256xf32> to vector<1x16x256xf32>
    %389 = arith.mulf %384, %388 : vector<1x16x256xf32>
    %390 = arith.addf %382, %389 : vector<1x16x256xf32>
    %391 = vector.extract_strided_slice %383 {offsets = [0, 0, 16], sizes = [1, 16, 256], strides = [1, 1, 1]} : vector<1x16x320xf32> to vector<1x16x256xf32>
    %c21_142 = arith.constant 21 : index
    %c0_143 = arith.constant 0 : index
    %392 = vector.load %arg8[%c21_142, %c0_143] : memref<25x256xf32, #tpu.memory_space<vmem>>, vector<1x256xf32>
    %393 = vector.shape_cast %392 : vector<1x256xf32> to vector<256xf32>
    %394 = vector.shape_cast %393 : vector<256xf32> to vector<1x1x256xf32>
    %395 = vector.broadcast %394 : vector<1x1x256xf32> to vector<1x16x256xf32>
    %396 = arith.mulf %391, %395 : vector<1x16x256xf32>
    %397 = arith.addf %390, %396 : vector<1x16x256xf32>
    %398 = vector.extract_strided_slice %383 {offsets = [0, 0, 32], sizes = [1, 16, 256], strides = [1, 1, 1]} : vector<1x16x320xf32> to vector<1x16x256xf32>
    %c22_144 = arith.constant 22 : index
    %c0_145 = arith.constant 0 : index
    %399 = vector.load %arg8[%c22_144, %c0_145] : memref<25x256xf32, #tpu.memory_space<vmem>>, vector<1x256xf32>
    %400 = vector.shape_cast %399 : vector<1x256xf32> to vector<256xf32>
    %401 = vector.shape_cast %400 : vector<256xf32> to vector<1x1x256xf32>
    %402 = vector.broadcast %401 : vector<1x1x256xf32> to vector<1x16x256xf32>
    %403 = arith.mulf %398, %402 : vector<1x16x256xf32>
    %404 = arith.addf %397, %403 : vector<1x16x256xf32>
    %405 = vector.extract_strided_slice %383 {offsets = [0, 0, 48], sizes = [1, 16, 256], strides = [1, 1, 1]} : vector<1x16x320xf32> to vector<1x16x256xf32>
    %c23_146 = arith.constant 23 : index
    %c0_147 = arith.constant 0 : index
    %406 = vector.load %arg8[%c23_146, %c0_147] : memref<25x256xf32, #tpu.memory_space<vmem>>, vector<1x256xf32>
    %407 = vector.shape_cast %406 : vector<1x256xf32> to vector<256xf32>
    %408 = vector.shape_cast %407 : vector<256xf32> to vector<1x1x256xf32>
    %409 = vector.broadcast %408 : vector<1x1x256xf32> to vector<1x16x256xf32>
    %410 = arith.mulf %405, %409 : vector<1x16x256xf32>
    %411 = arith.addf %404, %410 : vector<1x16x256xf32>
    %412 = vector.extract_strided_slice %383 {offsets = [0, 0, 64], sizes = [1, 16, 256], strides = [1, 1, 1]} : vector<1x16x320xf32> to vector<1x16x256xf32>
    %c24_148 = arith.constant 24 : index
    %c0_149 = arith.constant 0 : index
    %413 = vector.load %arg8[%c24_148, %c0_149] : memref<25x256xf32, #tpu.memory_space<vmem>>, vector<1x256xf32>
    %414 = vector.shape_cast %413 : vector<1x256xf32> to vector<256xf32>
    %415 = vector.shape_cast %414 : vector<256xf32> to vector<1x1x256xf32>
    %416 = vector.broadcast %415 : vector<1x1x256xf32> to vector<1x16x256xf32>
    %417 = arith.mulf %412, %416 : vector<1x16x256xf32>
    %418 = arith.addf %411, %417 : vector<1x16x256xf32>
    %c0_150 = arith.constant 0 : index
    %c0_151 = arith.constant 0 : index
    %419 = vector.load %arg9[%c0_150, %c0_151] : memref<1x256xf32, #tpu.memory_space<vmem>>, vector<1x256xf32>
    %420 = vector.shape_cast %419 : vector<1x256xf32> to vector<256xf32>
    %421 = vector.shape_cast %420 : vector<256xf32> to vector<1x1x256xf32>
    %422 = vector.broadcast %421 : vector<1x1x256xf32> to vector<1x16x256xf32>
    %423 = arith.addf %418, %422 : vector<1x16x256xf32>
    %424 = arith.addf %231, %1 : vector<1x16x256xf32>
    %425 = arith.truncf %424 : vector<1x16x256xf32> to vector<1x16x256xbf16>
    %c0_152 = arith.constant 0 : index
    %c0_153 = arith.constant 0 : index
    %c0_154 = arith.constant 0 : index
    %c0_155 = arith.constant 0 : index
    %426 = vector.load %arg10[%c0_152, %c0_153, %c0_154, %c0_155] : memref<2x1x16x256xbf16, #tpu.memory_space<vmem>>, vector<1x1x16x256xbf16>
    %427 = vector.shape_cast %426 : vector<1x1x16x256xbf16> to vector<1x16x256xbf16>
    %428 = vector.shape_cast %425 : vector<1x16x256xbf16> to vector<1x1x16x256xbf16>
    tpu.vector_store %arg10[%c0_152, %c0_153, %c0_154, %c0_155], %428 {strides = array<i32>} : memref<2x1x16x256xbf16, #tpu.memory_space<vmem>>, vector<1x1x16x256xbf16>,
    %429 = arith.addf %423, %3 : vector<1x16x256xf32>
    %430 = arith.truncf %429 : vector<1x16x256xf32> to vector<1x16x256xbf16>
    %c1_156 = arith.constant 1 : index
    %c0_157 = arith.constant 0 : index
    %c0_158 = arith.constant 0 : index
    %c0_159 = arith.constant 0 : index
    %431 = vector.load %arg10[%c1_156, %c0_157, %c0_158, %c0_159] : memref<2x1x16x256xbf16, #tpu.memory_space<vmem>>, vector<1x1x16x256xbf16>
    %432 = vector.shape_cast %431 : vector<1x1x16x256xbf16> to vector<1x16x256xbf16>
    %433 = vector.shape_cast %430 : vector<1x16x256xbf16> to vector<1x1x16x256xbf16>
    tpu.vector_store %arg10[%c1_156, %c0_157, %c0_158, %c0_159], %433 {strides = array<i32>} : memref<2x1x16x256xbf16, #tpu.memory_space<vmem>>, vector<1x1x16x256xbf16>,
    return
  }
  func.func @transform_0(%arg0: i32) -> (i32, i32, i32, i32) {
    %c0_i32 = arith.constant 0 : i32
    %c0_i32_0 = arith.constant 0 : i32
    %c0_i32_1 = arith.constant 0 : i32
    %c0_i32_2 = arith.constant 0 : i32
    return %c0_i32, %arg0, %c0_i32_0, %c0_i32_1 : i32, i32, i32, i32
  }
  func.func @transform_1(%arg0: i32) -> (i32, i32) {
    %c0_i32 = arith.constant 0 : i32
    %c0_i32_0 = arith.constant 0 : i32
    %c0_i32_1 = arith.constant 0 : i32
    return %c0_i32, %c0_i32_0 : i32, i32
  }
  func.func @transform_2(%arg0: i32) -> (i32, i32) {
    %c0_i32 = arith.constant 0 : i32
    %c0_i32_0 = arith.constant 0 : i32
    %c0_i32_1 = arith.constant 0 : i32
    return %c0_i32, %c0_i32_0 : i32, i32
  }
  func.func @transform_3(%arg0: i32) -> (i32, i32) {
    %c0_i32 = arith.constant 0 : i32
    %c0_i32_0 = arith.constant 0 : i32
    %c0_i32_1 = arith.constant 0 : i32
    return %c0_i32, %c0_i32_0 : i32, i32
  }
  func.func @transform_4(%arg0: i32) -> (i32, i32) {
    %c0_i32 = arith.constant 0 : i32
    %c0_i32_0 = arith.constant 0 : i32
    %c0_i32_1 = arith.constant 0 : i32
    return %c0_i32, %c0_i32_0 : i32, i32
  }
  func.func @transform_5(%arg0: i32) -> (i32, i32) {
    %c0_i32 = arith.constant 0 : i32
    %c0_i32_0 = arith.constant 0 : i32
    %c0_i32_1 = arith.constant 0 : i32
    return %c0_i32, %c0_i32_0 : i32, i32
  }
  func.func @transform_6(%arg0: i32) -> (i32, i32) {
    %c0_i32 = arith.constant 0 : i32
    %c0_i32_0 = arith.constant 0 : i32
    %c0_i32_1 = arith.constant 0 : i32
    return %c0_i32, %c0_i32_0 : i32, i32
  }
  func.func @transform_7(%arg0: i32) -> (i32, i32) {
    %c0_i32 = arith.constant 0 : i32
    %c0_i32_0 = arith.constant 0 : i32
    %c0_i32_1 = arith.constant 0 : i32
    return %c0_i32, %c0_i32_0 : i32, i32
  }
  func.func @transform_8(%arg0: i32) -> (i32, i32) {
    %c0_i32 = arith.constant 0 : i32
    %c0_i32_0 = arith.constant 0 : i32
    %c0_i32_1 = arith.constant 0 : i32
    return %c0_i32, %c0_i32_0 : i32, i32
  }
  func.func @transform_9(%arg0: i32) -> (i32, i32, i32, i32) {
    %c0_i32 = arith.constant 0 : i32
    %c0_i32_0 = arith.constant 0 : i32
    %c0_i32_1 = arith.constant 0 : i32
    %c0_i32_2 = arith.constant 0 : i32
    return %c0_i32, %arg0, %c0_i32_0, %c0_i32_1 : i32, i32, i32, i32
  }
}

</mosaic_0001>

<llo_original>
// kernel: ghost_bottleneck_forward.1
$region0: #{ghost_bottleneck_forward.1}
  #allocation0 [shape = 'u32[]', space=smem, size = 0x4, offset = 0x4, fixed_abs, tag = 'smem constant byte address 0x4 - core index']
  #allocation1 [shape = 'u32[72,128]{1,0:T(1,128)}', space=vmem, size = 0x9000, scoped, tag = 'internal scratch']
  #allocation2 [shape = 'f32[1,20,160]{2,1,0:T(8,128)}', space=vmem, size = 0x6000, scoped, tag = 'scratch operand']
  #allocation3 [shape = 'f32[1,20,320]{2,1,0:T(8,128)}', space=vmem, size = 0x9000, scoped, tag = 'scratch operand']
  %s0 = inlined_call_operand.vmem [shape: f32[2,2,16,256], index: 0, kind: input, shape index: {}]
  %s1 = inlined_call_operand.vmem [shape: bf16[512,128], index: 1, kind: input, shape index: {}]
  %s2 = inlined_call_operand.vmem [shape: f32[1,128], index: 2, kind: input, shape index: {}]
  %s3 = inlined_call_operand.vmem [shape: f32[25,128], index: 3, kind: input, shape index: {}]
  %s4 = inlined_call_operand.vmem [shape: f32[1,128], index: 4, kind: input, shape index: {}]
  %s5 = inlined_call_operand.vmem [shape: bf16[256,256], index: 5, kind: input, shape index: {}]
  %s6 = inlined_call_operand.vmem [shape: f32[1,256], index: 6, kind: input, shape index: {}]
  %s7 = inlined_call_operand.vmem [shape: f32[25,256], index: 7, kind: input, shape index: {}]
  %s8 = inlined_call_operand.vmem [shape: f32[1,256], index: 8, kind: input, shape index: {}]
  %s9 = inlined_call_operand.vmem [shape: bf16[2,2,16,256], index: 9, kind: output, shape index: {}]
  %s10 = sld [smem:[#allocation0]]
  $region126: #{ghost_bottleneck_forward.1} parent=0
    _
  %s12 = ssub.s32 1, %s10
  %s13 = scalar_select 0, %s12, %s10
  $region1: #{ghost_bottleneck_forward.1} parent=0
    #allocation4 [shape = 'u8[65536]{0}', space=vmem, size = 0x10000, scoped, tag = 'input window, operand 0']
    #allocation5 [shape = 'u8[32768]{0}', space=vmem, size = 0x8000, scoped, tag = 'output window, operand 0']
    loop: start=0, step=1, limit=4
    $region2: #{ghost_bottleneck_forward.1} parent=1 // loop_pre_header
      _
    $region3: #{ghost_bottleneck_forward.1} parent=1 // loop_header
      %s15 = sphi 0, %s19
      %p16 = scmp.ge.s32.totalorder %s15, 4
      %s25 = sphi 0, %s27
      %s28 = sphi 0, %s25
      %s29 = sphi 0, %s28
      %s45 = sphi 0, %s29
      %s49 = sphi 0, %s49
      %s51 = sphi 0, %s49
      %s52 = sphi 0, %s51
      %s66 = sphi 0, %s52
      %s70 = sphi 0, %s70
      %s72 = sphi 0, %s70
      %s73 = sphi 0, %s72
      %s87 = sphi 0, %s73
      %s91 = sphi 0, %s91
      %s93 = sphi 0, %s91
      %s94 = sphi 0, %s93
      %s108 = sphi 0, %s94
      %s112 = sphi 0, %s112
      %s114 = sphi 0, %s112
      %s115 = sphi 0, %s114
      %s129 = sphi 0, %s115
      %s133 = sphi 0, %s133
      %s135 = sphi 0, %s133
      %s136 = sphi 0, %s135
      %s150 = sphi 0, %s136
      %s154 = sphi 0, %s154
      %s156 = sphi 0, %s154
      %s157 = sphi 0, %s156
      %s171 = sphi 0, %s157
      %s175 = sphi 0, %s175
      %s177 = sphi 0, %s175
      %s178 = sphi 0, %s177
      %s192 = sphi 0, %s178
      %s196 = sphi 0, %s196
      %s198 = sphi 0, %s196
      %s199 = sphi 0, %s198
      %s213 = sphi 0, %s199
      %s219 = sphi 0, %s221
      %s222 = sphi 0, %s219
      %s223 = sphi 0, %s222
      %s239 = sphi 0, %s223
    $region4: #{ghost_bottleneck_forward.1} parent=1 // loop_header_branch
      %18 = sbr.rel (%p16) target = $region8
    $region5: #{ghost_bottleneck_forward.1} parent=1 // loop_body
      %s20 = ssub.s32 %s15, 1
      %s21 = ssub.s32 %s15, 2
      %s22 = sadd.s32 %s15, 1
      %s23 = ssub.s32 %s15, %s22
      %p24 = scmp.eq.s32.totalorder %s23, 0
      %s26 = sadd.s32 %s25, 1
      %s27 = scalar_select %p24, %s25, %s26
      %p30 = pneg %p24
      %p31 = scmp.eq.s32.totalorder %s15, 1
      %p32 = por %p30, %p31
      %p33 = scmp.ne.s32.totalorder %s25, %s28
      %p34 = scmp.eq.s32.totalorder %s15, 0
      %p35 = por %p33, %p34
      %p36 = scmp.ne.s32.totalorder %s25, %s28
      %p37 = scmp.eq.s32.totalorder %s20, 1
      %p38 = por %p36, %p37
      %p39 = scmp.ne.s32.totalorder %s28, %s29
      %p40 = scmp.eq.s32.totalorder %s20, 0
      %p41 = por %p39, %p40
      %p42 = scmp.ne.s32.totalorder %s28, %s29
      %p43 = scmp.eq.s32.totalorder %s21, 1
      %p44 = por %p42, %p43
      %p46 = scmp.ne.s32.totalorder %s29, %s45
      %p47 = scmp.eq.s32.totalorder %s21, 0
      %p48 = por %p46, %p47
      %s50 = sadd.s32 %s49, 1
      %p53 = scmp.eq.s32.totalorder %s15, 1
      %p54 = scmp.ne.s32.totalorder %s49, %s51
      %p55 = scmp.eq.s32.totalorder %s15, 0
      %p56 = por %p54, %p55
      %p57 = scmp.ne.s32.totalorder %s49, %s51
      %p58 = scmp.eq.s32.totalorder %s20, 1
      %p59 = por %p57, %p58
      %p60 = scmp.ne.s32.totalorder %s51, %s52
      %p61 = scmp.eq.s32.totalorder %s20, 0
      %p62 = por %p60, %p61
      %p63 = scmp.ne.s32.totalorder %s51, %s52
      %p64 = scmp.eq.s32.totalorder %s21, 1
      %p65 = por %p63, %p64
      %p67 = scmp.ne.s32.totalorder %s52, %s66
      %p68 = scmp.eq.s32.totalorder %s21, 0
      %p69 = por %p67, %p68
      %s71 = sadd.s32 %s70, 1
      %p74 = scmp.eq.s32.totalorder %s15, 1
      %p75 = scmp.ne.s32.totalorder %s70, %s72
      %p76 = scmp.eq.s32.totalorder %s15, 0
      %p77 = por %p75, %p76
      %p78 = scmp.ne.s32.totalorder %s70, %s72
      %p79 = scmp.eq.s32.totalorder %s20, 1
      %p80 = por %p78, %p79
      %p81 = scmp.ne.s32.totalorder %s72, %s73
      %p82 = scmp.eq.s32.totalorder %s20, 0
      %p83 = por %p81, %p82
      %p84 = scmp.ne.s32.totalorder %s72, %s73
      %p85 = scmp.eq.s32.totalorder %s21, 1
      %p86 = por %p84, %p85
      %p88 = scmp.ne.s32.totalorder %s73, %s87
      %p89 = scmp.eq.s32.totalorder %s21, 0
      %p90 = por %p88, %p89
      %s92 = sadd.s32 %s91, 1
      %p95 = scmp.eq.s32.totalorder %s15, 1
      %p96 = scmp.ne.s32.totalorder %s91, %s93
      %p97 = scmp.eq.s32.totalorder %s15, 0
      %p98 = por %p96, %p97
      %p99 = scmp.ne.s32.totalorder %s91, %s93
      %p100 = scmp.eq.s32.totalorder %s20, 1
      %p101 = por %p99, %p100
      %p102 = scmp.ne.s32.totalorder %s93, %s94
      %p103 = scmp.eq.s32.totalorder %s20, 0
      %p104 = por %p102, %p103
      %p105 = scmp.ne.s32.totalorder %s93, %s94
      %p106 = scmp.eq.s32.totalorder %s21, 1
      %p107 = por %p105, %p106
      %p109 = scmp.ne.s32.totalorder %s94, %s108
      %p110 = scmp.eq.s32.totalorder %s21, 0
      %p111 = por %p109, %p110
      %s113 = sadd.s32 %s112, 1
      %p116 = scmp.eq.s32.totalorder %s15, 1
      %p117 = scmp.ne.s32.totalorder %s112, %s114
      %p118 = scmp.eq.s32.totalorder %s15, 0
      %p119 = por %p117, %p118
      %p120 = scmp.ne.s32.totalorder %s112, %s114
      %p121 = scmp.eq.s32.totalorder %s20, 1
      %p122 = por %p120, %p121
      %p123 = scmp.ne.s32.totalorder %s114, %s115
      %p124 = scmp.eq.s32.totalorder %s20, 0
      %p125 = por %p123, %p124
      %p126 = scmp.ne.s32.totalorder %s114, %s115
      %p127 = scmp.eq.s32.totalorder %s21, 1
      %p128 = por %p126, %p127
      %p130 = scmp.ne.s32.totalorder %s115, %s129
      %p131 = scmp.eq.s32.totalorder %s21, 0
      %p132 = por %p130, %p131
      %s134 = sadd.s32 %s133, 1
      %p137 = scmp.eq.s32.totalorder %s15, 1
      %p138 = scmp.ne.s32.totalorder %s133, %s135
      %p139 = scmp.eq.s32.totalorder %s15, 0
      %p140 = por %p138, %p139
      %p141 = scmp.ne.s32.totalorder %s133, %s135
      %p142 = scmp.eq.s32.totalorder %s20, 1
      %p143 = por %p141, %p142
      %p144 = scmp.ne.s32.totalorder %s135, %s136
      %p145 = scmp.eq.s32.totalorder %s20, 0
      %p146 = por %p144, %p145
      %p147 = scmp.ne.s32.totalorder %s135, %s136
      %p148 = scmp.eq.s32.totalorder %s21, 1
      %p149 = por %p147, %p148
      %p151 = scmp.ne.s32.totalorder %s136, %s150
      %p152 = scmp.eq.s32.totalorder %s21, 0
      %p153 = por %p151, %p152
      %s155 = sadd.s32 %s154, 1
      %p158 = scmp.eq.s32.totalorder %s15, 1
      %p159 = scmp.ne.s32.totalorder %s154, %s156
      %p160 = scmp.eq.s32.totalorder %s15, 0
      %p161 = por %p159, %p160
      %p162 = scmp.ne.s32.totalorder %s154, %s156
      %p163 = scmp.eq.s32.totalorder %s20, 1
      %p164 = por %p162, %p163
      %p165 = scmp.ne.s32.totalorder %s156, %s157
      %p166 = scmp.eq.s32.totalorder %s20, 0
      %p167 = por %p165, %p166
      %p168 = scmp.ne.s32.totalorder %s156, %s157
      %p169 = scmp.eq.s32.totalorder %s21, 1
      %p170 = por %p168, %p169
      %p172 = scmp.ne.s32.totalorder %s157, %s171
      %p173 = scmp.eq.s32.totalorder %s21, 0
      %p174 = por %p172, %p173
      %s176 = sadd.s32 %s175, 1
      %p179 = scmp.eq.s32.totalorder %s15, 1
      %p180 = scmp.ne.s32.totalorder %s175, %s177
      %p181 = scmp.eq.s32.totalorder %s15, 0
      %p182 = por %p180, %p181
      %p183 = scmp.ne.s32.totalorder %s175, %s177
      %p184 = scmp.eq.s32.totalorder %s20, 1
      %p185 = por %p183, %p184
      %p186 = scmp.ne.s32.totalorder %s177, %s178
      %p187 = scmp.eq.s32.totalorder %s20, 0
      %p188 = por %p186, %p187
      %p189 = scmp.ne.s32.totalorder %s177, %s178
      %p190 = scmp.eq.s32.totalorder %s21, 1
      %p191 = por %p189, %p190
      %p193 = scmp.ne.s32.totalorder %s178, %s192
      %p194 = scmp.eq.s32.totalorder %s21, 0
      %p195 = por %p193, %p194
      %s197 = sadd.s32 %s196, 1
      %p200 = scmp.eq.s32.totalorder %s15, 1
      %p201 = scmp.ne.s32.totalorder %s196, %s198
      %p202 = scmp.eq.s32.totalorder %s15, 0
      %p203 = por %p201, %p202
      %p204 = scmp.ne.s32.totalorder %s196, %s198
      %p205 = scmp.eq.s32.totalorder %s20, 1
      %p206 = por %p204, %p205
      %p207 = scmp.ne.s32.totalorder %s198, %s199
      %p208 = scmp.eq.s32.totalorder %s20, 0
      %p209 = por %p207, %p208
      %p210 = scmp.ne.s32.totalorder %s198, %s199
      %p211 = scmp.eq.s32.totalorder %s21, 1
      %p212 = por %p210, %p211
      %p214 = scmp.ne.s32.totalorder %s199, %s213
      %p215 = scmp.eq.s32.totalorder %s21, 0
      %p216 = por %p214, %p215
      %s217 = ssub.s32 %s15, %s22
      %p218 = scmp.eq.s32.totalorder %s217, 0
      %s220 = sadd.s32 %s219, 1
      %s221 = scalar_select %p218, %s219, %s220
      %p224 = pneg %p218
      %p225 = scmp.eq.s32.totalorder %s15, 1
      %p226 = por %p224, %p225
      %p227 = scmp.ne.s32.totalorder %s219, %s222
      %p228 = scmp.eq.s32.totalorder %s15, 0
      %p229 = por %p227, %p228
      %p230 = scmp.ne.s32.totalorder %s219, %s222
      %p231 = scmp.eq.s32.totalorder %s20, 1
      %p232 = por %p230, %p231
      %p233 = scmp.ne.s32.totalorder %s222, %s223
      %p234 = scmp.eq.s32.totalorder %s20, 0
      %p235 = por %p233, %p234
      %p236 = scmp.ne.s32.totalorder %s222, %s223
      %p237 = scmp.eq.s32.totalorder %s21, 1
      %p238 = por %p236, %p237
      %p240 = scmp.ne.s32.totalorder %s223, %s239
      %p241 = scmp.eq.s32.totalorder %s21, 0
      %p242 = por %p240, %p241
      %p243 = scmp.le.s32.totalorder 1, %s15
      %p244 = scmp.lt.s32.totalorder %s15, 3
      %p245 = pnand %p243, %p244
      %p246 = pneg %p245
      // Predicated region
      $region9: #{ghost_bottleneck_forward.1} parent=5 // pred_check
        _
      $region10: #{ghost_bottleneck_forward.1} parent=5 // pred_check_branch
        %248 = sbr.rel (%p245) target = $region12
      $region11: #{ghost_bottleneck_forward.1} parent=5 // pred_region
        %s249 = ssub.s32 %s15, 1
        // Predicated region
        $region13: #{ghost_bottleneck_forward.1} parent=11 // pred_check
          %p250 = pneg %p62
        $region14: #{ghost_bottleneck_forward.1} parent=11 // pred_check_branch
          %252 = sbr.rel (%p250) target = $region16
        $region15: #{ghost_bottleneck_forward.1} parent=11 // pred_region
          _
        $region16: #{ghost_bottleneck_forward.1} parent=11 // pred_fallthru
          _
        // Predicated region
        $region17: #{ghost_bottleneck_forward.1} parent=11 // pred_check
          %p253 = pneg %p83
        $region18: #{ghost_bottleneck_forward.1} parent=11 // pred_check_branch
          %255 = sbr.rel (%p253) target = $region20
        $region19: #{ghost_bottleneck_forward.1} parent=11 // pred_region
          _
        $region20: #{ghost_bottleneck_forward.1} parent=11 // pred_fallthru
          _
        // Predicated region
        $region21: #{ghost_bottleneck_forward.1} parent=11 // pred_check
          %p256 = pneg %p104
        $region22: #{ghost_bottleneck_forward.1} parent=11 // pred_check_branch
          %258 = sbr.rel (%p256) target = $region24
        $region23: #{ghost_bottleneck_forward.1} parent=11 // pred_region
          _
        $region24: #{ghost_bottleneck_forward.1} parent=11 // pred_fallthru
          _
        // Predicated region
        $region25: #{ghost_bottleneck_forward.1} parent=11 // pred_check
          %p259 = pneg %p125
        $region26: #{ghost_bottleneck_forward.1} parent=11 // pred_check_branch
          %261 = sbr.rel (%p259) target = $region28
        $region27: #{ghost_bottleneck_forward.1} parent=11 // pred_region
          _
        $region28: #{ghost_bottleneck_forward.1} parent=11 // pred_fallthru
          _
        // Predicated region
        $region29: #{ghost_bottleneck_forward.1} parent=11 // pred_check
          %p262 = pneg %p146
        $region30: #{ghost_bottleneck_forward.1} parent=11 // pred_check_branch
          %264 = sbr.rel (%p262) target = $region32
        $region31: #{ghost_bottleneck_forward.1} parent=11 // pred_region
          _
        $region32: #{ghost_bottleneck_forward.1} parent=11 // pred_fallthru
          _
        // Predicated region
        $region33: #{ghost_bottleneck_forward.1} parent=11 // pred_check
          %p265 = pneg %p167
        $region34: #{ghost_bottleneck_forward.1} parent=11 // pred_check_branch
          %267 = sbr.rel (%p265) target = $region36
        $region35: #{ghost_bottleneck_forward.1} parent=11 // pred_region
          _
        $region36: #{ghost_bottleneck_forward.1} parent=11 // pred_fallthru
          _
        // Predicated region
        $region37: #{ghost_bottleneck_forward.1} parent=11 // pred_check
          %p268 = pneg %p188
        $region38: #{ghost_bottleneck_forward.1} parent=11 // pred_check_branch
          %270 = sbr.rel (%p268) target = $region40
        $region39: #{ghost_bottleneck_forward.1} parent=11 // pred_region
          _
        $region40: #{ghost_bottleneck_forward.1} parent=11 // pred_fallthru
          _
        // Predicated region
        $region41: #{ghost_bottleneck_forward.1} parent=11 // pred_check
          %p271 = pneg %p209
        $region42: #{ghost_bottleneck_forward.1} parent=11 // pred_check_branch
          %273 = sbr.rel (%p271) target = $region44
        $region43: #{ghost_bottleneck_forward.1} parent=11 // pred_region
          _
        $region44: #{ghost_bottleneck_forward.1} parent=11 // pred_fallthru
          _
      $region12: #{ghost_bottleneck_forward.1} parent=5 // pred_fallthru
        _
      %p274 = scmp.lt.s32.totalorder %s15, 2
      // Predicated region
      $region45: #{ghost_bottleneck_forward.1} parent=5 // pred_check
        %p275 = pneg %p274
      $region46: #{ghost_bottleneck_forward.1} parent=5 // pred_check_branch
        %277 = sbr.rel (%p275) target = $region48
      $region47: #{ghost_bottleneck_forward.1} parent=5 // pred_region
        // Predicated region
        $region49: #{ghost_bottleneck_forward.1} parent=47 // pred_check
          %p278 = pneg %p35
        $region50: #{ghost_bottleneck_forward.1} parent=47 // pred_check_branch
          %280 = sbr.rel (%p278) target = $region52
        $region51: #{ghost_bottleneck_forward.1} parent=47 // pred_region
          %s281 = sand.u32 %s25, 1
          %s282 = sand.u32 %s25, 1
          %s283 = smul.addr %s282, 64
          %s284 = scalar_lea.vmem [#allocation4], %s283
          %s285 = smul.addr %s15, 4
          %s286 = smul.addr %s285, 8
          %s287 = scalar_lea.vmem %s0, %s286
          // Predicated region
          $region53: #{ghost_bottleneck_forward.1} parent=51 // pred_check
            _
          $region54: #{ghost_bottleneck_forward.1} parent=51 // pred_check_branch
            %289 = sbr.rel (0) target = $region56
          $region55: #{ghost_bottleneck_forward.1} parent=51 // pred_region
            // Predicated region
            $region57: #{ghost_bottleneck_forward.1} parent=55 // pred_check
              _
            $region58: #{ghost_bottleneck_forward.1} parent=55 // pred_check_branch
              %291 = sbr.rel (0) target = $region60
            $region59: #{ghost_bottleneck_forward.1} parent=55 // pred_region
              loop: start=0, step=1, limit=1
              $region61: #{ghost_bottleneck_forward.1} parent=59 // loop_pre_header
                _
              $region62: #{ghost_bottleneck_forward.1} parent=59 // loop_header
                %s293 = sphi 0, %s297
                %p294 = scmp.ge.s32.totalorder %s293, 1
                %s298 = sphi %s287, %s287
                %s299 = sphi %s284, %s284
              $region63: #{ghost_bottleneck_forward.1} parent=59 // loop_header_branch
                %296 = sbr.rel (%p294) target = $region67
              $region64: #{ghost_bottleneck_forward.1} parent=59 // loop_body
                %v300 = vld [vmem:[%s298] sm:$0xff]
                %301 = vst [vmem:[%s299] sm:$0xff] %v300
                %v302 = vld [vmem:[%s298 + $0x8] sm:$0xff]
                %303 = vst [vmem:[%s299 + $0x8] sm:$0xff] %v302
                %v304 = vld [vmem:[%s298 + $0x10] sm:$0xff]
                %305 = vst [vmem:[%s299 + $0x10] sm:$0xff] %v304
                %v306 = vld [vmem:[%s298 + $0x18] sm:$0xff]
                %307 = vst [vmem:[%s299 + $0x18] sm:$0xff] %v306
                %v308 = vld [vmem:[%s298 + $0x40] sm:$0xff]
                %309 = vst [vmem:[%s299 + $0x20] sm:$0xff] %v308
                %v310 = vld [vmem:[%s298 + $0x48] sm:$0xff]
                %311 = vst [vmem:[%s299 + $0x28] sm:$0xff] %v310
                %v312 = vld [vmem:[%s298 + $0x50] sm:$0xff]
                %313 = vst [vmem:[%s299 + $0x30] sm:$0xff] %v312
                %v314 = vld [vmem:[%s298 + $0x58] sm:$0xff]
                %315 = vst [vmem:[%s299 + $0x38] sm:$0xff] %v314
              $region65: #{ghost_bottleneck_forward.1} parent=59 // loop_footer
                %s297 = sadd.s32 1, %s293
              $region66: #{ghost_bottleneck_forward.1} parent=59 // loop_footer_branch
                %292 = sbr.rel target = $region62
              $region67: #{ghost_bottleneck_forward.1} parent=59 // loop_exit
                _
            $region60: #{ghost_bottleneck_forward.1} parent=55 // pred_fallthru
              _
            // Predicated region
            $region68: #{ghost_bottleneck_forward.1} parent=55 // pred_check
              _
            $region69: #{ghost_bottleneck_forward.1} parent=55 // pred_check_branch
              %317 = sbr.rel target = $region71
            $region70: #{ghost_bottleneck_forward.1} parent=55 // pred_region
              _
            $region71: #{ghost_bottleneck_forward.1} parent=55 // pred_fallthru
              _
          $region56: #{ghost_bottleneck_forward.1} parent=51 // pred_fallthru
            _
          %318 = vnop
        $region52: #{ghost_bottleneck_forward.1} parent=47 // pred_fallthru
          _
      $region48: #{ghost_bottleneck_forward.1} parent=5 // pred_fallthru
        _
      %p319 = scmp.le.s32.totalorder 1, %s15
      %p320 = scmp.lt.s32.totalorder %s15, 3
      %p321 = pnand %p319, %p320
      %p322 = pneg %p321
      // Predicated region
      $region72: #{ghost_bottleneck_forward.1} parent=5 // pred_check
        _
      $region73: #{ghost_bottleneck_forward.1} parent=5 // pred_check_branch
        %324 = sbr.rel (%p321) target = $region75
      $region74: #{ghost_bottleneck_forward.1} parent=5 // pred_region
        %s325 = ssub.s32 %s15, 1
        %s326 = sand.u32 %s28, 1
        %s327 = sand.u32 %s28, 1
        %s328 = smul.addr %s327, 64
        %s329 = scalar_lea.vmem [#allocation4], %s328
        // Predicated region
        $region76: #{ghost_bottleneck_forward.1} parent=74 // pred_check
          %p330 = pneg %p41
        $region77: #{ghost_bottleneck_forward.1} parent=74 // pred_check_branch
          %332 = sbr.rel (%p330) target = $region79
        $region78: #{ghost_bottleneck_forward.1} parent=74 // pred_region
          _
        $region79: #{ghost_bottleneck_forward.1} parent=74 // pred_fallthru
          _
        %s333 = sand.u32 %s28, 1
        %s334 = sand.u32 %s28, 1
        %s335 = smul.addr %s334, 64
        %s336 = scalar_lea.vmem [#allocation4], %s335
        %p337 = pneg %p41
        %p338 = pneg %p38
        %p339 = pneg %p62
        %p340 = pneg %p59
        %p341 = pneg %p83
        %p342 = pneg %p80
        %p343 = pneg %p104
        %p344 = pneg %p101
        %p345 = pneg %p125
        %p346 = pneg %p122
        %p347 = pneg %p146
        %p348 = pneg %p143
        %p349 = pneg %p167
        %p350 = pneg %p164
        %p351 = pneg %p188
        %p352 = pneg %p185
        %p353 = pneg %p209
        %p354 = pneg %p206
        %p355 = pneg %p235
        %p356 = pneg %p232
        %s357 = sand.u32 %s222, 1
        %s358 = sand.u32 %s222, 1
        %s359 = smul.addr %s358, 32
        %s360 = scalar_lea.vmem [#allocation5], %s359
        %v361 = vld [vmem:[%s329] sm:$0xff]
        %v362 = vld [vmem:[%s329 + $0x8] sm:$0xff]
        %v363 = vld [vmem:[%s329 + $0x10] sm:$0xff]
        %v364 = vld [vmem:[%s329 + $0x18] sm:$0xff]
        %s365 = scalar_lea.vmem %s329, 32 [#allocation4]
        %v366 = vld [vmem:[%s365] sm:$0xff]
        %v367 = vld [vmem:[%s365 + $0x8] sm:$0xff]
        %v368 = vld [vmem:[%s365 + $0x10] sm:$0xff]
        %v369 = vld [vmem:[%s365 + $0x18] sm:$0xff]
        %v370 = vpack.c.bf16 %v363, %v361
        %v371 = vpack.c.bf16 %v364, %v362
        %v372 = vpack.c.bf16 %v368, %v366
        %v373 = vpack.c.bf16 %v369, %v367
        %v374 = vld [vmem:[%s1] sm:$0xf]
        %v375 = vld [vmem:[%s1 + $0x4] sm:$0xf]
        %v376 = vld [vmem:[%s1 + $0x8] sm:$0xf]
        %v377 = vld [vmem:[%s1 + $0xc] sm:$0xf]
        %v378 = vld [vmem:[%s1 + $0x10] sm:$0xf]
        %v379 = vld [vmem:[%s1 + $0x14] sm:$0xf]
        %v380 = vld [vmem:[%s1 + $0x18] sm:$0xf]
        %v381 = vld [vmem:[%s1 + $0x1c] sm:$0xf]
        %v382 = vld [vmem:[%s1 + $0x20] sm:$0xf]
        %v383 = vld [vmem:[%s1 + $0x24] sm:$0xf]
        %v384 = vld [vmem:[%s1 + $0x28] sm:$0xf]
        %v385 = vld [vmem:[%s1 + $0x2c] sm:$0xf]
        %v386 = vld [vmem:[%s1 + $0x30] sm:$0xf]
        %v387 = vld [vmem:[%s1 + $0x34] sm:$0xf]
        %v388 = vld [vmem:[%s1 + $0x38] sm:$0xf]
        %v389 = vld [vmem:[%s1 + $0x3c] sm:$0xf]
        %v390 = vld [vmem:[%s1 + $0x40] sm:$0xf]
        %v391 = vld [vmem:[%s1 + $0x44] sm:$0xf]
        %v392 = vld [vmem:[%s1 + $0x48] sm:$0xf]
        %v393 = vld [vmem:[%s1 + $0x4c] sm:$0xf]
        %v394 = vld [vmem:[%s1 + $0x50] sm:$0xf]
        %v395 = vld [vmem:[%s1 + $0x54] sm:$0xf]
        %v396 = vld [vmem:[%s1 + $0x58] sm:$0xf]
        %v397 = vld [vmem:[%s1 + $0x5c] sm:$0xf]
        %v398 = vld [vmem:[%s1 + $0x60] sm:$0xf]
        %v399 = vld [vmem:[%s1 + $0x64] sm:$0xf]
        %v400 = vld [vmem:[%s1 + $0x68] sm:$0xf]
        %v401 = vld [vmem:[%s1 + $0x6c] sm:$0xf]
        %v402 = vld [vmem:[%s1 + $0x70] sm:$0xf]
        %v403 = vld [vmem:[%s1 + $0x74] sm:$0xf]
        %v404 = vld [vmem:[%s1 + $0x78] sm:$0xf]
        %v405 = vld [vmem:[%s1 + $0x7c] sm:$0xf]
        %v406 = vld [vmem:[%s1 + $0x80] sm:$0xf]
        %v407 = vld [vmem:[%s1 + $0x84] sm:$0xf]
        %v408 = vld [vmem:[%s1 + $0x88] sm:$0xf]
        %v409 = vld [vmem:[%s1 + $0x8c] sm:$0xf]
        %v410 = vld [vmem:[%s1 + $0x90] sm:$0xf]
        %v411 = vld [vmem:[%s1 + $0x94] sm:$0xf]
        %v412 = vld [vmem:[%s1 + $0x98] sm:$0xf]
        %v413 = vld [vmem:[%s1 + $0x9c] sm:$0xf]
        %v414 = vld [vmem:[%s1 + $0xa0] sm:$0xf]
        %v415 = vld [vmem:[%s1 + $0xa4] sm:$0xf]
        %v416 = vld [vmem:[%s1 + $0xa8] sm:$0xf]
        %v417 = vld [vmem:[%s1 + $0xac] sm:$0xf]
        %v418 = vld [vmem:[%s1 + $0xb0] sm:$0xf]
        %v419 = vld [vmem:[%s1 + $0xb4] sm:$0xf]
        %v420 = vld [vmem:[%s1 + $0xb8] sm:$0xf]
        %v421 = vld [vmem:[%s1 + $0xbc] sm:$0xf]
        %v422 = vld [vmem:[%s1 + $0xc0] sm:$0xf]
        %v423 = vld [vmem:[%s1 + $0xc4] sm:$0xf]
        %v424 = vld [vmem:[%s1 + $0xc8] sm:$0xf]
        %v425 = vld [vmem:[%s1 + $0xcc] sm:$0xf]
        %v426 = vld [vmem:[%s1 + $0xd0] sm:$0xf]
        %v427 = vld [vmem:[%s1 + $0xd4] sm:$0xf]
        %v428 = vld [vmem:[%s1 + $0xd8] sm:$0xf]
        %v429 = vld [vmem:[%s1 + $0xdc] sm:$0xf]
        %v430 = vld [vmem:[%s1 + $0xe0] sm:$0xf]
        %v431 = vld [vmem:[%s1 + $0xe4] sm:$0xf]
        %v432 = vld [vmem:[%s1 + $0xe8] sm:$0xf]
        %v433 = vld [vmem:[%s1 + $0xec] sm:$0xf]
        %v434 = vld [vmem:[%s1 + $0xf0] sm:$0xf]
        %v435 = vld [vmem:[%s1 + $0xf4] sm:$0xf]
        %v436 = vld [vmem:[%s1 + $0xf8] sm:$0xf]
        %v437 = vld [vmem:[%s1 + $0xfc] sm:$0xf]
        %v438 = vld [vmem:[%s2] sm:$0x1]
        %v440 = vperm.slane %v438, 0
        %v506 = vunpack.c.l.b16 %v374
        %v507 = vunpack.c.l.b16 %v375
        %v508 = vunpack.c.l.b16 %v376
        %v509 = vunpack.c.l.b16 %v377
        %v510 = vunpack.c.l.b16 %v378
        %v511 = vunpack.c.l.b16 %v379
        %v512 = vunpack.c.l.b16 %v380
        %v513 = vunpack.c.l.b16 %v381
        %v514 = vunpack.c.l.b16 %v382
        %v515 = vunpack.c.l.b16 %v383
        %v516 = vunpack.c.l.b16 %v384
        %v517 = vunpack.c.l.b16 %v385
        %v518 = vunpack.c.l.b16 %v386
        %v519 = vunpack.c.l.b16 %v387
        %v520 = vunpack.c.l.b16 %v388
        %v521 = vunpack.c.l.b16 %v389
        %v522 = vunpack.c.l.b16 %v390
        %v523 = vunpack.c.l.b16 %v391
        %v524 = vunpack.c.l.b16 %v392
        %v525 = vunpack.c.l.b16 %v393
        %v526 = vunpack.c.l.b16 %v394
        %v527 = vunpack.c.l.b16 %v395
        %v528 = vunpack.c.l.b16 %v396
        %v529 = vunpack.c.l.b16 %v397
        %v530 = vunpack.c.l.b16 %v398
        %v531 = vunpack.c.l.b16 %v399
        %v532 = vunpack.c.l.b16 %v400
        %v533 = vunpack.c.l.b16 %v401
        %v534 = vunpack.c.l.b16 %v402
        %v535 = vunpack.c.l.b16 %v403
        %v536 = vunpack.c.l.b16 %v404
        %v537 = vunpack.c.l.b16 %v405
        %v538 = vunpack.c.l.b16 %v406
        %v539 = vunpack.c.l.b16 %v407
        %v540 = vunpack.c.l.b16 %v408
        %v541 = vunpack.c.l.b16 %v409
        %v542 = vunpack.c.l.b16 %v410
        %v543 = vunpack.c.l.b16 %v411
        %v544 = vunpack.c.l.b16 %v412
        %v545 = vunpack.c.l.b16 %v413
        %v546 = vunpack.c.l.b16 %v414
        %v547 = vunpack.c.l.b16 %v415
        %v548 = vunpack.c.l.b16 %v416
        %v549 = vunpack.c.l.b16 %v417
        %v550 = vunpack.c.l.b16 %v418
        %v551 = vunpack.c.l.b16 %v419
        %v552 = vunpack.c.l.b16 %v420
        %v553 = vunpack.c.l.b16 %v421
        %v554 = vunpack.c.l.b16 %v422
        %v555 = vunpack.c.l.b16 %v423
        %v556 = vunpack.c.l.b16 %v424
        %v557 = vunpack.c.l.b16 %v425
        %v558 = vunpack.c.l.b16 %v426
        %v559 = vunpack.c.l.b16 %v427
        %v560 = vunpack.c.l.b16 %v428
        %v561 = vunpack.c.l.b16 %v429
        %v562 = vunpack.c.l.b16 %v430
        %v563 = vunpack.c.l.b16 %v431
        %v564 = vunpack.c.l.b16 %v432
        %v565 = vunpack.c.l.b16 %v433
        %v566 = vunpack.c.l.b16 %v434
        %v567 = vunpack.c.l.b16 %v435
        %v568 = vunpack.c.l.b16 %v436
        %v569 = vunpack.c.l.b16 %v437
        %v570 = vpack.c.b16 %v507, %v506
        %v571 = vpack.c.b16 %v509, %v508
        %v572 = vpack.c.b16 %v511, %v510
        %v573 = vpack.c.b16 %v513, %v512
        %v574 = vpack.c.b16 %v515, %v514
        %v575 = vpack.c.b16 %v517, %v516
        %v576 = vpack.c.b16 %v519, %v518
        %v577 = vpack.c.b16 %v521, %v520
        %v578 = vpack.c.b16 %v523, %v522
        %v579 = vpack.c.b16 %v525, %v524
        %v580 = vpack.c.b16 %v527, %v526
        %v581 = vpack.c.b16 %v529, %v528
        %v582 = vpack.c.b16 %v531, %v530
        %v583 = vpack.c.b16 %v533, %v532
        %v584 = vpack.c.b16 %v535, %v534
        %v585 = vpack.c.b16 %v537, %v536
        %v586 = vpack.c.b16 %v539, %v538
        %v587 = vpack.c.b16 %v541, %v540
        %v588 = vpack.c.b16 %v543, %v542
        %v589 = vpack.c.b16 %v545, %v544
        %v590 = vpack.c.b16 %v547, %v546
        %v591 = vpack.c.b16 %v549, %v548
        %v592 = vpack.c.b16 %v551, %v550
        %v593 = vpack.c.b16 %v553, %v552
        %v594 = vpack.c.b16 %v555, %v554
        %v595 = vpack.c.b16 %v557, %v556
        %v596 = vpack.c.b16 %v559, %v558
        %v597 = vpack.c.b16 %v561, %v560
        %v598 = vpack.c.b16 %v563, %v562
        %v599 = vpack.c.b16 %v565, %v564
        %v600 = vpack.c.b16 %v567, %v566
        %v601 = vpack.c.b16 %v569, %v568
        %634 = vmatpush.bf16.msra.mxu0 %v577
        %635 = vmatpush.bf16.msra.mxu0 %v576
        %636 = vmatpush.bf16.msra.mxu0 %v575
        %637 = vmatpush.bf16.msra.mxu0 %v574
        %638 = vmatpush.bf16.msra.mxu0 %v573
        %639 = vmatpush.bf16.msra.mxu0 %v572
        %640 = vmatpush.bf16.msra.mxu0 %v571
        %641 = vmatpush.bf16.msra.mxu0 %v570
        %642 = vmatmul.bf16.gmra.mxu0 %v370
        %v643 = vpop.f32.mrf.mxu0
        %v644 = vadd.f32 %v440, %v643
        %v645 = vpop.f32.mrf.mxu0
        %v646 = vadd.f32 %v440, %v645
        %647 = vdwg.mxu0
        %648 = vmatpush.bf16.msra.mxu0 %v585
        %649 = vmatpush.bf16.msra.mxu0 %v584
        %650 = vmatpush.bf16.msra.mxu0 %v583
        %651 = vmatpush.bf16.msra.mxu0 %v582
        %652 = vmatpush.bf16.msra.mxu0 %v581
        %653 = vmatpush.bf16.msra.mxu0 %v580
        %654 = vmatpush.bf16.msra.mxu0 %v579
        %655 = vmatpush.bf16.msra.mxu0 %v578
        %656 = vmatmul.bf16.gmra.mxu0 %v371
        %v657 = vpop.f32.mrf.mxu0
        %v658 = vadd.f32 %v644, %v657
        %v659 = vpop.f32.mrf.mxu0
        %v660 = vadd.f32 %v646, %v659
        %661 = vdwg.mxu0
        %662 = vmatpush.bf16.msra.mxu0 %v593
        %663 = vmatpush.bf16.msra.mxu0 %v592
        %664 = vmatpush.bf16.msra.mxu0 %v591
        %665 = vmatpush.bf16.msra.mxu0 %v590
        %666 = vmatpush.bf16.msra.mxu0 %v589
        %667 = vmatpush.bf16.msra.mxu0 %v588
        %668 = vmatpush.bf16.msra.mxu0 %v587
        %669 = vmatpush.bf16.msra.mxu0 %v586
        %670 = vmatmul.bf16.gmra.mxu0 %v372
        %v671 = vpop.f32.mrf.mxu0
        %v672 = vadd.f32 %v658, %v671
        %v673 = vpop.f32.mrf.mxu0
        %v674 = vadd.f32 %v660, %v673
        %675 = vdwg.mxu0
        %676 = vmatpush.bf16.msra.mxu0 %v601
        %677 = vmatpush.bf16.msra.mxu0 %v600
        %678 = vmatpush.bf16.msra.mxu0 %v599
        %679 = vmatpush.bf16.msra.mxu0 %v598
        %680 = vmatpush.bf16.msra.mxu0 %v597
        %681 = vmatpush.bf16.msra.mxu0 %v596
        %682 = vmatpush.bf16.msra.mxu0 %v595
        %683 = vmatpush.bf16.msra.mxu0 %v594
        %684 = vmatmul.bf16.gmra.mxu0 %v373
        %v685 = vpop.f32.mrf.mxu0
        %v686 = vadd.f32 %v672, %v685
        %v687 = vpop.f32.mrf.mxu0
        %v688 = vadd.f32 %v674, %v687
        %689 = vdwg.mxu0
        %v690 = vxor.u32 %v686, 2147483648
        %v691 = vxor.u32 %v688, 2147483648
        %v692 = vmul.f32 %v690, 1.442695
        %v693 = vpow.pop %v692
        %v694 = vmul.f32 %v691, 1.442695
        %v695 = vpow.pop %v694
        %v696 = vadd.f32 %v693, 1.0
        %v697 = vadd.f32 %v695, 1.0
        %v698 = vrcp.pop %v696
        %v699 = vmul.f32 %v696, %v698
        %v700 = vsub.f32 1.0, %v699
        %v701 = vmul.f32 %v698, %v700
        %v702 = vadd.f32 %v698, %v701
        %vm703 = vweird.f32 %v696
        %vm704 = vweird.f32 %v698
        %vm705 = vmor %vm703, %vm704
        %v706 = vsel %vm705, %v698, %v702
        %v707 = vand.u32 2147483647, %v696
        %vm708 = vcmp.eq.f32.partialorder %v707, 8.507059e+37
        %v709 = vand.u32 %v696, 2147483648
        %v710 = vor.u32 1.1754944e-38, %v709
        %v711 = vsel %vm708, %v710, %v706
        %v712 = vmul.f32 1.0, %v711
        %v713 = vrcp.pop %v697
        %v714 = vmul.f32 %v697, %v713
        %v715 = vsub.f32 1.0, %v714
        %v716 = vmul.f32 %v713, %v715
        %v717 = vadd.f32 %v713, %v716
        %vm718 = vweird.f32 %v697
        %vm719 = vweird.f32 %v713
        %vm720 = vmor %vm718, %vm719
        %v721 = vsel %vm720, %v713, %v717
        %v722 = vand.u32 2147483647, %v697
        %vm723 = vcmp.eq.f32.partialorder %v722, 8.507059e+37
        %v724 = vand.u32 %v697, 2147483648
        %v725 = vor.u32 1.1754944e-38, %v724
        %v726 = vsel %vm723, %v725, %v721
        %v727 = vmul.f32 1.0, %v726
        %v728 = vmul.f32 %v686, %v712
        %v729 = vmul.f32 %v688, %v727
        %732 = vrot.lane.b32.xlu0 %v728, 16
        %v733 = vpop.permute.xlu0 %732
        %734 = vrot.lane.b32.xlu0 %v729, 16
        %v735 = vpop.permute.xlu0 %734
        %vm738 = vcmask 130048
        %v739 = vsel %vm738, 0.0, %v733
        %v740 = vsel %vm738, 0.0, %v735
        %v741 = vsel %vm738, %v733, 0.0
        %v742 = vsel %vm738, %v735, 0.0
        %vm747 = vcmask 1041408
        %v748 = vrot.slane %v739, 6
        %v749 = vrot.slane %v741, 6
        %v750 = vrot.slane %v740, 6
        %v751 = vsel %vm747, %v748, %v750
        %v752 = vrot.slane %v742, 6
        %v753 = vsel %vm747, %v749, %v752
        %760 = vst [vmem:[#allocation2] sm:$0xfc] %v748
        %vm761 = vcmask 261122
        %762 = vst.msk [vmem:[#allocation2 + $0x8] sm:$0xfc] %vm761, %v749
        %763 = vst [vmem:[#allocation2 + $0x10] sm:$0xff] %v751
        %vm764 = vcmask 261120
        %765 = vst.msk [vmem:[#allocation2 + $0x18] sm:$0xff] %vm764, %v753
        %766 = vst [vmem:[#allocation2 + $0x20] sm:$0x3] %v750
        %vm767 = vcmask 254976
        %768 = vst.msk [vmem:[#allocation2 + $0x28] sm:$0x3] %vm767, %v752
        %769 = vst [vmem:[#allocation2] sm:$0x3] 0.0
        %770 = vst.msk [vmem:[#allocation2 + $0x8] sm:$0x3] %vm767, 0.0
        %771 = vst [vmem:[#allocation2 + $0x20] sm:$0xc] 0.0
        %vm772 = vcmask 257026
        %773 = vst.msk [vmem:[#allocation2 + $0x28] sm:$0xc] %vm772, 0.0
        %v774 = vld [vmem:[#allocation2] sm:$0xff]
        %v775 = vld [vmem:[#allocation2 + $0x8] sm:$0xff]
        %v776 = vld [vmem:[#allocation2 + $0x10] sm:$0xff]
        %v777 = vld [vmem:[#allocation2 + $0x18] sm:$0xff]
        %v778 = vld [vmem:[%s3] sm:$0x1]
        %v779 = vperm.slane %v778, 0
        %v780 = vmul.f32 %v774, %v779
        %v781 = vmul.f32 %v776, %v779
        %v782 = vadd.f32 %v780, 0.0
        %v783 = vadd.f32 %v781, 0.0
        %v784 = vld [vmem:[%s3 + $0x1] sm:$0x1]
        %v785 = vperm.slane %v784, 0
        %787 = vrot.lane.b32.xlu0 %v785, 8
        %v788 = vpop.permute.xlu0 %787
        %v790 = vmul.f32 %v774, %v788
        %v791 = vmul.f32 %v775, %v788
        %v792 = vmul.f32 %v776, %v788
        %v793 = vmul.f32 %v777, %v788
        %798 = vrot.lane.b32.xlu0 %v790, 120
        %v799 = vpop.permute.xlu0 %798
        %800 = vrot.lane.b32.xlu0 %v791, 120
        %v801 = vpop.permute.xlu0 %800
        %802 = vrot.lane.b32.xlu0 %v792, 120
        %v803 = vpop.permute.xlu0 %802
        %804 = vrot.lane.b32.xlu0 %v793, 120
        %v805 = vpop.permute.xlu0 %804
        %vm806 = vcmask 982016
        %v807 = vsel %vm806, %v799, %v801
        %v808 = vsel %vm806, %v803, %v805
        %v811 = vadd.f32 %v782, %v807
        %v812 = vadd.f32 %v783, %v808
        %v813 = vld [vmem:[%s3 + $0x2] sm:$0x1]
        %v814 = vperm.slane %v813, 0
        %816 = vrot.lane.b32.xlu0 %v814, 16
        %v817 = vpop.permute.xlu0 %816
        %v819 = vmul.f32 %v774, %v817
        %v820 = vmul.f32 %v775, %v817
        %v821 = vmul.f32 %v776, %v817
        %v822 = vmul.f32 %v777, %v817
        %827 = vrot.lane.b32.xlu0 %v819, 112
        %v828 = vpop.permute.xlu0 %827
        %829 = vrot.lane.b32.xlu0 %v820, 112
        %v830 = vpop.permute.xlu0 %829
        %831 = vrot.lane.b32.xlu0 %v821, 112
        %v832 = vpop.permute.xlu0 %831
        %833 = vrot.lane.b32.xlu0 %v822, 112
        %v834 = vpop.permute.xlu0 %833
        %vm835 = vcmask 916480
        %v836 = vsel %vm835, %v828, %v830
        %v837 = vsel %vm835, %v832, %v834
        %v840 = vadd.f32 %v811, %v836
        %v841 = vadd.f32 %v812, %v837
        %v842 = vld [vmem:[%s3 + $0x3] sm:$0x1]
        %v843 = vperm.slane %v842, 0
        %845 = vrot.lane.b32.xlu0 %v843, 24
        %v846 = vpop.permute.xlu0 %845
        %v848 = vmul.f32 %v774, %v846
        %v849 = vmul.f32 %v775, %v846
        %v850 = vmul.f32 %v776, %v846
        %v851 = vmul.f32 %v777, %v846
        %856 = vrot.lane.b32.xlu0 %v848, 104
        %v857 = vpop.permute.xlu0 %856
        %858 = vrot.lane.b32.xlu0 %v849, 104
        %v859 = vpop.permute.xlu0 %858
        %860 = vrot.lane.b32.xlu0 %v850, 104
        %v861 = vpop.permute.xlu0 %860
        %862 = vrot.lane.b32.xlu0 %v851, 104
        %v863 = vpop.permute.xlu0 %862
        %vm864 = vcmask 850944
        %v865 = vsel %vm864, %v857, %v859
        %v866 = vsel %vm864, %v861, %v863
        %v869 = vadd.f32 %v840, %v865
        %v870 = vadd.f32 %v841, %v866
        %v871 = vld [vmem:[%s3 + $0x4] sm:$0x1]
        %v872 = vperm.slane %v871, 0
        %874 = vrot.lane.b32.xlu0 %v872, 32
        %v875 = vpop.permute.xlu0 %874
        %v877 = vmul.f32 %v774, %v875
        %v878 = vmul.f32 %v775, %v875
        %v879 = vmul.f32 %v776, %v875
        %v880 = vmul.f32 %v777, %v875
        %885 = vrot.lane.b32.xlu0 %v877, 96
        %v886 = vpop.permute.xlu0 %885
        %887 = vrot.lane.b32.xlu0 %v878, 96
        %v888 = vpop.permute.xlu0 %887
        %889 = vrot.lane.b32.xlu0 %v879, 96
        %v890 = vpop.permute.xlu0 %889
        %891 = vrot.lane.b32.xlu0 %v880, 96
        %v892 = vpop.permute.xlu0 %891
        %vm893 = vcmask 785408
        %v894 = vsel %vm893, %v886, %v888
        %v895 = vsel %vm893, %v890, %v892
        %v898 = vadd.f32 %v869, %v894
        %v899 = vadd.f32 %v870, %v895
        %v900 = vld [vmem:[#allocation2] sm:$0xfe]
        %v901 = vld [vmem:[#allocation2 + $0x8] sm:$0xfe]
        %v902 = vld [vmem:[#allocation2 + $0x20] sm:$0x1]
        %v903 = vld [vmem:[#allocation2 + $0x28] sm:$0x1]
        %v904 = vld [vmem:[%s3 + $0x5] sm:$0x1]
        %v905 = vperm.slane %v904, 0
        %v906 = vmul.f32 %v900, %v905
        %v907 = vmul.f32 %v776, %v905
        %v908 = vmul.f32 %v902, %v905
        %vm912 = vcmask 1046528
        %v913 = vrot.slane %v906, 1
        %v914 = vrot.slane %v907, 1
        %v915 = vsel %vm912, %v913, %v914
        %v916 = vrot.slane %v908, 1
        %v917 = vsel %vm912, %v914, %v916
        %v920 = vadd.f32 %v898, %v915
        %v921 = vadd.f32 %v899, %v917
        %v922 = vld [vmem:[%s3 + $0x6] sm:$0x1]
        %v923 = vperm.slane %v922, 0
        %925 = vrot.lane.b32.xlu0 %v923, 8
        %v926 = vpop.permute.xlu0 %925
        %v928 = vmul.f32 %v900, %v926
        %v929 = vmul.f32 %v901, %v926
        %v930 = vmul.f32 %v776, %v926
        %v931 = vmul.f32 %v777, %v926
        %v932 = vmul.f32 %v902, %v926
        %v933 = vmul.f32 %v903, %v926
        %v940 = vrot.slane %v928, 1
        %v941 = vrot.slane %v930, 1
        %v942 = vsel %vm912, %v940, %v941
        %v943 = vrot.slane %v929, 1
        %v944 = vrot.slane %v931, 1
        %v945 = vsel %vm912, %v943, %v944
        %v946 = vrot.slane %v932, 1
        %v947 = vsel %vm912, %v941, %v946
        %v948 = vrot.slane %v933, 1
        %v949 = vsel %vm912, %v944, %v948
        %950 = vrot.lane.b32.xlu0 %v942, 120
        %v951 = vpop.permute.xlu0 %950
        %952 = vrot.lane.b32.xlu0 %v945, 120
        %v953 = vpop.permute.xlu0 %952
        %954 = vrot.lane.b32.xlu0 %v947, 120
        %v955 = vpop.permute.xlu0 %954
        %956 = vrot.lane.b32.xlu0 %v949, 120
        %v957 = vpop.permute.xlu0 %956
        %v958 = vsel %vm806, %v951, %v953
        %v959 = vsel %vm806, %v955, %v957
        %v962 = vadd.f32 %v920, %v958
        %v963 = vadd.f32 %v921, %v959
        %v964 = vld [vmem:[%s3 + $0x7] sm:$0x1]
        %v965 = vperm.slane %v964, 0
        %967 = vrot.lane.b32.xlu0 %v965, 16
        %v968 = vpop.permute.xlu0 %967
        %v970 = vmul.f32 %v900, %v968
        %v971 = vmul.f32 %v901, %v968
        %v972 = vmul.f32 %v776, %v968
        %v973 = vmul.f32 %v777, %v968
        %v974 = vmul.f32 %v902, %v968
        %v975 = vmul.f32 %v903, %v968
        %v982 = vrot.slane %v970, 1
        %v983 = vrot.slane %v972, 1
        %v984 = vsel %vm912, %v982, %v983
        %v985 = vrot.slane %v971, 1
        %v986 = vrot.slane %v973, 1
        %v987 = vsel %vm912, %v985, %v986
        %v988 = vrot.slane %v974, 1
        %v989 = vsel %vm912, %v983, %v988
        %v990 = vrot.slane %v975, 1
        %v991 = vsel %vm912, %v986, %v990
        %992 = vrot.lane.b32.xlu0 %v984, 112
        %v993 = vpop.permute.xlu0 %992
        %994 = vrot.lane.b32.xlu0 %v987, 112
        %v995 = vpop.permute.xlu0 %994
        %996 = vrot.lane.b32.xlu0 %v989, 112
        %v997 = vpop.permute.xlu0 %996
        %998 = vrot.lane.b32.xlu0 %v991, 112
        %v999 = vpop.permute.xlu0 %998
        %v1000 = vsel %vm835, %v993, %v995
        %v1001 = vsel %vm835, %v997, %v999
        %v1004 = vadd.f32 %v962, %v1000
        %v1005 = vadd.f32 %v963, %v1001
        %v1006 = vld [vmem:[%s3 + $0x8] sm:$0x1]
        %v1007 = vperm.slane %v1006, 0
        %1009 = vrot.lane.b32.xlu0 %v1007, 24
        %v1010 = vpop.permute.xlu0 %1009
        %v1012 = vmul.f32 %v900, %v1010
        %v1013 = vmul.f32 %v901, %v1010
        %v1014 = vmul.f32 %v776, %v1010
        %v1015 = vmul.f32 %v777, %v1010
        %v1016 = vmul.f32 %v902, %v1010
        %v1017 = vmul.f32 %v903, %v1010
        %v1024 = vrot.slane %v1012, 1
        %v1025 = vrot.slane %v1014, 1
        %v1026 = vsel %vm912, %v1024, %v1025
        %v1027 = vrot.slane %v1013, 1
        %v1028 = vrot.slane %v1015, 1
        %v1029 = vsel %vm912, %v1027, %v1028
        %v1030 = vrot.slane %v1016, 1
        %v1031 = vsel %vm912, %v1025, %v1030
        %v1032 = vrot.slane %v1017, 1
        %v1033 = vsel %vm912, %v1028, %v1032
        %1034 = vrot.lane.b32.xlu0 %v1026, 104
        %v1035 = vpop.permute.xlu0 %1034
        %1036 = vrot.lane.b32.xlu0 %v1029, 104
        %v1037 = vpop.permute.xlu0 %1036
        %1038 = vrot.lane.b32.xlu0 %v1031, 104
        %v1039 = vpop.permute.xlu0 %1038
        %1040 = vrot.lane.b32.xlu0 %v1033, 104
        %v1041 = vpop.permute.xlu0 %1040
        %v1042 = vsel %vm864, %v1035, %v1037
        %v1043 = vsel %vm864, %v1039, %v1041
        %v1046 = vadd.f32 %v1004, %v1042
        %v1047 = vadd.f32 %v1005, %v1043
        %v1048 = vld [vmem:[%s3 + $0x9] sm:$0x1]
        %v1049 = vperm.slane %v1048, 0
        %1051 = vrot.lane.b32.xlu0 %v1049, 32
        %v1052 = vpop.permute.xlu0 %1051
        %v1054 = vmul.f32 %v900, %v1052
        %v1055 = vmul.f32 %v901, %v1052
        %v1056 = vmul.f32 %v776, %v1052
        %v1057 = vmul.f32 %v777, %v1052
        %v1058 = vmul.f32 %v902, %v1052
        %v1059 = vmul.f32 %v903, %v1052
        %v1066 = vrot.slane %v1054, 1
        %v1067 = vrot.slane %v1056, 1
        %v1068 = vsel %vm912, %v1066, %v1067
        %v1069 = vrot.slane %v1055, 1
        %v1070 = vrot.slane %v1057, 1
        %v1071 = vsel %vm912, %v1069, %v1070
        %v1072 = vrot.slane %v1058, 1
        %v1073 = vsel %vm912, %v1067, %v1072
        %v1074 = vrot.slane %v1059, 1
        %v1075 = vsel %vm912, %v1070, %v1074
        %1076 = vrot.lane.b32.xlu0 %v1068, 96
        %v1077 = vpop.permute.xlu0 %1076
        %1078 = vrot.lane.b32.xlu0 %v1071, 96
        %v1079 = vpop.permute.xlu0 %1078
        %1080 = vrot.lane.b32.xlu0 %v1073, 96
        %v1081 = vpop.permute.xlu0 %1080
        %1082 = vrot.lane.b32.xlu0 %v1075, 96
        %v1083 = vpop.permute.xlu0 %1082
        %v1084 = vsel %vm893, %v1077, %v1079
        %v1085 = vsel %vm893, %v1081, %v1083
        %v1088 = vadd.f32 %v1046, %v1084
        %v1089 = vadd.f32 %v1047, %v1085
        %v1090 = vld [vmem:[#allocation2] sm:$0xfc]
        %v1091 = vld [vmem:[#allocation2 + $0x8] sm:$0xfc]
        %v1092 = vld [vmem:[#allocation2 + $0x20] sm:$0x3]
        %v1093 = vld [vmem:[#allocation2 + $0x28] sm:$0x3]
        %v1094 = vld [vmem:[%s3 + $0xa] sm:$0x1]
        %v1095 = vperm.slane %v1094, 0
        %v1096 = vmul.f32 %v1090, %v1095
        %v1097 = vmul.f32 %v776, %v1095
        %v1098 = vmul.f32 %v1092, %v1095
        %vm1102 = vcmask 1045504
        %v1103 = vrot.slane %v1096, 2
        %v1104 = vrot.slane %v1097, 2
        %v1105 = vsel %vm1102, %v1103, %v1104
        %v1106 = vrot.slane %v1098, 2
        %v1107 = vsel %vm1102, %v1104, %v1106
        %v1110 = vadd.f32 %v1088, %v1105
        %v1111 = vadd.f32 %v1089, %v1107
        %v1112 = vld [vmem:[%s3 + $0xb] sm:$0x1]
        %v1113 = vperm.slane %v1112, 0
        %1115 = vrot.lane.b32.xlu0 %v1113, 8
        %v1116 = vpop.permute.xlu0 %1115
        %v1118 = vmul.f32 %v1090, %v1116
        %v1119 = vmul.f32 %v1091, %v1116
        %v1120 = vmul.f32 %v776, %v1116
        %v1121 = vmul.f32 %v777, %v1116
        %v1122 = vmul.f32 %v1092, %v1116
        %v1123 = vmul.f32 %v1093, %v1116
        %v1130 = vrot.slane %v1118, 2
        %v1131 = vrot.slane %v1120, 2
        %v1132 = vsel %vm1102, %v1130, %v1131
        %v1133 = vrot.slane %v1119, 2
        %v1134 = vrot.slane %v1121, 2
        %v1135 = vsel %vm1102, %v1133, %v1134
        %v1136 = vrot.slane %v1122, 2
        %v1137 = vsel %vm1102, %v1131, %v1136
        %v1138 = vrot.slane %v1123, 2
        %v1139 = vsel %vm1102, %v1134, %v1138
        %1140 = vrot.lane.b32.xlu0 %v1132, 120
        %v1141 = vpop.permute.xlu0 %1140
        %1142 = vrot.lane.b32.xlu0 %v1135, 120
        %v1143 = vpop.permute.xlu0 %1142
        %1144 = vrot.lane.b32.xlu0 %v1137, 120
        %v1145 = vpop.permute.xlu0 %1144
        %1146 = vrot.lane.b32.xlu0 %v1139, 120
        %v1147 = vpop.permute.xlu0 %1146
        %v1148 = vsel %vm806, %v1141, %v1143
        %v1149 = vsel %vm806, %v1145, %v1147
        %v1152 = vadd.f32 %v1110, %v1148
        %v1153 = vadd.f32 %v1111, %v1149
        %v1154 = vld [vmem:[%s3 + $0xc] sm:$0x1]
        %v1155 = vperm.slane %v1154, 0
        %1157 = vrot.lane.b32.xlu0 %v1155, 16
        %v1158 = vpop.permute.xlu0 %1157
        %v1160 = vmul.f32 %v1090, %v1158
        %v1161 = vmul.f32 %v1091, %v1158
        %v1162 = vmul.f32 %v776, %v1158
        %v1163 = vmul.f32 %v777, %v1158
        %v1164 = vmul.f32 %v1092, %v1158
        %v1165 = vmul.f32 %v1093, %v1158
        %v1172 = vrot.slane %v1160, 2
        %v1173 = vrot.slane %v1162, 2
        %v1174 = vsel %vm1102, %v1172, %v1173
        %v1175 = vrot.slane %v1161, 2
        %v1176 = vrot.slane %v1163, 2
        %v1177 = vsel %vm1102, %v1175, %v1176
        %v1178 = vrot.slane %v1164, 2
        %v1179 = vsel %vm1102, %v1173, %v1178
        %v1180 = vrot.slane %v1165, 2
        %v1181 = vsel %vm1102, %v1176, %v1180
        %1182 = vrot.lane.b32.xlu0 %v1174, 112
        %v1183 = vpop.permute.xlu0 %1182
        %1184 = vrot.lane.b32.xlu0 %v1177, 112
        %v1185 = vpop.permute.xlu0 %1184
        %1186 = vrot.lane.b32.xlu0 %v1179, 112
        %v1187 = vpop.permute.xlu0 %1186
        %1188 = vrot.lane.b32.xlu0 %v1181, 112
        %v1189 = vpop.permute.xlu0 %1188
        %v1190 = vsel %vm835, %v1183, %v1185
        %v1191 = vsel %vm835, %v1187, %v1189
        %v1194 = vadd.f32 %v1152, %v1190
        %v1195 = vadd.f32 %v1153, %v1191
        %v1196 = vld [vmem:[%s3 + $0xd] sm:$0x1]
        %v1197 = vperm.slane %v1196, 0
        %1199 = vrot.lane.b32.xlu0 %v1197, 24
        %v1200 = vpop.permute.xlu0 %1199
        %v1202 = vmul.f32 %v1090, %v1200
        %v1203 = vmul.f32 %v1091, %v1200
        %v1204 = vmul.f32 %v776, %v1200
        %v1205 = vmul.f32 %v777, %v1200
        %v1206 = vmul.f32 %v1092, %v1200
        %v1207 = vmul.f32 %v1093, %v1200
        %v1214 = vrot.slane %v1202, 2
        %v1215 = vrot.slane %v1204, 2
        %v1216 = vsel %vm1102, %v1214, %v1215
        %v1217 = vrot.slane %v1203, 2
        %v1218 = vrot.slane %v1205, 2
        %v1219 = vsel %vm1102, %v1217, %v1218
        %v1220 = vrot.slane %v1206, 2
        %v1221 = vsel %vm1102, %v1215, %v1220
        %v1222 = vrot.slane %v1207, 2
        %v1223 = vsel %vm1102, %v1218, %v1222
        %1224 = vrot.lane.b32.xlu0 %v1216, 104
        %v1225 = vpop.permute.xlu0 %1224
        %1226 = vrot.lane.b32.xlu0 %v1219, 104
        %v1227 = vpop.permute.xlu0 %1226
        %1228 = vrot.lane.b32.xlu0 %v1221, 104
        %v1229 = vpop.permute.xlu0 %1228
        %1230 = vrot.lane.b32.xlu0 %v1223, 104
        %v1231 = vpop.permute.xlu0 %1230
        %v1232 = vsel %vm864, %v1225, %v1227
        %v1233 = vsel %vm864, %v1229, %v1231
        %v1236 = vadd.f32 %v1194, %v1232
        %v1237 = vadd.f32 %v1195, %v1233
        %v1238 = vld [vmem:[%s3 + $0xe] sm:$0x1]
        %v1239 = vperm.slane %v1238, 0
        %1241 = vrot.lane.b32.xlu0 %v1239, 32
        %v1242 = vpop.permute.xlu0 %1241
        %v1244 = vmul.f32 %v1090, %v1242
        %v1245 = vmul.f32 %v1091, %v1242
        %v1246 = vmul.f32 %v776, %v1242
        %v1247 = vmul.f32 %v777, %v1242
        %v1248 = vmul.f32 %v1092, %v1242
        %v1249 = vmul.f32 %v1093, %v1242
        %v1256 = vrot.slane %v1244, 2
        %v1257 = vrot.slane %v1246, 2
        %v1258 = vsel %vm1102, %v1256, %v1257
        %v1259 = vrot.slane %v1245, 2
        %v1260 = vrot.slane %v1247, 2
        %v1261 = vsel %vm1102, %v1259, %v1260
        %v1262 = vrot.slane %v1248, 2
        %v1263 = vsel %vm1102, %v1257, %v1262
        %v1264 = vrot.slane %v1249, 2
        %v1265 = vsel %vm1102, %v1260, %v1264
        %1266 = vrot.lane.b32.xlu0 %v1258, 96
        %v1267 = vpop.permute.xlu0 %1266
        %1268 = vrot.lane.b32.xlu0 %v1261, 96
        %v1269 = vpop.permute.xlu0 %1268
        %1270 = vrot.lane.b32.xlu0 %v1263, 96
        %v1271 = vpop.permute.xlu0 %1270
        %1272 = vrot.lane.b32.xlu0 %v1265, 96
        %v1273 = vpop.permute.xlu0 %1272
        %v1274 = vsel %vm893, %v1267, %v1269
        %v1275 = vsel %vm893, %v1271, %v1273
        %v1278 = vadd.f32 %v1236, %v1274
        %v1279 = vadd.f32 %v1237, %v1275
        %v1280 = vld [vmem:[#allocation2] sm:$0xf8]
        %v1281 = vld [vmem:[#allocation2 + $0x8] sm:$0xf8]
        %v1282 = vld [vmem:[#allocation2 + $0x20] sm:$0x7]
        %v1283 = vld [vmem:[#allocation2 + $0x28] sm:$0x7]
        %v1284 = vld [vmem:[%s3 + $0xf] sm:$0x1]
        %v1285 = vperm.slane %v1284, 0
        %v1286 = vmul.f32 %v1280, %v1285
        %v1287 = vmul.f32 %v776, %v1285
        %v1288 = vmul.f32 %v1282, %v1285
        %vm1292 = vcmask 1044480
        %v1293 = vrot.slane %v1286, 3
        %v1294 = vrot.slane %v1287, 3
        %v1295 = vsel %vm1292, %v1293, %v1294
        %v1296 = vrot.slane %v1288, 3
        %v1297 = vsel %vm1292, %v1294, %v1296
        %v1300 = vadd.f32 %v1278, %v1295
        %v1301 = vadd.f32 %v1279, %v1297
        %v1302 = vld [vmem:[%s3 + $0x10] sm:$0x1]
        %v1303 = vperm.slane %v1302, 0
        %1305 = vrot.lane.b32.xlu0 %v1303, 8
        %v1306 = vpop.permute.xlu0 %1305
        %v1308 = vmul.f32 %v1280, %v1306
        %v1309 = vmul.f32 %v1281, %v1306
        %v1310 = vmul.f32 %v776, %v1306
        %v1311 = vmul.f32 %v777, %v1306
        %v1312 = vmul.f32 %v1282, %v1306
        %v1313 = vmul.f32 %v1283, %v1306
        %v1320 = vrot.slane %v1308, 3
        %v1321 = vrot.slane %v1310, 3
        %v1322 = vsel %vm1292, %v1320, %v1321
        %v1323 = vrot.slane %v1309, 3
        %v1324 = vrot.slane %v1311, 3
        %v1325 = vsel %vm1292, %v1323, %v1324
        %v1326 = vrot.slane %v1312, 3
        %v1327 = vsel %vm1292, %v1321, %v1326
        %v1328 = vrot.slane %v1313, 3
        %v1329 = vsel %vm1292, %v1324, %v1328
        %1330 = vrot.lane.b32.xlu0 %v1322, 120
        %v1331 = vpop.permute.xlu0 %1330
        %1332 = vrot.lane.b32.xlu0 %v1325, 120
        %v1333 = vpop.permute.xlu0 %1332
        %1334 = vrot.lane.b32.xlu0 %v1327, 120
        %v1335 = vpop.permute.xlu0 %1334
        %1336 = vrot.lane.b32.xlu0 %v1329, 120
        %v1337 = vpop.permute.xlu0 %1336
        %v1338 = vsel %vm806, %v1331, %v1333
        %v1339 = vsel %vm806, %v1335, %v1337
        %v1342 = vadd.f32 %v1300, %v1338
        %v1343 = vadd.f32 %v1301, %v1339
        %v1344 = vld [vmem:[%s3 + $0x11] sm:$0x1]
        %v1345 = vperm.slane %v1344, 0
        %1347 = vrot.lane.b32.xlu0 %v1345, 16
        %v1348 = vpop.permute.xlu0 %1347
        %v1350 = vmul.f32 %v1280, %v1348
        %v1351 = vmul.f32 %v1281, %v1348
        %v1352 = vmul.f32 %v776, %v1348
        %v1353 = vmul.f32 %v777, %v1348
        %v1354 = vmul.f32 %v1282, %v1348
        %v1355 = vmul.f32 %v1283, %v1348
        %v1362 = vrot.slane %v1350, 3
        %v1363 = vrot.slane %v1352, 3
        %v1364 = vsel %vm1292, %v1362, %v1363
        %v1365 = vrot.slane %v1351, 3
        %v1366 = vrot.slane %v1353, 3
        %v1367 = vsel %vm1292, %v1365, %v1366
        %v1368 = vrot.slane %v1354, 3
        %v1369 = vsel %vm1292, %v1363, %v1368
        %v1370 = vrot.slane %v1355, 3
        %v1371 = vsel %vm1292, %v1366, %v1370
        %1372 = vrot.lane.b32.xlu0 %v1364, 112
        %v1373 = vpop.permute.xlu0 %1372
        %1374 = vrot.lane.b32.xlu0 %v1367, 112
        %v1375 = vpop.permute.xlu0 %1374
        %1376 = vrot.lane.b32.xlu0 %v1369, 112
        %v1377 = vpop.permute.xlu0 %1376
        %1378 = vrot.lane.b32.xlu0 %v1371, 112
        %v1379 = vpop.permute.xlu0 %1378
        %v1380 = vsel %vm835, %v1373, %v1375
        %v1381 = vsel %vm835, %v1377, %v1379
        %v1384 = vadd.f32 %v1342, %v1380
        %v1385 = vadd.f32 %v1343, %v1381
        %v1386 = vld [vmem:[%s3 + $0x12] sm:$0x1]
        %v1387 = vperm.slane %v1386, 0
        %1389 = vrot.lane.b32.xlu0 %v1387, 24
        %v1390 = vpop.permute.xlu0 %1389
        %v1392 = vmul.f32 %v1280, %v1390
        %v1393 = vmul.f32 %v1281, %v1390
        %v1394 = vmul.f32 %v776, %v1390
        %v1395 = vmul.f32 %v777, %v1390
        %v1396 = vmul.f32 %v1282, %v1390
        %v1397 = vmul.f32 %v1283, %v1390
        %v1404 = vrot.slane %v1392, 3
        %v1405 = vrot.slane %v1394, 3
        %v1406 = vsel %vm1292, %v1404, %v1405
        %v1407 = vrot.slane %v1393, 3
        %v1408 = vrot.slane %v1395, 3
        %v1409 = vsel %vm1292, %v1407, %v1408
        %v1410 = vrot.slane %v1396, 3
        %v1411 = vsel %vm1292, %v1405, %v1410
        %v1412 = vrot.slane %v1397, 3
        %v1413 = vsel %vm1292, %v1408, %v1412
        %1414 = vrot.lane.b32.xlu0 %v1406, 104
        %v1415 = vpop.permute.xlu0 %1414
        %1416 = vrot.lane.b32.xlu0 %v1409, 104
        %v1417 = vpop.permute.xlu0 %1416
        %1418 = vrot.lane.b32.xlu0 %v1411, 104
        %v1419 = vpop.permute.xlu0 %1418
        %1420 = vrot.lane.b32.xlu0 %v1413, 104
        %v1421 = vpop.permute.xlu0 %1420
        %v1422 = vsel %vm864, %v1415, %v1417
        %v1423 = vsel %vm864, %v1419, %v1421
        %v1426 = vadd.f32 %v1384, %v1422
        %v1427 = vadd.f32 %v1385, %v1423
        %v1428 = vld [vmem:[%s3 + $0x13] sm:$0x1]
        %v1429 = vperm.slane %v1428, 0
        %1431 = vrot.lane.b32.xlu0 %v1429, 32
        %v1432 = vpop.permute.xlu0 %1431
        %v1434 = vmul.f32 %v1280, %v1432
        %v1435 = vmul.f32 %v1281, %v1432
        %v1436 = vmul.f32 %v776, %v1432
        %v1437 = vmul.f32 %v777, %v1432
        %v1438 = vmul.f32 %v1282, %v1432
        %v1439 = vmul.f32 %v1283, %v1432
        %v1446 = vrot.slane %v1434, 3
        %v1447 = vrot.slane %v1436, 3
        %v1448 = vsel %vm1292, %v1446, %v1447
        %v1449 = vrot.slane %v1435, 3
        %v1450 = vrot.slane %v1437, 3
        %v1451 = vsel %vm1292, %v1449, %v1450
        %v1452 = vrot.slane %v1438, 3
        %v1453 = vsel %vm1292, %v1447, %v1452
        %v1454 = vrot.slane %v1439, 3
        %v1455 = vsel %vm1292, %v1450, %v1454
        %1456 = vrot.lane.b32.xlu0 %v1448, 96
        %v1457 = vpop.permute.xlu0 %1456
        %1458 = vrot.lane.b32.xlu0 %v1451, 96
        %v1459 = vpop.permute.xlu0 %1458
        %1460 = vrot.lane.b32.xlu0 %v1453, 96
        %v1461 = vpop.permute.xlu0 %1460
        %1462 = vrot.lane.b32.xlu0 %v1455, 96
        %v1463 = vpop.permute.xlu0 %1462
        %v1464 = vsel %vm893, %v1457, %v1459
        %v1465 = vsel %vm893, %v1461, %v1463
        %v1468 = vadd.f32 %v1426, %v1464
        %v1469 = vadd.f32 %v1427, %v1465
        %v1470 = vld [vmem:[#allocation2] sm:$0xf0]
        %v1471 = vld [vmem:[#allocation2 + $0x8] sm:$0xf0]
        %v1472 = vld [vmem:[#allocation2 + $0x20] sm:$0xf]
        %v1473 = vld [vmem:[#allocation2 + $0x28] sm:$0xf]
        %v1474 = vld [vmem:[%s3 + $0x14] sm:$0x1]
        %v1475 = vperm.slane %v1474, 0
        %v1476 = vmul.f32 %v1470, %v1475
        %v1477 = vmul.f32 %v776, %v1475
        %v1478 = vmul.f32 %v1472, %v1475
        %vm1482 = vcmask 1043456
        %v1483 = vrot.slane %v1476, 4
        %v1484 = vrot.slane %v1477, 4
        %v1485 = vsel %vm1482, %v1483, %v1484
        %v1486 = vrot.slane %v1478, 4
        %v1487 = vsel %vm1482, %v1484, %v1486
        %v1490 = vadd.f32 %v1468, %v1485
        %v1491 = vadd.f32 %v1469, %v1487
        %v1492 = vld [vmem:[%s3 + $0x15] sm:$0x1]
        %v1493 = vperm.slane %v1492, 0
        %1495 = vrot.lane.b32.xlu0 %v1493, 8
        %v1496 = vpop.permute.xlu0 %1495
        %v1498 = vmul.f32 %v1470, %v1496
        %v1499 = vmul.f32 %v1471, %v1496
        %v1500 = vmul.f32 %v776, %v1496
        %v1501 = vmul.f32 %v777, %v1496
        %v1502 = vmul.f32 %v1472, %v1496
        %v1503 = vmul.f32 %v1473, %v1496
        %v1510 = vrot.slane %v1498, 4
        %v1511 = vrot.slane %v1500, 4
        %v1512 = vsel %vm1482, %v1510, %v1511
        %v1513 = vrot.slane %v1499, 4
        %v1514 = vrot.slane %v1501, 4
        %v1515 = vsel %vm1482, %v1513, %v1514
        %v1516 = vrot.slane %v1502, 4
        %v1517 = vsel %vm1482, %v1511, %v1516
        %v1518 = vrot.slane %v1503, 4
        %v1519 = vsel %vm1482, %v1514, %v1518
        %1520 = vrot.lane.b32.xlu0 %v1512, 120
        %v1521 = vpop.permute.xlu0 %1520
        %1522 = vrot.lane.b32.xlu0 %v1515, 120
        %v1523 = vpop.permute.xlu0 %1522
        %1524 = vrot.lane.b32.xlu0 %v1517, 120
        %v1525 = vpop.permute.xlu0 %1524
        %1526 = vrot.lane.b32.xlu0 %v1519, 120
        %v1527 = vpop.permute.xlu0 %1526
        %v1528 = vsel %vm806, %v1521, %v1523
        %v1529 = vsel %vm806, %v1525, %v1527
        %v1532 = vadd.f32 %v1490, %v1528
        %v1533 = vadd.f32 %v1491, %v1529
        %v1534 = vld [vmem:[%s3 + $0x16] sm:$0x1]
        %v1535 = vperm.slane %v1534, 0
        %1537 = vrot.lane.b32.xlu0 %v1535, 16
        %v1538 = vpop.permute.xlu0 %1537
        %v1540 = vmul.f32 %v1470, %v1538
        %v1541 = vmul.f32 %v1471, %v1538
        %v1542 = vmul.f32 %v776, %v1538
        %v1543 = vmul.f32 %v777, %v1538
        %v1544 = vmul.f32 %v1472, %v1538
        %v1545 = vmul.f32 %v1473, %v1538
        %v1552 = vrot.slane %v1540, 4
        %v1553 = vrot.slane %v1542, 4
        %v1554 = vsel %vm1482, %v1552, %v1553
        %v1555 = vrot.slane %v1541, 4
        %v1556 = vrot.slane %v1543, 4
        %v1557 = vsel %vm1482, %v1555, %v1556
        %v1558 = vrot.slane %v1544, 4
        %v1559 = vsel %vm1482, %v1553, %v1558
        %v1560 = vrot.slane %v1545, 4
        %v1561 = vsel %vm1482, %v1556, %v1560
        %1562 = vrot.lane.b32.xlu0 %v1554, 112
        %v1563 = vpop.permute.xlu0 %1562
        %1564 = vrot.lane.b32.xlu0 %v1557, 112
        %v1565 = vpop.permute.xlu0 %1564
        %1566 = vrot.lane.b32.xlu0 %v1559, 112
        %v1567 = vpop.permute.xlu0 %1566
        %1568 = vrot.lane.b32.xlu0 %v1561, 112
        %v1569 = vpop.permute.xlu0 %1568
        %v1570 = vsel %vm835, %v1563, %v1565
        %v1571 = vsel %vm835, %v1567, %v1569
        %v1574 = vadd.f32 %v1532, %v1570
        %v1575 = vadd.f32 %v1533, %v1571
        %v1576 = vld [vmem:[%s3 + $0x17] sm:$0x1]
        %v1577 = vperm.slane %v1576, 0
        %1579 = vrot.lane.b32.xlu0 %v1577, 24
        %v1580 = vpop.permute.xlu0 %1579
        %v1582 = vmul.f32 %v1470, %v1580
        %v1583 = vmul.f32 %v1471, %v1580
        %v1584 = vmul.f32 %v776, %v1580
        %v1585 = vmul.f32 %v777, %v1580
        %v1586 = vmul.f32 %v1472, %v1580
        %v1587 = vmul.f32 %v1473, %v1580
        %v1594 = vrot.slane %v1582, 4
        %v1595 = vrot.slane %v1584, 4
        %v1596 = vsel %vm1482, %v1594, %v1595
        %v1597 = vrot.slane %v1583, 4
        %v1598 = vrot.slane %v1585, 4
        %v1599 = vsel %vm1482, %v1597, %v1598
        %v1600 = vrot.slane %v1586, 4
        %v1601 = vsel %vm1482, %v1595, %v1600
        %v1602 = vrot.slane %v1587, 4
        %v1603 = vsel %vm1482, %v1598, %v1602
        %1604 = vrot.lane.b32.xlu0 %v1596, 104
        %v1605 = vpop.permute.xlu0 %1604
        %1606 = vrot.lane.b32.xlu0 %v1599, 104
        %v1607 = vpop.permute.xlu0 %1606
        %1608 = vrot.lane.b32.xlu0 %v1601, 104
        %v1609 = vpop.permute.xlu0 %1608
        %1610 = vrot.lane.b32.xlu0 %v1603, 104
        %v1611 = vpop.permute.xlu0 %1610
        %v1612 = vsel %vm864, %v1605, %v1607
        %v1613 = vsel %vm864, %v1609, %v1611
        %v1616 = vadd.f32 %v1574, %v1612
        %v1617 = vadd.f32 %v1575, %v1613
        %v1618 = vld [vmem:[%s3 + $0x18] sm:$0x1]
        %v1619 = vperm.slane %v1618, 0
        %1621 = vrot.lane.b32.xlu0 %v1619, 32
        %v1622 = vpop.permute.xlu0 %1621
        %v1624 = vmul.f32 %v1470, %v1622
        %v1625 = vmul.f32 %v1471, %v1622
        %v1626 = vmul.f32 %v776, %v1622
        %v1627 = vmul.f32 %v777, %v1622
        %v1628 = vmul.f32 %v1472, %v1622
        %v1629 = vmul.f32 %v1473, %v1622
        %v1636 = vrot.slane %v1624, 4
        %v1637 = vrot.slane %v1626, 4
        %v1638 = vsel %vm1482, %v1636, %v1637
        %v1639 = vrot.slane %v1625, 4
        %v1640 = vrot.slane %v1627, 4
        %v1641 = vsel %vm1482, %v1639, %v1640
        %v1642 = vrot.slane %v1628, 4
        %v1643 = vsel %vm1482, %v1637, %v1642
        %v1644 = vrot.slane %v1629, 4
        %v1645 = vsel %vm1482, %v1640, %v1644
        %1646 = vrot.lane.b32.xlu0 %v1638, 96
        %v1647 = vpop.permute.xlu0 %1646
        %1648 = vrot.lane.b32.xlu0 %v1641, 96
        %v1649 = vpop.permute.xlu0 %1648
        %1650 = vrot.lane.b32.xlu0 %v1643, 96
        %v1651 = vpop.permute.xlu0 %1650
        %1652 = vrot.lane.b32.xlu0 %v1645, 96
        %v1653 = vpop.permute.xlu0 %1652
        %v1654 = vsel %vm893, %v1647, %v1649
        %v1655 = vsel %vm893, %v1651, %v1653
        %v1658 = vadd.f32 %v1616, %v1654
        %v1659 = vadd.f32 %v1617, %v1655
        %v1660 = vld [vmem:[%s4] sm:$0x1]
        %v1662 = vperm.slane %v1660, 0
        %v1664 = vadd.f32 %v1658, %v1662
        %v1665 = vadd.f32 %v1659, %v1662
        %v1666 = vxor.u32 %v1664, 2147483648
        %v1667 = vxor.u32 %v1665, 2147483648
        %v1668 = vmul.f32 %v1666, 1.442695
        %v1669 = vpow.pop %v1668
        %v1670 = vmul.f32 %v1667, 1.442695
        %v1671 = vpow.pop %v1670
        %v1672 = vadd.f32 %v1669, 1.0
        %v1673 = vadd.f32 %v1671, 1.0
        %v1674 = vrcp.pop %v1672
        %v1675 = vmul.f32 %v1672, %v1674
        %v1676 = vsub.f32 1.0, %v1675
        %v1677 = vmul.f32 %v1674, %v1676
        %v1678 = vadd.f32 %v1674, %v1677
        %vm1679 = vweird.f32 %v1672
        %vm1680 = vweird.f32 %v1674
        %vm1681 = vmor %vm1679, %vm1680
        %v1682 = vsel %vm1681, %v1674, %v1678
        %v1683 = vand.u32 2147483647, %v1672
        %vm1684 = vcmp.eq.f32.partialorder %v1683, 8.507059e+37
        %v1685 = vand.u32 %v1672, 2147483648
        %v1686 = vor.u32 1.1754944e-38, %v1685
        %v1687 = vsel %vm1684, %v1686, %v1682
        %v1688 = vmul.f32 1.0, %v1687
        %v1689 = vrcp.pop %v1673
        %v1690 = vmul.f32 %v1673, %v1689
        %v1691 = vsub.f32 1.0, %v1690
        %v1692 = vmul.f32 %v1689, %v1691
        %v1693 = vadd.f32 %v1689, %v1692
        %vm1694 = vweird.f32 %v1673
        %vm1695 = vweird.f32 %v1689
        %vm1696 = vmor %vm1694, %vm1695
        %v1697 = vsel %vm1696, %v1689, %v1693
        %v1698 = vand.u32 2147483647, %v1673
        %vm1699 = vcmp.eq.f32.partialorder %v1698, 8.507059e+37
        %v1700 = vand.u32 %v1673, 2147483648
        %v1701 = vor.u32 1.1754944e-38, %v1700
        %v1702 = vsel %vm1699, %v1701, %v1697
        %v1703 = vmul.f32 1.0, %v1702
        %v1704 = vmul.f32 %v1664, %v1688
        %v1705 = vmul.f32 %v1665, %v1703
        %v1706 = vpack.c.bf16 %v728, %v728
        %v1707 = vpack.c.bf16 %v729, %v729
        %v1708 = vpack.c.bf16 %v1704, %v1704
        %v1709 = vpack.c.bf16 %v1705, %v1705
        %v1712 = vunpack.c.l.b16 %v1706
        %v1713 = vunpack.c.l.b16 %v1707
        %v1714 = vpack.c.b16 %v1713, %v1712
        %v1718 = vunpack.c.l.b16 %v1708
        %v1719 = vunpack.c.l.b16 %v1709
        %v1720 = vpack.c.b16 %v1719, %v1718
        %v1722 = vld [vmem:[%s5] sm:$0xff]
        %v1723 = vld [vmem:[%s5 + $0x8] sm:$0xff]
        %v1724 = vld [vmem:[%s5 + $0x10] sm:$0xff]
        %v1725 = vld [vmem:[%s5 + $0x18] sm:$0xff]
        %v1726 = vld [vmem:[%s5 + $0x20] sm:$0xff]
        %v1727 = vld [vmem:[%s5 + $0x28] sm:$0xff]
        %v1728 = vld [vmem:[%s5 + $0x30] sm:$0xff]
        %v1729 = vld [vmem:[%s5 + $0x38] sm:$0xff]
        %v1730 = vld [vmem:[%s5 + $0x40] sm:$0xff]
        %v1731 = vld [vmem:[%s5 + $0x48] sm:$0xff]
        %v1732 = vld [vmem:[%s5 + $0x50] sm:$0xff]
        %v1733 = vld [vmem:[%s5 + $0x58] sm:$0xff]
        %v1734 = vld [vmem:[%s5 + $0x60] sm:$0xff]
        %v1735 = vld [vmem:[%s5 + $0x68] sm:$0xff]
        %v1736 = vld [vmem:[%s5 + $0x70] sm:$0xff]
        %v1737 = vld [vmem:[%s5 + $0x78] sm:$0xff]
        %v1738 = vld [vmem:[%s5 + $0x80] sm:$0xff]
        %v1739 = vld [vmem:[%s5 + $0x88] sm:$0xff]
        %v1740 = vld [vmem:[%s5 + $0x90] sm:$0xff]
        %v1741 = vld [vmem:[%s5 + $0x98] sm:$0xff]
        %v1742 = vld [vmem:[%s5 + $0xa0] sm:$0xff]
        %v1743 = vld [vmem:[%s5 + $0xa8] sm:$0xff]
        %v1744 = vld [vmem:[%s5 + $0xb0] sm:$0xff]
        %v1745 = vld [vmem:[%s5 + $0xb8] sm:$0xff]
        %v1746 = vld [vmem:[%s5 + $0xc0] sm:$0xff]
        %v1747 = vld [vmem:[%s5 + $0xc8] sm:$0xff]
        %v1748 = vld [vmem:[%s5 + $0xd0] sm:$0xff]
        %v1749 = vld [vmem:[%s5 + $0xd8] sm:$0xff]
        %v1750 = vld [vmem:[%s5 + $0xe0] sm:$0xff]
        %v1751 = vld [vmem:[%s5 + $0xe8] sm:$0xff]
        %v1752 = vld [vmem:[%s5 + $0xf0] sm:$0xff]
        %v1753 = vld [vmem:[%s5 + $0xf8] sm:$0xff]
        %v1754 = vld [vmem:[%s6] sm:$0x3]
        %v1756 = vperm.slane %v1754, 0
        %v1757 = vperm.slane %v1754, 1
        %v1792 = vunpack.c.l.b16 %v1722
        %v1793 = vunpack.c.h.b16 %v1722
        %v1794 = vunpack.c.l.b16 %v1723
        %v1795 = vunpack.c.h.b16 %v1723
        %v1796 = vunpack.c.l.b16 %v1724
        %v1797 = vunpack.c.h.b16 %v1724
        %v1798 = vunpack.c.l.b16 %v1725
        %v1799 = vunpack.c.h.b16 %v1725
        %v1800 = vunpack.c.l.b16 %v1726
        %v1801 = vunpack.c.h.b16 %v1726
        %v1802 = vunpack.c.l.b16 %v1727
        %v1803 = vunpack.c.h.b16 %v1727
        %v1804 = vunpack.c.l.b16 %v1728
        %v1805 = vunpack.c.h.b16 %v1728
        %v1806 = vunpack.c.l.b16 %v1729
        %v1807 = vunpack.c.h.b16 %v1729
        %v1808 = vunpack.c.l.b16 %v1730
        %v1809 = vunpack.c.h.b16 %v1730
        %v1810 = vunpack.c.l.b16 %v1731
        %v1811 = vunpack.c.h.b16 %v1731
        %v1812 = vunpack.c.l.b16 %v1732
        %v1813 = vunpack.c.h.b16 %v1732
        %v1814 = vunpack.c.l.b16 %v1733
        %v1815 = vunpack.c.h.b16 %v1733
        %v1816 = vunpack.c.l.b16 %v1734
        %v1817 = vunpack.c.h.b16 %v1734
        %v1818 = vunpack.c.l.b16 %v1735
        %v1819 = vunpack.c.h.b16 %v1735
        %v1820 = vunpack.c.l.b16 %v1736
        %v1821 = vunpack.c.h.b16 %v1736
        %v1822 = vunpack.c.l.b16 %v1737
        %v1823 = vunpack.c.h.b16 %v1737
        %v1824 = vunpack.c.l.b16 %v1738
        %v1825 = vunpack.c.h.b16 %v1738
        %v1826 = vunpack.c.l.b16 %v1739
        %v1827 = vunpack.c.h.b16 %v1739
        %v1828 = vunpack.c.l.b16 %v1740
        %v1829 = vunpack.c.h.b16 %v1740
        %v1830 = vunpack.c.l.b16 %v1741
        %v1831 = vunpack.c.h.b16 %v1741
        %v1832 = vunpack.c.l.b16 %v1742
        %v1833 = vunpack.c.h.b16 %v1742
        %v1834 = vunpack.c.l.b16 %v1743
        %v1835 = vunpack.c.h.b16 %v1743
        %v1836 = vunpack.c.l.b16 %v1744
        %v1837 = vunpack.c.h.b16 %v1744
        %v1838 = vunpack.c.l.b16 %v1745
        %v1839 = vunpack.c.h.b16 %v1745
        %v1840 = vunpack.c.l.b16 %v1746
        %v1841 = vunpack.c.h.b16 %v1746
        %v1842 = vunpack.c.l.b16 %v1747
        %v1843 = vunpack.c.h.b16 %v1747
        %v1844 = vunpack.c.l.b16 %v1748
        %v1845 = vunpack.c.h.b16 %v1748
        %v1846 = vunpack.c.l.b16 %v1749
        %v1847 = vunpack.c.h.b16 %v1749
        %v1848 = vunpack.c.l.b16 %v1750
        %v1849 = vunpack.c.h.b16 %v1750
        %v1850 = vunpack.c.l.b16 %v1751
        %v1851 = vunpack.c.h.b16 %v1751
        %v1852 = vunpack.c.l.b16 %v1752
        %v1853 = vunpack.c.h.b16 %v1752
        %v1854 = vunpack.c.l.b16 %v1753
        %v1855 = vunpack.c.h.b16 %v1753
        %v1856 = vpack.c.b16 %v1794, %v1792
        %v1857 = vpack.c.b16 %v1795, %v1793
        %v1858 = vpack.c.b16 %v1798, %v1796
        %v1859 = vpack.c.b16 %v1799, %v1797
        %v1860 = vpack.c.b16 %v1802, %v1800
        %v1861 = vpack.c.b16 %v1803, %v1801
        %v1862 = vpack.c.b16 %v1806, %v1804
        %v1863 = vpack.c.b16 %v1807, %v1805
        %v1864 = vpack.c.b16 %v1810, %v1808
        %v1865 = vpack.c.b16 %v1811, %v1809
        %v1866 = vpack.c.b16 %v1814, %v1812
        %v1867 = vpack.c.b16 %v1815, %v1813
        %v1868 = vpack.c.b16 %v1818, %v1816
        %v1869 = vpack.c.b16 %v1819, %v1817
        %v1870 = vpack.c.b16 %v1822, %v1820
        %v1871 = vpack.c.b16 %v1823, %v1821
        %v1872 = vpack.c.b16 %v1826, %v1824
        %v1873 = vpack.c.b16 %v1827, %v1825
        %v1874 = vpack.c.b16 %v1830, %v1828
        %v1875 = vpack.c.b16 %v1831, %v1829
        %v1876 = vpack.c.b16 %v1834, %v1832
        %v1877 = vpack.c.b16 %v1835, %v1833
        %v1878 = vpack.c.b16 %v1838, %v1836
        %v1879 = vpack.c.b16 %v1839, %v1837
        %v1880 = vpack.c.b16 %v1842, %v1840
        %v1881 = vpack.c.b16 %v1843, %v1841
        %v1882 = vpack.c.b16 %v1846, %v1844
        %v1883 = vpack.c.b16 %v1847, %v1845
        %v1884 = vpack.c.b16 %v1850, %v1848
        %v1885 = vpack.c.b16 %v1851, %v1849
        %v1886 = vpack.c.b16 %v1854, %v1852
        %v1887 = vpack.c.b16 %v1855, %v1853
        %1920 = vmatpush.bf16.msra.mxu0 %v1870
        %1921 = vmatpush.bf16.msra.mxu0 %v1868
        %1922 = vmatpush.bf16.msra.mxu0 %v1866
        %1923 = vmatpush.bf16.msra.mxu0 %v1864
        %1924 = vmatpush.bf16.msra.mxu0 %v1862
        %1925 = vmatpush.bf16.msra.mxu0 %v1860
        %1926 = vmatpush.bf16.msra.mxu0 %v1858
        %1927 = vmatpush.bf16.msra.mxu0 %v1856
        %1928 = vmatmul.bf16.gmra.mxu0 %v1714
        %v1929 = vpop.f32.mrf.mxu0
        %v1930 = vadd.f32 %v1756, %v1929
        %v1931 = vpop.f32.mrf.mxu0
        %v1932 = vadd.f32 %v1756, %v1931
        %1933 = vdwg.mxu0
        %1934 = vmatpush.bf16.msra.mxu0 %v1886
        %1935 = vmatpush.bf16.msra.mxu0 %v1884
        %1936 = vmatpush.bf16.msra.mxu0 %v1882
        %1937 = vmatpush.bf16.msra.mxu0 %v1880
        %1938 = vmatpush.bf16.msra.mxu0 %v1878
        %1939 = vmatpush.bf16.msra.mxu0 %v1876
        %1940 = vmatpush.bf16.msra.mxu0 %v1874
        %1941 = vmatpush.bf16.msra.mxu0 %v1872
        %1942 = vmatmul.bf16.gmra.mxu0 %v1720
        %v1943 = vpop.f32.mrf.mxu0
        %v1944 = vadd.f32 %v1930, %v1943
        %v1945 = vpop.f32.mrf.mxu0
        %v1946 = vadd.f32 %v1932, %v1945
        %1947 = vdwg.mxu0
        %1948 = vmatpush.bf16.msra.mxu0 %v1871
        %1949 = vmatpush.bf16.msra.mxu0 %v1869
        %1950 = vmatpush.bf16.msra.mxu0 %v1867
        %1951 = vmatpush.bf16.msra.mxu0 %v1865
        %1952 = vmatpush.bf16.msra.mxu0 %v1863
        %1953 = vmatpush.bf16.msra.mxu0 %v1861
        %1954 = vmatpush.bf16.msra.mxu0 %v1859
        %1955 = vmatpush.bf16.msra.mxu0 %v1857
        %1956 = vmatmul.bf16.gmra.mxu0 %v1714
        %v1957 = vpop.f32.mrf.mxu0
        %v1958 = vadd.f32 %v1757, %v1957
        %v1959 = vpop.f32.mrf.mxu0
        %v1960 = vadd.f32 %v1757, %v1959
        %1961 = vdwg.mxu0
        %1962 = vmatpush.bf16.msra.mxu0 %v1887
        %1963 = vmatpush.bf16.msra.mxu0 %v1885
        %1964 = vmatpush.bf16.msra.mxu0 %v1883
        %1965 = vmatpush.bf16.msra.mxu0 %v1881
        %1966 = vmatpush.bf16.msra.mxu0 %v1879
        %1967 = vmatpush.bf16.msra.mxu0 %v1877
        %1968 = vmatpush.bf16.msra.mxu0 %v1875
        %1969 = vmatpush.bf16.msra.mxu0 %v1873
        %1970 = vmatmul.bf16.gmra.mxu0 %v1720
        %v1971 = vpop.f32.mrf.mxu0
        %v1972 = vadd.f32 %v1958, %v1971
        %v1973 = vpop.f32.mrf.mxu0
        %v1974 = vadd.f32 %v1960, %v1973
        %1975 = vdwg.mxu0
        %1980 = vrot.lane.b32.xlu0 %v1944, 32
        %v1981 = vpop.permute.xlu0 %1980
        %1982 = vrot.lane.b32.xlu0 %v1972, 32
        %v1983 = vpop.permute.xlu0 %1982
        %1984 = vrot.lane.b32.xlu0 %v1946, 32
        %v1985 = vpop.permute.xlu0 %1984
        %1986 = vrot.lane.b32.xlu0 %v1974, 32
        %v1987 = vpop.permute.xlu0 %1986
        %v1988 = vsel %vm764, %v1981, %v1983
        %v1989 = vsel %vm764, %v1985, %v1987
        %v1994 = vsel %vm764, 0.0, %v1981
        %v1995 = vsel %vm764, 0.0, %v1985
        %v1996 = vsel %vm764, %v1983, 0.0
        %v1997 = vsel %vm764, %v1987, 0.0
        %v2002 = vrot.slane %v1994, 6
        %v2003 = vrot.slane %v1988, 6
        %v2004 = vrot.slane %v1996, 6
        %v2005 = vrot.slane %v1995, 6
        %v2006 = vsel %vm747, %v2002, %v2005
        %v2007 = vrot.slane %v1989, 6
        %v2008 = vsel %vm747, %v2003, %v2007
        %v2009 = vrot.slane %v1997, 6
        %v2010 = vsel %vm747, %v2004, %v2009
        %2020 = vst [vmem:[#allocation3] sm:$0xfc] %v2002
        %2021 = vst [vmem:[#allocation3 + $0x8] sm:$0xfc] %v2003
        %vm2022 = vcmask 523266
        %2023 = vst.msk [vmem:[#allocation3 + $0x10] sm:$0xfc] %vm2022, %v2004
        %2024 = vst [vmem:[#allocation3 + $0x18] sm:$0xff] %v2006
        %2025 = vst [vmem:[#allocation3 + $0x20] sm:$0xff] %v2008
        %vm2026 = vcmask 523264
        %2027 = vst.msk [vmem:[#allocation3 + $0x28] sm:$0xff] %vm2026, %v2010
        %2028 = vst [vmem:[#allocation3 + $0x30] sm:$0x3] %v2005
        %2029 = vst [vmem:[#allocation3 + $0x38] sm:$0x3] %v2007
        %vm2030 = vcmask 517120
        %2031 = vst.msk [vmem:[#allocation3 + $0x40] sm:$0x3] %vm2030, %v2009
        %2032 = vst [vmem:[#allocation3] sm:$0x3] 0.0
        %2033 = vst [vmem:[#allocation3 + $0x8] sm:$0x3] 0.0
        %2034 = vst.msk [vmem:[#allocation3 + $0x10] sm:$0x3] %vm2030, 0.0
        %2035 = vst [vmem:[#allocation3 + $0x30] sm:$0xc] 0.0
        %2036 = vst [vmem:[#allocation3 + $0x38] sm:$0xc] 0.0
        %vm2037 = vcmask 519170
        %2038 = vst.msk [vmem:[#allocation3 + $0x40] sm:$0xc] %vm2037, 0.0
        %v2039 = vld [vmem:[#allocation3] sm:$0xff]
        %v2040 = vld [vmem:[#allocation3 + $0x8] sm:$0xff]
        %v2041 = vld [vmem:[#allocation3 + $0x10] sm:$0xff]
        %v2042 = vld [vmem:[#allocation3 + $0x18] sm:$0xff]
        %v2043 = vld [vmem:[#allocation3 + $0x20] sm:$0xff]
        %v2044 = vld [vmem:[#allocation3 + $0x28] sm:$0xff]
        %v2045 = vld [vmem:[%s7] ss:$8 sm:$0x3]
        %v2047 = vperm.slane %v2045, 0
        %v2048 = vperm.slane %v2045, 1
        %v2051 = vmul.f32 %v2039, %v2047
        %v2052 = vmul.f32 %v2040, %v2048
        %v2053 = vmul.f32 %v2042, %v2047
        %v2054 = vmul.f32 %v2043, %v2048
        %v2055 = vadd.f32 %v2051, 0.0
        %v2056 = vadd.f32 %v2052, 0.0
        %v2057 = vadd.f32 %v2053, 0.0
        %v2058 = vadd.f32 %v2054, 0.0
        %s2059 = scalar_lea.vmem %s7, 1
        %v2060 = vld [vmem:[%s2059] ss:$8 sm:$0x3]
        %v2062 = vperm.slane %v2060, 0
        %v2063 = vperm.slane %v2060, 1
        %2064 = vrot.lane.b32.xlu0 %v2062, 16
        %v2065 = vpop.permute.xlu0 %2064
        %2066 = vrot.lane.b32.xlu0 %v2063, 16
        %v2067 = vpop.permute.xlu0 %2066
        %v2068 = vsel %vm738, %v2065, %v2067
        %v2072 = vmul.f32 %v2039, %v2065
        %v2073 = vmul.f32 %v2040, %v2068
        %v2074 = vmul.f32 %v2041, %v2067
        %v2075 = vmul.f32 %v2042, %v2065
        %v2076 = vmul.f32 %v2043, %v2068
        %v2077 = vmul.f32 %v2044, %v2067
        %2084 = vrot.lane.b32.xlu0 %v2072, 112
        %v2085 = vpop.permute.xlu0 %2084
        %2086 = vrot.lane.b32.xlu0 %v2073, 112
        %v2087 = vpop.permute.xlu0 %2086
        %2088 = vrot.lane.b32.xlu0 %v2074, 112
        %v2089 = vpop.permute.xlu0 %2088
        %2090 = vrot.lane.b32.xlu0 %v2075, 112
        %v2091 = vpop.permute.xlu0 %2090
        %2092 = vrot.lane.b32.xlu0 %v2076, 112
        %v2093 = vpop.permute.xlu0 %2092
        %2094 = vrot.lane.b32.xlu0 %v2077, 112
        %v2095 = vpop.permute.xlu0 %2094
        %v2096 = vsel %vm835, %v2085, %v2087
        %v2097 = vsel %vm835, %v2087, %v2089
        %v2098 = vsel %vm835, %v2091, %v2093
        %v2099 = vsel %vm835, %v2093, %v2095
        %v2104 = vadd.f32 %v2055, %v2096
        %v2105 = vadd.f32 %v2056, %v2097
        %v2106 = vadd.f32 %v2057, %v2098
        %v2107 = vadd.f32 %v2058, %v2099
        %s2108 = scalar_lea.vmem %s7, 2
        %v2109 = vld [vmem:[%s2108] ss:$8 sm:$0x3]
        %v2111 = vperm.slane %v2109, 0
        %v2112 = vperm.slane %v2109, 1
        %2113 = vrot.lane.b32.xlu0 %v2111, 32
        %v2114 = vpop.permute.xlu0 %2113
        %2115 = vrot.lane.b32.xlu0 %v2112, 32
        %v2116 = vpop.permute.xlu0 %2115
        %v2117 = vsel %vm764, %v2114, %v2116
        %v2121 = vmul.f32 %v2039, %v2114
        %v2122 = vmul.f32 %v2040, %v2117
        %v2123 = vmul.f32 %v2041, %v2116
        %v2124 = vmul.f32 %v2042, %v2114
        %v2125 = vmul.f32 %v2043, %v2117
        %v2126 = vmul.f32 %v2044, %v2116
        %2133 = vrot.lane.b32.xlu0 %v2121, 96
        %v2134 = vpop.permute.xlu0 %2133
        %2135 = vrot.lane.b32.xlu0 %v2122, 96
        %v2136 = vpop.permute.xlu0 %2135
        %2137 = vrot.lane.b32.xlu0 %v2123, 96
        %v2138 = vpop.permute.xlu0 %2137
        %2139 = vrot.lane.b32.xlu0 %v2124, 96
        %v2140 = vpop.permute.xlu0 %2139
        %2141 = vrot.lane.b32.xlu0 %v2125, 96
        %v2142 = vpop.permute.xlu0 %2141
        %2143 = vrot.lane.b32.xlu0 %v2126, 96
        %v2144 = vpop.permute.xlu0 %2143
        %v2145 = vsel %vm893, %v2134, %v2136
        %v2146 = vsel %vm893, %v2136, %v2138
        %v2147 = vsel %vm893, %v2140, %v2142
        %v2148 = vsel %vm893, %v2142, %v2144
        %v2153 = vadd.f32 %v2104, %v2145
        %v2154 = vadd.f32 %v2105, %v2146
        %v2155 = vadd.f32 %v2106, %v2147
        %v2156 = vadd.f32 %v2107, %v2148
        %s2157 = scalar_lea.vmem %s7, 3
        %v2158 = vld [vmem:[%s2157] ss:$8 sm:$0x3]
        %v2160 = vperm.slane %v2158, 0
        %v2161 = vperm.slane %v2158, 1
        %2162 = vrot.lane.b32.xlu0 %v2160, 48
        %v2163 = vpop.permute.xlu0 %2162
        %2164 = vrot.lane.b32.xlu0 %v2161, 48
        %v2165 = vpop.permute.xlu0 %2164
        %vm2166 = vcmask 392192
        %v2167 = vsel %vm2166, %v2163, %v2165
        %v2171 = vmul.f32 %v2039, %v2163
        %v2172 = vmul.f32 %v2040, %v2167
        %v2173 = vmul.f32 %v2041, %v2165
        %v2174 = vmul.f32 %v2042, %v2163
        %v2175 = vmul.f32 %v2043, %v2167
        %v2176 = vmul.f32 %v2044, %v2165
        %2183 = vrot.lane.b32.xlu0 %v2171, 80
        %v2184 = vpop.permute.xlu0 %2183
        %2185 = vrot.lane.b32.xlu0 %v2172, 80
        %v2186 = vpop.permute.xlu0 %2185
        %2187 = vrot.lane.b32.xlu0 %v2173, 80
        %v2188 = vpop.permute.xlu0 %2187
        %2189 = vrot.lane.b32.xlu0 %v2174, 80
        %v2190 = vpop.permute.xlu0 %2189
        %2191 = vrot.lane.b32.xlu0 %v2175, 80
        %v2192 = vpop.permute.xlu0 %2191
        %2193 = vrot.lane.b32.xlu0 %v2176, 80
        %v2194 = vpop.permute.xlu0 %2193
        %vm2195 = vcmask 654336
        %v2196 = vsel %vm2195, %v2184, %v2186
        %v2197 = vsel %vm2195, %v2186, %v2188
        %v2198 = vsel %vm2195, %v2190, %v2192
        %v2199 = vsel %vm2195, %v2192, %v2194
        %v2204 = vadd.f32 %v2153, %v2196
        %v2205 = vadd.f32 %v2154, %v2197
        %v2206 = vadd.f32 %v2155, %v2198
        %v2207 = vadd.f32 %v2156, %v2199
        %s2208 = scalar_lea.vmem %s7, 4
        %v2209 = vld [vmem:[%s2208] ss:$8 sm:$0x3]
        %v2211 = vperm.slane %v2209, 0
        %v2212 = vperm.slane %v2209, 1
        %2213 = vrot.lane.b32.xlu0 %v2211, 64
        %v2214 = vpop.permute.xlu0 %2213
        %2215 = vrot.lane.b32.xlu0 %v2212, 64
        %v2216 = vpop.permute.xlu0 %2215
        %v2217 = vsel %vm2026, %v2214, %v2216
        %v2221 = vmul.f32 %v2039, %v2214
        %v2222 = vmul.f32 %v2040, %v2217
        %v2223 = vmul.f32 %v2041, %v2216
        %v2224 = vmul.f32 %v2042, %v2214
        %v2225 = vmul.f32 %v2043, %v2217
        %v2226 = vmul.f32 %v2044, %v2216
        %2233 = vrot.lane.b32.xlu0 %v2221, 64
        %v2234 = vpop.permute.xlu0 %2233
        %2235 = vrot.lane.b32.xlu0 %v2222, 64
        %v2236 = vpop.permute.xlu0 %2235
        %2237 = vrot.lane.b32.xlu0 %v2223, 64
        %v2238 = vpop.permute.xlu0 %2237
        %2239 = vrot.lane.b32.xlu0 %v2224, 64
        %v2240 = vpop.permute.xlu0 %2239
        %2241 = vrot.lane.b32.xlu0 %v2225, 64
        %v2242 = vpop.permute.xlu0 %2241
        %2243 = vrot.lane.b32.xlu0 %v2226, 64
        %v2244 = vpop.permute.xlu0 %2243
        %v2245 = vsel %vm2026, %v2234, %v2236
        %v2246 = vsel %vm2026, %v2236, %v2238
        %v2247 = vsel %vm2026, %v2240, %v2242
        %v2248 = vsel %vm2026, %v2242, %v2244
        %v2253 = vadd.f32 %v2204, %v2245
        %v2254 = vadd.f32 %v2205, %v2246
        %v2255 = vadd.f32 %v2206, %v2247
        %v2256 = vadd.f32 %v2207, %v2248
        %v2257 = vld [vmem:[#allocation3] sm:$0xfe]
        %v2258 = vld [vmem:[#allocation3 + $0x8] sm:$0xfe]
        %v2259 = vld [vmem:[#allocation3 + $0x10] sm:$0xfe]
        %v2260 = vld [vmem:[#allocation3 + $0x30] sm:$0x1]
        %v2261 = vld [vmem:[#allocation3 + $0x38] sm:$0x1]
        %v2262 = vld [vmem:[#allocation3 + $0x40] sm:$0x1]
        %s2263 = scalar_lea.vmem %s7, 5
        %v2264 = vld [vmem:[%s2263] ss:$8 sm:$0x3]
        %v2266 = vperm.slane %v2264, 0
        %v2267 = vperm.slane %v2264, 1
        %v2270 = vmul.f32 %v2257, %v2266
        %v2271 = vmul.f32 %v2258, %v2267
        %v2272 = vmul.f32 %v2042, %v2266
        %v2273 = vmul.f32 %v2043, %v2267
        %v2274 = vmul.f32 %v2260, %v2266
        %v2275 = vmul.f32 %v2261, %v2267
        %v2282 = vrot.slane %v2270, 1
        %v2283 = vrot.slane %v2272, 1
        %v2284 = vsel %vm912, %v2282, %v2283
        %v2285 = vrot.slane %v2271, 1
        %v2286 = vrot.slane %v2273, 1
        %v2287 = vsel %vm912, %v2285, %v2286
        %v2288 = vrot.slane %v2274, 1
        %v2289 = vsel %vm912, %v2283, %v2288
        %v2290 = vrot.slane %v2275, 1
        %v2291 = vsel %vm912, %v2286, %v2290
        %v2296 = vadd.f32 %v2253, %v2284
        %v2297 = vadd.f32 %v2254, %v2287
        %v2298 = vadd.f32 %v2255, %v2289
        %v2299 = vadd.f32 %v2256, %v2291
        %s2300 = scalar_lea.vmem %s7, 6
        %v2301 = vld [vmem:[%s2300] ss:$8 sm:$0x3]
        %v2303 = vperm.slane %v2301, 0
        %v2304 = vperm.slane %v2301, 1
        %2305 = vrot.lane.b32.xlu0 %v2303, 16
        %v2306 = vpop.permute.xlu0 %2305
        %2307 = vrot.lane.b32.xlu0 %v2304, 16
        %v2308 = vpop.permute.xlu0 %2307
        %v2309 = vsel %vm738, %v2306, %v2308
        %v2313 = vmul.f32 %v2257, %v2306
        %v2314 = vmul.f32 %v2258, %v2309
        %v2315 = vmul.f32 %v2259, %v2308
        %v2316 = vmul.f32 %v2042, %v2306
        %v2317 = vmul.f32 %v2043, %v2309
        %v2318 = vmul.f32 %v2044, %v2308
        %v2319 = vmul.f32 %v2260, %v2306
        %v2320 = vmul.f32 %v2261, %v2309
        %v2321 = vmul.f32 %v2262, %v2308
        %v2331 = vrot.slane %v2313, 1
        %v2332 = vrot.slane %v2316, 1
        %v2333 = vsel %vm912, %v2331, %v2332
        %v2334 = vrot.slane %v2314, 1
        %v2335 = vrot.slane %v2317, 1
        %v2336 = vsel %vm912, %v2334, %v2335
        %v2337 = vrot.slane %v2315, 1
        %v2338 = vrot.slane %v2318, 1
        %v2339 = vsel %vm912, %v2337, %v2338
        %v2340 = vrot.slane %v2319, 1
        %v2341 = vsel %vm912, %v2332, %v2340
        %v2342 = vrot.slane %v2320, 1
        %v2343 = vsel %vm912, %v2335, %v2342
        %v2344 = vrot.slane %v2321, 1
        %v2345 = vsel %vm912, %v2338, %v2344
        %2346 = vrot.lane.b32.xlu0 %v2333, 112
        %v2347 = vpop.permute.xlu0 %2346
        %2348 = vrot.lane.b32.xlu0 %v2336, 112
        %v2349 = vpop.permute.xlu0 %2348
        %2350 = vrot.lane.b32.xlu0 %v2339, 112
        %v2351 = vpop.permute.xlu0 %2350
        %2352 = vrot.lane.b32.xlu0 %v2341, 112
        %v2353 = vpop.permute.xlu0 %2352
        %2354 = vrot.lane.b32.xlu0 %v2343, 112
        %v2355 = vpop.permute.xlu0 %2354
        %2356 = vrot.lane.b32.xlu0 %v2345, 112
        %v2357 = vpop.permute.xlu0 %2356
        %v2358 = vsel %vm835, %v2347, %v2349
        %v2359 = vsel %vm835, %v2349, %v2351
        %v2360 = vsel %vm835, %v2353, %v2355
        %v2361 = vsel %vm835, %v2355, %v2357
        %v2366 = vadd.f32 %v2296, %v2358
        %v2367 = vadd.f32 %v2297, %v2359
        %v2368 = vadd.f32 %v2298, %v2360
        %v2369 = vadd.f32 %v2299, %v2361
        %s2370 = scalar_lea.vmem %s7, 7
        %v2371 = vld [vmem:[%s2370] ss:$8 sm:$0x3]
        %v2373 = vperm.slane %v2371, 0
        %v2374 = vperm.slane %v2371, 1
        %2375 = vrot.lane.b32.xlu0 %v2373, 32
        %v2376 = vpop.permute.xlu0 %2375
        %2377 = vrot.lane.b32.xlu0 %v2374, 32
        %v2378 = vpop.permute.xlu0 %2377
        %v2379 = vsel %vm764, %v2376, %v2378
        %v2383 = vmul.f32 %v2257, %v2376
        %v2384 = vmul.f32 %v2258, %v2379
        %v2385 = vmul.f32 %v2259, %v2378
        %v2386 = vmul.f32 %v2042, %v2376
        %v2387 = vmul.f32 %v2043, %v2379
        %v2388 = vmul.f32 %v2044, %v2378
        %v2389 = vmul.f32 %v2260, %v2376
        %v2390 = vmul.f32 %v2261, %v2379
        %v2391 = vmul.f32 %v2262, %v2378
        %v2401 = vrot.slane %v2383, 1
        %v2402 = vrot.slane %v2386, 1
        %v2403 = vsel %vm912, %v2401, %v2402
        %v2404 = vrot.slane %v2384, 1
        %v2405 = vrot.slane %v2387, 1
        %v2406 = vsel %vm912, %v2404, %v2405
        %v2407 = vrot.slane %v2385, 1
        %v2408 = vrot.slane %v2388, 1
        %v2409 = vsel %vm912, %v2407, %v2408
        %v2410 = vrot.slane %v2389, 1
        %v2411 = vsel %vm912, %v2402, %v2410
        %v2412 = vrot.slane %v2390, 1
        %v2413 = vsel %vm912, %v2405, %v2412
        %v2414 = vrot.slane %v2391, 1
        %v2415 = vsel %vm912, %v2408, %v2414
        %2416 = vrot.lane.b32.xlu0 %v2403, 96
        %v2417 = vpop.permute.xlu0 %2416
        %2418 = vrot.lane.b32.xlu0 %v2406, 96
        %v2419 = vpop.permute.xlu0 %2418
        %2420 = vrot.lane.b32.xlu0 %v2409, 96
        %v2421 = vpop.permute.xlu0 %2420
        %2422 = vrot.lane.b32.xlu0 %v2411, 96
        %v2423 = vpop.permute.xlu0 %2422
        %2424 = vrot.lane.b32.xlu0 %v2413, 96
        %v2425 = vpop.permute.xlu0 %2424
        %2426 = vrot.lane.b32.xlu0 %v2415, 96
        %v2427 = vpop.permute.xlu0 %2426
        %v2428 = vsel %vm893, %v2417, %v2419
        %v2429 = vsel %vm893, %v2419, %v2421
        %v2430 = vsel %vm893, %v2423, %v2425
        %v2431 = vsel %vm893, %v2425, %v2427
        %v2436 = vadd.f32 %v2366, %v2428
        %v2437 = vadd.f32 %v2367, %v2429
        %v2438 = vadd.f32 %v2368, %v2430
        %v2439 = vadd.f32 %v2369, %v2431
        %s2440 = scalar_lea.vmem %s7, 16
        %v2441 = vld [vmem:[%s2440] ss:$8 sm:$0x3]
        %v2443 = vperm.slane %v2441, 0
        %v2444 = vperm.slane %v2441, 1
        %2445 = vrot.lane.b32.xlu0 %v2443, 48
        %v2446 = vpop.permute.xlu0 %2445
        %2447 = vrot.lane.b32.xlu0 %v2444, 48
        %v2448 = vpop.permute.xlu0 %2447
        %v2449 = vsel %vm2166, %v2446, %v2448
        %v2453 = vmul.f32 %v2257, %v2446
        %v2454 = vmul.f32 %v2258, %v2449
        %v2455 = vmul.f32 %v2259, %v2448
        %v2456 = vmul.f32 %v2042, %v2446
        %v2457 = vmul.f32 %v2043, %v2449
        %v2458 = vmul.f32 %v2044, %v2448
        %v2459 = vmul.f32 %v2260, %v2446
        %v2460 = vmul.f32 %v2261, %v2449
        %v2461 = vmul.f32 %v2262, %v2448
        %v2471 = vrot.slane %v2453, 1
        %v2472 = vrot.slane %v2456, 1
        %v2473 = vsel %vm912, %v2471, %v2472
        %v2474 = vrot.slane %v2454, 1
        %v2475 = vrot.slane %v2457, 1
        %v2476 = vsel %vm912, %v2474, %v2475
        %v2477 = vrot.slane %v2455, 1
        %v2478 = vrot.slane %v2458, 1
        %v2479 = vsel %vm912, %v2477, %v2478
        %v2480 = vrot.slane %v2459, 1
        %v2481 = vsel %vm912, %v2472, %v2480
        %v2482 = vrot.slane %v2460, 1
        %v2483 = vsel %vm912, %v2475, %v2482
        %v2484 = vrot.slane %v2461, 1
        %v2485 = vsel %vm912, %v2478, %v2484
        %2486 = vrot.lane.b32.xlu0 %v2473, 80
        %v2487 = vpop.permute.xlu0 %2486
        %2488 = vrot.lane.b32.xlu0 %v2476, 80
        %v2489 = vpop.permute.xlu0 %2488
        %2490 = vrot.lane.b32.xlu0 %v2479, 80
        %v2491 = vpop.permute.xlu0 %2490
        %2492 = vrot.lane.b32.xlu0 %v2481, 80
        %v2493 = vpop.permute.xlu0 %2492
        %2494 = vrot.lane.b32.xlu0 %v2483, 80
        %v2495 = vpop.permute.xlu0 %2494
        %2496 = vrot.lane.b32.xlu0 %v2485, 80
        %v2497 = vpop.permute.xlu0 %2496
        %v2498 = vsel %vm2195, %v2487, %v2489
        %v2499 = vsel %vm2195, %v2489, %v2491
        %v2500 = vsel %vm2195, %v2493, %v2495
        %v2501 = vsel %vm2195, %v2495, %v2497
        %v2506 = vadd.f32 %v2436, %v2498
        %v2507 = vadd.f32 %v2437, %v2499
        %v2508 = vadd.f32 %v2438, %v2500
        %v2509 = vadd.f32 %v2439, %v2501
        %s2510 = scalar_lea.vmem %s7, 17
        %v2511 = vld [vmem:[%s2510] ss:$8 sm:$0x3]
        %v2513 = vperm.slane %v2511, 0
        %v2514 = vperm.slane %v2511, 1
        %2515 = vrot.lane.b32.xlu0 %v2513, 64
        %v2516 = vpop.permute.xlu0 %2515
        %2517 = vrot.lane.b32.xlu0 %v2514, 64
        %v2518 = vpop.permute.xlu0 %2517
        %v2519 = vsel %vm2026, %v2516, %v2518
        %v2523 = vmul.f32 %v2257, %v2516
        %v2524 = vmul.f32 %v2258, %v2519
        %v2525 = vmul.f32 %v2259, %v2518
        %v2526 = vmul.f32 %v2042, %v2516
        %v2527 = vmul.f32 %v2043, %v2519
        %v2528 = vmul.f32 %v2044, %v2518
        %v2529 = vmul.f32 %v2260, %v2516
        %v2530 = vmul.f32 %v2261, %v2519
        %v2531 = vmul.f32 %v2262, %v2518
        %v2541 = vrot.slane %v2523, 1
        %v2542 = vrot.slane %v2526, 1
        %v2543 = vsel %vm912, %v2541, %v2542
        %v2544 = vrot.slane %v2524, 1
        %v2545 = vrot.slane %v2527, 1
        %v2546 = vsel %vm912, %v2544, %v2545
        %v2547 = vrot.slane %v2525, 1
        %v2548 = vrot.slane %v2528, 1
        %v2549 = vsel %vm912, %v2547, %v2548
        %v2550 = vrot.slane %v2529, 1
        %v2551 = vsel %vm912, %v2542, %v2550
        %v2552 = vrot.slane %v2530, 1
        %v2553 = vsel %vm912, %v2545, %v2552
        %v2554 = vrot.slane %v2531, 1
        %v2555 = vsel %vm912, %v2548, %v2554
        %2556 = vrot.lane.b32.xlu0 %v2543, 64
        %v2557 = vpop.permute.xlu0 %2556
        %2558 = vrot.lane.b32.xlu0 %v2546, 64
        %v2559 = vpop.permute.xlu0 %2558
        %2560 = vrot.lane.b32.xlu0 %v2549, 64
        %v2561 = vpop.permute.xlu0 %2560
        %2562 = vrot.lane.b32.xlu0 %v2551, 64
        %v2563 = vpop.permute.xlu0 %2562
        %2564 = vrot.lane.b32.xlu0 %v2553, 64
        %v2565 = vpop.permute.xlu0 %2564
        %2566 = vrot.lane.b32.xlu0 %v2555, 64
        %v2567 = vpop.permute.xlu0 %2566
        %v2568 = vsel %vm2026, %v2557, %v2559
        %v2569 = vsel %vm2026, %v2559, %v2561
        %v2570 = vsel %vm2026, %v2563, %v2565
        %v2571 = vsel %vm2026, %v2565, %v2567
        %v2576 = vadd.f32 %v2506, %v2568
        %v2577 = vadd.f32 %v2507, %v2569
        %v2578 = vadd.f32 %v2508, %v2570
        %v2579 = vadd.f32 %v2509, %v2571
        %v2580 = vld [vmem:[#allocation3] sm:$0xfc]
        %v2581 = vld [vmem:[#allocation3 + $0x8] sm:$0xfc]
        %v2582 = vld [vmem:[#allocation3 + $0x10] sm:$0xfc]
        %v2583 = vld [vmem:[#allocation3 + $0x30] sm:$0x3]
        %v2584 = vld [vmem:[#allocation3 + $0x38] sm:$0x3]
        %v2585 = vld [vmem:[#allocation3 + $0x40] sm:$0x3]
        %s2586 = scalar_lea.vmem %s7, 18
        %v2587 = vld [vmem:[%s2586] ss:$8 sm:$0x3]
        %v2589 = vperm.slane %v2587, 0
        %v2590 = vperm.slane %v2587, 1
        %v2593 = vmul.f32 %v2580, %v2589
        %v2594 = vmul.f32 %v2581, %v2590
        %v2595 = vmul.f32 %v2042, %v2589
        %v2596 = vmul.f32 %v2043, %v2590
        %v2597 = vmul.f32 %v2583, %v2589
        %v2598 = vmul.f32 %v2584, %v2590
        %v2605 = vrot.slane %v2593, 2
        %v2606 = vrot.slane %v2595, 2
        %v2607 = vsel %vm1102, %v2605, %v2606
        %v2608 = vrot.slane %v2594, 2
        %v2609 = vrot.slane %v2596, 2
        %v2610 = vsel %vm1102, %v2608, %v2609
        %v2611 = vrot.slane %v2597, 2
        %v2612 = vsel %vm1102, %v2606, %v2611
        %v2613 = vrot.slane %v2598, 2
        %v2614 = vsel %vm1102, %v2609, %v2613
        %v2619 = vadd.f32 %v2576, %v2607
        %v2620 = vadd.f32 %v2577, %v2610
        %v2621 = vadd.f32 %v2578, %v2612
        %v2622 = vadd.f32 %v2579, %v2614
        %s2623 = scalar_lea.vmem %s7, 19
        %v2624 = vld [vmem:[%s2623] ss:$8 sm:$0x3]
        %v2626 = vperm.slane %v2624, 0
        %v2627 = vperm.slane %v2624, 1
        %2628 = vrot.lane.b32.xlu0 %v2626, 16
        %v2629 = vpop.permute.xlu0 %2628
        %2630 = vrot.lane.b32.xlu0 %v2627, 16
        %v2631 = vpop.permute.xlu0 %2630
        %v2632 = vsel %vm738, %v2629, %v2631
        %v2636 = vmul.f32 %v2580, %v2629
        %v2637 = vmul.f32 %v2581, %v2632
        %v2638 = vmul.f32 %v2582, %v2631
        %v2639 = vmul.f32 %v2042, %v2629
        %v2640 = vmul.f32 %v2043, %v2632
        %v2641 = vmul.f32 %v2044, %v2631
        %v2642 = vmul.f32 %v2583, %v2629
        %v2643 = vmul.f32 %v2584, %v2632
        %v2644 = vmul.f32 %v2585, %v2631
        %v2654 = vrot.slane %v2636, 2
        %v2655 = vrot.slane %v2639, 2
        %v2656 = vsel %vm1102, %v2654, %v2655
        %v2657 = vrot.slane %v2637, 2
        %v2658 = vrot.slane %v2640, 2
        %v2659 = vsel %vm1102, %v2657, %v2658
        %v2660 = vrot.slane %v2638, 2
        %v2661 = vrot.slane %v2641, 2
        %v2662 = vsel %vm1102, %v2660, %v2661
        %v2663 = vrot.slane %v2642, 2
        %v2664 = vsel %vm1102, %v2655, %v2663
        %v2665 = vrot.slane %v2643, 2
        %v2666 = vsel %vm1102, %v2658, %v2665
        %v2667 = vrot.slane %v2644, 2
        %v2668 = vsel %vm1102, %v2661, %v2667
        %2669 = vrot.lane.b32.xlu0 %v2656, 112
        %v2670 = vpop.permute.xlu0 %2669
        %2671 = vrot.lane.b32.xlu0 %v2659, 112
        %v2672 = vpop.permute.xlu0 %2671
        %2673 = vrot.lane.b32.xlu0 %v2662, 112
        %v2674 = vpop.permute.xlu0 %2673
        %2675 = vrot.lane.b32.xlu0 %v2664, 112
        %v2676 = vpop.permute.xlu0 %2675
        %2677 = vrot.lane.b32.xlu0 %v2666, 112
        %v2678 = vpop.permute.xlu0 %2677
        %2679 = vrot.lane.b32.xlu0 %v2668, 112
        %v2680 = vpop.permute.xlu0 %2679
        %v2681 = vsel %vm835, %v2670, %v2672
        %v2682 = vsel %vm835, %v2672, %v2674
        %v2683 = vsel %vm835, %v2676, %v2678
        %v2684 = vsel %vm835, %v2678, %v2680
        %v2689 = vadd.f32 %v2619, %v2681
        %v2690 = vadd.f32 %v2620, %v2682
        %v2691 = vadd.f32 %v2621, %v2683
        %v2692 = vadd.f32 %v2622, %v2684
        %s2693 = scalar_lea.vmem %s7, 20
        %v2694 = vld [vmem:[%s2693] ss:$8 sm:$0x3]
        %v2696 = vperm.slane %v2694, 0
        %v2697 = vperm.slane %v2694, 1
        %2698 = vrot.lane.b32.xlu0 %v2696, 32
        %v2699 = vpop.permute.xlu0 %2698
        %2700 = vrot.lane.b32.xlu0 %v2697, 32
        %v2701 = vpop.permute.xlu0 %2700
        %v2702 = vsel %vm764, %v2699, %v2701
        %v2706 = vmul.f32 %v2580, %v2699
        %v2707 = vmul.f32 %v2581, %v2702
        %v2708 = vmul.f32 %v2582, %v2701
        %v2709 = vmul.f32 %v2042, %v2699
        %v2710 = vmul.f32 %v2043, %v2702
        %v2711 = vmul.f32 %v2044, %v2701
        %v2712 = vmul.f32 %v2583, %v2699
        %v2713 = vmul.f32 %v2584, %v2702
        %v2714 = vmul.f32 %v2585, %v2701
        %v2724 = vrot.slane %v2706, 2
        %v2725 = vrot.slane %v2709, 2
        %v2726 = vsel %vm1102, %v2724, %v2725
        %v2727 = vrot.slane %v2707, 2
        %v2728 = vrot.slane %v2710, 2
        %v2729 = vsel %vm1102, %v2727, %v2728
        %v2730 = vrot.slane %v2708, 2
        %v2731 = vrot.slane %v2711, 2
        %v2732 = vsel %vm1102, %v2730, %v2731
        %v2733 = vrot.slane %v2712, 2
        %v2734 = vsel %vm1102, %v2725, %v2733
        %v2735 = vrot.slane %v2713, 2
        %v2736 = vsel %vm1102, %v2728, %v2735
        %v2737 = vrot.slane %v2714, 2
        %v2738 = vsel %vm1102, %v2731, %v2737
        %2739 = vrot.lane.b32.xlu0 %v2726, 96
        %v2740 = vpop.permute.xlu0 %2739
        %2741 = vrot.lane.b32.xlu0 %v2729, 96
        %v2742 = vpop.permute.xlu0 %2741
        %2743 = vrot.lane.b32.xlu0 %v2732, 96
        %v2744 = vpop.permute.xlu0 %2743
        %2745 = vrot.lane.b32.xlu0 %v2734, 96
        %v2746 = vpop.permute.xlu0 %2745
        %2747 = vrot.lane.b32.xlu0 %v2736, 96
        %v2748 = vpop.permute.xlu0 %2747
        %2749 = vrot.lane.b32.xlu0 %v2738, 96
        %v2750 = vpop.permute.xlu0 %2749
        %v2751 = vsel %vm893, %v2740, %v2742
        %v2752 = vsel %vm893, %v2742, %v2744
        %v2753 = vsel %vm893, %v2746, %v2748
        %v2754 = vsel %vm893, %v2748, %v2750
        %v2759 = vadd.f32 %v2689, %v2751
        %v2760 = vadd.f32 %v2690, %v2752
        %v2761 = vadd.f32 %v2691, %v2753
        %v2762 = vadd.f32 %v2692, %v2754
        %s2763 = scalar_lea.vmem %s7, 21
        %v2764 = vld [vmem:[%s2763] ss:$8 sm:$0x3]
        %v2766 = vperm.slane %v2764, 0
        %v2767 = vperm.slane %v2764, 1
        %2768 = vrot.lane.b32.xlu0 %v2766, 48
        %v2769 = vpop.permute.xlu0 %2768
        %2770 = vrot.lane.b32.xlu0 %v2767, 48
        %v2771 = vpop.permute.xlu0 %2770
        %v2772 = vsel %vm2166, %v2769, %v2771
        %v2776 = vmul.f32 %v2580, %v2769
        %v2777 = vmul.f32 %v2581, %v2772
        %v2778 = vmul.f32 %v2582, %v2771
        %v2779 = vmul.f32 %v2042, %v2769
        %v2780 = vmul.f32 %v2043, %v2772
        %v2781 = vmul.f32 %v2044, %v2771
        %v2782 = vmul.f32 %v2583, %v2769
        %v2783 = vmul.f32 %v2584, %v2772
        %v2784 = vmul.f32 %v2585, %v2771
        %v2794 = vrot.slane %v2776, 2
        %v2795 = vrot.slane %v2779, 2
        %v2796 = vsel %vm1102, %v2794, %v2795
        %v2797 = vrot.slane %v2777, 2
        %v2798 = vrot.slane %v2780, 2
        %v2799 = vsel %vm1102, %v2797, %v2798
        %v2800 = vrot.slane %v2778, 2
        %v2801 = vrot.slane %v2781, 2
        %v2802 = vsel %vm1102, %v2800, %v2801
        %v2803 = vrot.slane %v2782, 2
        %v2804 = vsel %vm1102, %v2795, %v2803
        %v2805 = vrot.slane %v2783, 2
        %v2806 = vsel %vm1102, %v2798, %v2805
        %v2807 = vrot.slane %v2784, 2
        %v2808 = vsel %vm1102, %v2801, %v2807
        %2809 = vrot.lane.b32.xlu0 %v2796, 80
        %v2810 = vpop.permute.xlu0 %2809
        %2811 = vrot.lane.b32.xlu0 %v2799, 80
        %v2812 = vpop.permute.xlu0 %2811
        %2813 = vrot.lane.b32.xlu0 %v2802, 80
        %v2814 = vpop.permute.xlu0 %2813
        %2815 = vrot.lane.b32.xlu0 %v2804, 80
        %v2816 = vpop.permute.xlu0 %2815
        %2817 = vrot.lane.b32.xlu0 %v2806, 80
        %v2818 = vpop.permute.xlu0 %2817
        %2819 = vrot.lane.b32.xlu0 %v2808, 80
        %v2820 = vpop.permute.xlu0 %2819
        %v2821 = vsel %vm2195, %v2810, %v2812
        %v2822 = vsel %vm2195, %v2812, %v2814
        %v2823 = vsel %vm2195, %v2816, %v2818
        %v2824 = vsel %vm2195, %v2818, %v2820
        %v2829 = vadd.f32 %v2759, %v2821
        %v2830 = vadd.f32 %v2760, %v2822
        %v2831 = vadd.f32 %v2761, %v2823
        %v2832 = vadd.f32 %v2762, %v2824
        %s2833 = scalar_lea.vmem %s7, 22
        %v2834 = vld [vmem:[%s2833] ss:$8 sm:$0x3]
        %v2836 = vperm.slane %v2834, 0
        %v2837 = vperm.slane %v2834, 1
        %2838 = vrot.lane.b32.xlu0 %v2836, 64
        %v2839 = vpop.permute.xlu0 %2838
        %2840 = vrot.lane.b32.xlu0 %v2837, 64
        %v2841 = vpop.permute.xlu0 %2840
        %v2842 = vsel %vm2026, %v2839, %v2841
        %v2846 = vmul.f32 %v2580, %v2839
        %v2847 = vmul.f32 %v2581, %v2842
        %v2848 = vmul.f32 %v2582, %v2841
        %v2849 = vmul.f32 %v2042, %v2839
        %v2850 = vmul.f32 %v2043, %v2842
        %v2851 = vmul.f32 %v2044, %v2841
        %v2852 = vmul.f32 %v2583, %v2839
        %v2853 = vmul.f32 %v2584, %v2842
        %v2854 = vmul.f32 %v2585, %v2841
        %v2864 = vrot.slane %v2846, 2
        %v2865 = vrot.slane %v2849, 2
        %v2866 = vsel %vm1102, %v2864, %v2865
        %v2867 = vrot.slane %v2847, 2
        %v2868 = vrot.slane %v2850, 2
        %v2869 = vsel %vm1102, %v2867, %v2868
        %v2870 = vrot.slane %v2848, 2
        %v2871 = vrot.slane %v2851, 2
        %v2872 = vsel %vm1102, %v2870, %v2871
        %v2873 = vrot.slane %v2852, 2
        %v2874 = vsel %vm1102, %v2865, %v2873
        %v2875 = vrot.slane %v2853, 2
        %v2876 = vsel %vm1102, %v2868, %v2875
        %v2877 = vrot.slane %v2854, 2
        %v2878 = vsel %vm1102, %v2871, %v2877
        %2879 = vrot.lane.b32.xlu0 %v2866, 64
        %v2880 = vpop.permute.xlu0 %2879
        %2881 = vrot.lane.b32.xlu0 %v2869, 64
        %v2882 = vpop.permute.xlu0 %2881
        %2883 = vrot.lane.b32.xlu0 %v2872, 64
        %v2884 = vpop.permute.xlu0 %2883
        %2885 = vrot.lane.b32.xlu0 %v2874, 64
        %v2886 = vpop.permute.xlu0 %2885
        %2887 = vrot.lane.b32.xlu0 %v2876, 64
        %v2888 = vpop.permute.xlu0 %2887
        %2889 = vrot.lane.b32.xlu0 %v2878, 64
        %v2890 = vpop.permute.xlu0 %2889
        %v2891 = vsel %vm2026, %v2880, %v2882
        %v2892 = vsel %vm2026, %v2882, %v2884
        %v2893 = vsel %vm2026, %v2886, %v2888
        %v2894 = vsel %vm2026, %v2888, %v2890
        %v2899 = vadd.f32 %v2829, %v2891
        %v2900 = vadd.f32 %v2830, %v2892
        %v2901 = vadd.f32 %v2831, %v2893
        %v2902 = vadd.f32 %v2832, %v2894
        %v2903 = vld [vmem:[#allocation3] sm:$0xf8]
        %v2904 = vld [vmem:[#allocation3 + $0x8] sm:$0xf8]
        %v2905 = vld [vmem:[#allocation3 + $0x10] sm:$0xf8]
        %v2906 = vld [vmem:[#allocation3 + $0x30] sm:$0x7]
        %v2907 = vld [vmem:[#allocation3 + $0x38] sm:$0x7]
        %v2908 = vld [vmem:[#allocation3 + $0x40] sm:$0x7]
        %s2909 = scalar_lea.vmem %s7, 23
        %v2910 = vld [vmem:[%s2909] ss:$8 sm:$0x3]
        %v2912 = vperm.slane %v2910, 0
        %v2913 = vperm.slane %v2910, 1
        %v2916 = vmul.f32 %v2903, %v2912
        %v2917 = vmul.f32 %v2904, %v2913
        %v2918 = vmul.f32 %v2042, %v2912
        %v2919 = vmul.f32 %v2043, %v2913
        %v2920 = vmul.f32 %v2906, %v2912
        %v2921 = vmul.f32 %v2907, %v2913
        %v2928 = vrot.slane %v2916, 3
        %v2929 = vrot.slane %v2918, 3
        %v2930 = vsel %vm1292, %v2928, %v2929
        %v2931 = vrot.slane %v2917, 3
        %v2932 = vrot.slane %v2919, 3
        %v2933 = vsel %vm1292, %v2931, %v2932
        %v2934 = vrot.slane %v2920, 3
        %v2935 = vsel %vm1292, %v2929, %v2934
        %v2936 = vrot.slane %v2921, 3
        %v2937 = vsel %vm1292, %v2932, %v2936
        %v2942 = vadd.f32 %v2899, %v2930
        %v2943 = vadd.f32 %v2900, %v2933
        %v2944 = vadd.f32 %v2901, %v2935
        %v2945 = vadd.f32 %v2902, %v2937
        %s2946 = scalar_lea.vmem %s7, 32
        %v2947 = vld [vmem:[%s2946] ss:$8 sm:$0x3]
        %v2949 = vperm.slane %v2947, 0
        %v2950 = vperm.slane %v2947, 1
        %2951 = vrot.lane.b32.xlu0 %v2949, 16
        %v2952 = vpop.permute.xlu0 %2951
        %2953 = vrot.lane.b32.xlu0 %v2950, 16
        %v2954 = vpop.permute.xlu0 %2953
        %v2955 = vsel %vm738, %v2952, %v2954
        %v2959 = vmul.f32 %v2903, %v2952
        %v2960 = vmul.f32 %v2904, %v2955
        %v2961 = vmul.f32 %v2905, %v2954
        %v2962 = vmul.f32 %v2042, %v2952
        %v2963 = vmul.f32 %v2043, %v2955
        %v2964 = vmul.f32 %v2044, %v2954
        %v2965 = vmul.f32 %v2906, %v2952
        %v2966 = vmul.f32 %v2907, %v2955
        %v2967 = vmul.f32 %v2908, %v2954
        %v2977 = vrot.slane %v2959, 3
        %v2978 = vrot.slane %v2962, 3
        %v2979 = vsel %vm1292, %v2977, %v2978
        %v2980 = vrot.slane %v2960, 3
        %v2981 = vrot.slane %v2963, 3
        %v2982 = vsel %vm1292, %v2980, %v2981
        %v2983 = vrot.slane %v2961, 3
        %v2984 = vrot.slane %v2964, 3
        %v2985 = vsel %vm1292, %v2983, %v2984
        %v2986 = vrot.slane %v2965, 3
        %v2987 = vsel %vm1292, %v2978, %v2986
        %v2988 = vrot.slane %v2966, 3
        %v2989 = vsel %vm1292, %v2981, %v2988
        %v2990 = vrot.slane %v2967, 3
        %v2991 = vsel %vm1292, %v2984, %v2990
        %2992 = vrot.lane.b32.xlu0 %v2979, 112
        %v2993 = vpop.permute.xlu0 %2992
        %2994 = vrot.lane.b32.xlu0 %v2982, 112
        %v2995 = vpop.permute.xlu0 %2994
        %2996 = vrot.lane.b32.xlu0 %v2985, 112
        %v2997 = vpop.permute.xlu0 %2996
        %2998 = vrot.lane.b32.xlu0 %v2987, 112
        %v2999 = vpop.permute.xlu0 %2998
        %3000 = vrot.lane.b32.xlu0 %v2989, 112
        %v3001 = vpop.permute.xlu0 %3000
        %3002 = vrot.lane.b32.xlu0 %v2991, 112
        %v3003 = vpop.permute.xlu0 %3002
        %v3004 = vsel %vm835, %v2993, %v2995
        %v3005 = vsel %vm835, %v2995, %v2997
        %v3006 = vsel %vm835, %v2999, %v3001
        %v3007 = vsel %vm835, %v3001, %v3003
        %v3012 = vadd.f32 %v2942, %v3004
        %v3013 = vadd.f32 %v2943, %v3005
        %v3014 = vadd.f32 %v2944, %v3006
        %v3015 = vadd.f32 %v2945, %v3007
        %s3016 = scalar_lea.vmem %s7, 33
        %v3017 = vld [vmem:[%s3016] ss:$8 sm:$0x3]
        %v3019 = vperm.slane %v3017, 0
        %v3020 = vperm.slane %v3017, 1
        %3021 = vrot.lane.b32.xlu0 %v3019, 32
        %v3022 = vpop.permute.xlu0 %3021
        %3023 = vrot.lane.b32.xlu0 %v3020, 32
        %v3024 = vpop.permute.xlu0 %3023
        %v3025 = vsel %vm764, %v3022, %v3024
        %v3029 = vmul.f32 %v2903, %v3022
        %v3030 = vmul.f32 %v2904, %v3025
        %v3031 = vmul.f32 %v2905, %v3024
        %v3032 = vmul.f32 %v2042, %v3022
        %v3033 = vmul.f32 %v2043, %v3025
        %v3034 = vmul.f32 %v2044, %v3024
        %v3035 = vmul.f32 %v2906, %v3022
        %v3036 = vmul.f32 %v2907, %v3025
        %v3037 = vmul.f32 %v2908, %v3024
        %v3047 = vrot.slane %v3029, 3
        %v3048 = vrot.slane %v3032, 3
        %v3049 = vsel %vm1292, %v3047, %v3048
        %v3050 = vrot.slane %v3030, 3
        %v3051 = vrot.slane %v3033, 3
        %v3052 = vsel %vm1292, %v3050, %v3051
        %v3053 = vrot.slane %v3031, 3
        %v3054 = vrot.slane %v3034, 3
        %v3055 = vsel %vm1292, %v3053, %v3054
        %v3056 = vrot.slane %v3035, 3
        %v3057 = vsel %vm1292, %v3048, %v3056
        %v3058 = vrot.slane %v3036, 3
        %v3059 = vsel %vm1292, %v3051, %v3058
        %v3060 = vrot.slane %v3037, 3
        %v3061 = vsel %vm1292, %v3054, %v3060
        %3062 = vrot.lane.b32.xlu0 %v3049, 96
        %v3063 = vpop.permute.xlu0 %3062
        %3064 = vrot.lane.b32.xlu0 %v3052, 96
        %v3065 = vpop.permute.xlu0 %3064
        %3066 = vrot.lane.b32.xlu0 %v3055, 96
        %v3067 = vpop.permute.xlu0 %3066
        %3068 = vrot.lane.b32.xlu0 %v3057, 96
        %v3069 = vpop.permute.xlu0 %3068
        %3070 = vrot.lane.b32.xlu0 %v3059, 96
        %v3071 = vpop.permute.xlu0 %3070
        %3072 = vrot.lane.b32.xlu0 %v3061, 96
        %v3073 = vpop.permute.xlu0 %3072
        %v3074 = vsel %vm893, %v3063, %v3065
        %v3075 = vsel %vm893, %v3065, %v3067
        %v3076 = vsel %vm893, %v3069, %v3071
        %v3077 = vsel %vm893, %v3071, %v3073
        %v3082 = vadd.f32 %v3012, %v3074
        %v3083 = vadd.f32 %v3013, %v3075
        %v3084 = vadd.f32 %v3014, %v3076
        %v3085 = vadd.f32 %v3015, %v3077
        %s3086 = scalar_lea.vmem %s7, 34
        %v3087 = vld [vmem:[%s3086] ss:$8 sm:$0x3]
        %v3089 = vperm.slane %v3087, 0
        %v3090 = vperm.slane %v3087, 1
        %3091 = vrot.lane.b32.xlu0 %v3089, 48
        %v3092 = vpop.permute.xlu0 %3091
        %3093 = vrot.lane.b32.xlu0 %v3090, 48
        %v3094 = vpop.permute.xlu0 %3093
        %v3095 = vsel %vm2166, %v3092, %v3094
        %v3099 = vmul.f32 %v2903, %v3092
        %v3100 = vmul.f32 %v2904, %v3095
        %v3101 = vmul.f32 %v2905, %v3094
        %v3102 = vmul.f32 %v2042, %v3092
        %v3103 = vmul.f32 %v2043, %v3095
        %v3104 = vmul.f32 %v2044, %v3094
        %v3105 = vmul.f32 %v2906, %v3092
        %v3106 = vmul.f32 %v2907, %v3095
        %v3107 = vmul.f32 %v2908, %v3094
        %v3117 = vrot.slane %v3099, 3
        %v3118 = vrot.slane %v3102, 3
        %v3119 = vsel %vm1292, %v3117, %v3118
        %v3120 = vrot.slane %v3100, 3
        %v3121 = vrot.slane %v3103, 3
        %v3122 = vsel %vm1292, %v3120, %v3121
        %v3123 = vrot.slane %v3101, 3
        %v3124 = vrot.slane %v3104, 3
        %v3125 = vsel %vm1292, %v3123, %v3124
        %v3126 = vrot.slane %v3105, 3
        %v3127 = vsel %vm1292, %v3118, %v3126
        %v3128 = vrot.slane %v3106, 3
        %v3129 = vsel %vm1292, %v3121, %v3128
        %v3130 = vrot.slane %v3107, 3
        %v3131 = vsel %vm1292, %v3124, %v3130
        %3132 = vrot.lane.b32.xlu0 %v3119, 80
        %v3133 = vpop.permute.xlu0 %3132
        %3134 = vrot.lane.b32.xlu0 %v3122, 80
        %v3135 = vpop.permute.xlu0 %3134
        %3136 = vrot.lane.b32.xlu0 %v3125, 80
        %v3137 = vpop.permute.xlu0 %3136
        %3138 = vrot.lane.b32.xlu0 %v3127, 80
        %v3139 = vpop.permute.xlu0 %3138
        %3140 = vrot.lane.b32.xlu0 %v3129, 80
        %v3141 = vpop.permute.xlu0 %3140
        %3142 = vrot.lane.b32.xlu0 %v3131, 80
        %v3143 = vpop.permute.xlu0 %3142
        %v3144 = vsel %vm2195, %v3133, %v3135
        %v3145 = vsel %vm2195, %v3135, %v3137
        %v3146 = vsel %vm2195, %v3139, %v3141
        %v3147 = vsel %vm2195, %v3141, %v3143
        %v3152 = vadd.f32 %v3082, %v3144
        %v3153 = vadd.f32 %v3083, %v3145
        %v3154 = vadd.f32 %v3084, %v3146
        %v3155 = vadd.f32 %v3085, %v3147
        %s3156 = scalar_lea.vmem %s7, 35
        %v3157 = vld [vmem:[%s3156] ss:$8 sm:$0x3]
        %v3159 = vperm.slane %v3157, 0
        %v3160 = vperm.slane %v3157, 1
        %3161 = vrot.lane.b32.xlu0 %v3159, 64
        %v3162 = vpop.permute.xlu0 %3161
        %3163 = vrot.lane.b32.xlu0 %v3160, 64
        %v3164 = vpop.permute.xlu0 %3163
        %v3165 = vsel %vm2026, %v3162, %v3164
        %v3169 = vmul.f32 %v2903, %v3162
        %v3170 = vmul.f32 %v2904, %v3165
        %v3171 = vmul.f32 %v2905, %v3164
        %v3172 = vmul.f32 %v2042, %v3162
        %v3173 = vmul.f32 %v2043, %v3165
        %v3174 = vmul.f32 %v2044, %v3164
        %v3175 = vmul.f32 %v2906, %v3162
        %v3176 = vmul.f32 %v2907, %v3165
        %v3177 = vmul.f32 %v2908, %v3164
        %v3187 = vrot.slane %v3169, 3
        %v3188 = vrot.slane %v3172, 3
        %v3189 = vsel %vm1292, %v3187, %v3188
        %v3190 = vrot.slane %v3170, 3
        %v3191 = vrot.slane %v3173, 3
        %v3192 = vsel %vm1292, %v3190, %v3191
        %v3193 = vrot.slane %v3171, 3
        %v3194 = vrot.slane %v3174, 3
        %v3195 = vsel %vm1292, %v3193, %v3194
        %v3196 = vrot.slane %v3175, 3
        %v3197 = vsel %vm1292, %v3188, %v3196
        %v3198 = vrot.slane %v3176, 3
        %v3199 = vsel %vm1292, %v3191, %v3198
        %v3200 = vrot.slane %v3177, 3
        %v3201 = vsel %vm1292, %v3194, %v3200
        %3202 = vrot.lane.b32.xlu0 %v3189, 64
        %v3203 = vpop.permute.xlu0 %3202
        %3204 = vrot.lane.b32.xlu0 %v3192, 64
        %v3205 = vpop.permute.xlu0 %3204
        %3206 = vrot.lane.b32.xlu0 %v3195, 64
        %v3207 = vpop.permute.xlu0 %3206
        %3208 = vrot.lane.b32.xlu0 %v3197, 64
        %v3209 = vpop.permute.xlu0 %3208
        %3210 = vrot.lane.b32.xlu0 %v3199, 64
        %v3211 = vpop.permute.xlu0 %3210
        %3212 = vrot.lane.b32.xlu0 %v3201, 64
        %v3213 = vpop.permute.xlu0 %3212
        %v3214 = vsel %vm2026, %v3203, %v3205
        %v3215 = vsel %vm2026, %v3205, %v3207
        %v3216 = vsel %vm2026, %v3209, %v3211
        %v3217 = vsel %vm2026, %v3211, %v3213
        %v3222 = vadd.f32 %v3152, %v3214
        %v3223 = vadd.f32 %v3153, %v3215
        %v3224 = vadd.f32 %v3154, %v3216
        %v3225 = vadd.f32 %v3155, %v3217
        %v3226 = vld [vmem:[#allocation3] sm:$0xf0]
        %v3227 = vld [vmem:[#allocation3 + $0x8] sm:$0xf0]
        %v3228 = vld [vmem:[#allocation3 + $0x10] sm:$0xf0]
        %v3229 = vld [vmem:[#allocation3 + $0x30] sm:$0xf]
        %v3230 = vld [vmem:[#allocation3 + $0x38] sm:$0xf]
        %v3231 = vld [vmem:[#allocation3 + $0x40] sm:$0xf]
        %s3232 = scalar_lea.vmem %s7, 36
        %v3233 = vld [vmem:[%s3232] ss:$8 sm:$0x3]
        %v3235 = vperm.slane %v3233, 0
        %v3236 = vperm.slane %v3233, 1
        %v3239 = vmul.f32 %v3226, %v3235
        %v3240 = vmul.f32 %v3227, %v3236
        %v3241 = vmul.f32 %v2042, %v3235
        %v3242 = vmul.f32 %v2043, %v3236
        %v3243 = vmul.f32 %v3229, %v3235
        %v3244 = vmul.f32 %v3230, %v3236
        %v3251 = vrot.slane %v3239, 4
        %v3252 = vrot.slane %v3241, 4
        %v3253 = vsel %vm1482, %v3251, %v3252
        %v3254 = vrot.slane %v3240, 4
        %v3255 = vrot.slane %v3242, 4
        %v3256 = vsel %vm1482, %v3254, %v3255
        %v3257 = vrot.slane %v3243, 4
        %v3258 = vsel %vm1482, %v3252, %v3257
        %v3259 = vrot.slane %v3244, 4
        %v3260 = vsel %vm1482, %v3255, %v3259
        %v3265 = vadd.f32 %v3222, %v3253
        %v3266 = vadd.f32 %v3223, %v3256
        %v3267 = vadd.f32 %v3224, %v3258
        %v3268 = vadd.f32 %v3225, %v3260
        %s3269 = scalar_lea.vmem %s7, 37
        %v3270 = vld [vmem:[%s3269] ss:$8 sm:$0x3]
        %v3272 = vperm.slane %v3270, 0
        %v3273 = vperm.slane %v3270, 1
        %3274 = vrot.lane.b32.xlu0 %v3272, 16
        %v3275 = vpop.permute.xlu0 %3274
        %3276 = vrot.lane.b32.xlu0 %v3273, 16
        %v3277 = vpop.permute.xlu0 %3276
        %v3278 = vsel %vm738, %v3275, %v3277
        %v3282 = vmul.f32 %v3226, %v3275
        %v3283 = vmul.f32 %v3227, %v3278
        %v3284 = vmul.f32 %v3228, %v3277
        %v3285 = vmul.f32 %v2042, %v3275
        %v3286 = vmul.f32 %v2043, %v3278
        %v3287 = vmul.f32 %v2044, %v3277
        %v3288 = vmul.f32 %v3229, %v3275
        %v3289 = vmul.f32 %v3230, %v3278
        %v3290 = vmul.f32 %v3231, %v3277
        %v3300 = vrot.slane %v3282, 4
        %v3301 = vrot.slane %v3285, 4
        %v3302 = vsel %vm1482, %v3300, %v3301
        %v3303 = vrot.slane %v3283, 4
        %v3304 = vrot.slane %v3286, 4
        %v3305 = vsel %vm1482, %v3303, %v3304
        %v3306 = vrot.slane %v3284, 4
        %v3307 = vrot.slane %v3287, 4
        %v3308 = vsel %vm1482, %v3306, %v3307
        %v3309 = vrot.slane %v3288, 4
        %v3310 = vsel %vm1482, %v3301, %v3309
        %v3311 = vrot.slane %v3289, 4
        %v3312 = vsel %vm1482, %v3304, %v3311
        %v3313 = vrot.slane %v3290, 4
        %v3314 = vsel %vm1482, %v3307, %v3313
        %3315 = vrot.lane.b32.xlu0 %v3302, 112
        %v3316 = vpop.permute.xlu0 %3315
        %3317 = vrot.lane.b32.xlu0 %v3305, 112
        %v3318 = vpop.permute.xlu0 %3317
        %3319 = vrot.lane.b32.xlu0 %v3308, 112
        %v3320 = vpop.permute.xlu0 %3319
        %3321 = vrot.lane.b32.xlu0 %v3310, 112
        %v3322 = vpop.permute.xlu0 %3321
        %3323 = vrot.lane.b32.xlu0 %v3312, 112
        %v3324 = vpop.permute.xlu0 %3323
        %3325 = vrot.lane.b32.xlu0 %v3314, 112
        %v3326 = vpop.permute.xlu0 %3325
        %v3327 = vsel %vm835, %v3316, %v3318
        %v3328 = vsel %vm835, %v3318, %v3320
        %v3329 = vsel %vm835, %v3322, %v3324
        %v3330 = vsel %vm835, %v3324, %v3326
        %v3335 = vadd.f32 %v3265, %v3327
        %v3336 = vadd.f32 %v3266, %v3328
        %v3337 = vadd.f32 %v3267, %v3329
        %v3338 = vadd.f32 %v3268, %v3330
        %s3339 = scalar_lea.vmem %s7, 38
        %v3340 = vld [vmem:[%s3339] ss:$8 sm:$0x3]
        %v3342 = vperm.slane %v3340, 0
        %v3343 = vperm.slane %v3340, 1
        %3344 = vrot.lane.b32.xlu0 %v3342, 32
        %v3345 = vpop.permute.xlu0 %3344
        %3346 = vrot.lane.b32.xlu0 %v3343, 32
        %v3347 = vpop.permute.xlu0 %3346
        %v3348 = vsel %vm764, %v3345, %v3347
        %v3352 = vmul.f32 %v3226, %v3345
        %v3353 = vmul.f32 %v3227, %v3348
        %v3354 = vmul.f32 %v3228, %v3347
        %v3355 = vmul.f32 %v2042, %v3345
        %v3356 = vmul.f32 %v2043, %v3348
        %v3357 = vmul.f32 %v2044, %v3347
        %v3358 = vmul.f32 %v3229, %v3345
        %v3359 = vmul.f32 %v3230, %v3348
        %v3360 = vmul.f32 %v3231, %v3347
        %v3370 = vrot.slane %v3352, 4
        %v3371 = vrot.slane %v3355, 4
        %v3372 = vsel %vm1482, %v3370, %v3371
        %v3373 = vrot.slane %v3353, 4
        %v3374 = vrot.slane %v3356, 4
        %v3375 = vsel %vm1482, %v3373, %v3374
        %v3376 = vrot.slane %v3354, 4
        %v3377 = vrot.slane %v3357, 4
        %v3378 = vsel %vm1482, %v3376, %v3377
        %v3379 = vrot.slane %v3358, 4
        %v3380 = vsel %vm1482, %v3371, %v3379
        %v3381 = vrot.slane %v3359, 4
        %v3382 = vsel %vm1482, %v3374, %v3381
        %v3383 = vrot.slane %v3360, 4
        %v3384 = vsel %vm1482, %v3377, %v3383
        %3385 = vrot.lane.b32.xlu0 %v3372, 96
        %v3386 = vpop.permute.xlu0 %3385
        %3387 = vrot.lane.b32.xlu0 %v3375, 96
        %v3388 = vpop.permute.xlu0 %3387
        %3389 = vrot.lane.b32.xlu0 %v3378, 96
        %v3390 = vpop.permute.xlu0 %3389
        %3391 = vrot.lane.b32.xlu0 %v3380, 96
        %v3392 = vpop.permute.xlu0 %3391
        %3393 = vrot.lane.b32.xlu0 %v3382, 96
        %v3394 = vpop.permute.xlu0 %3393
        %3395 = vrot.lane.b32.xlu0 %v3384, 96
        %v3396 = vpop.permute.xlu0 %3395
        %v3397 = vsel %vm893, %v3386, %v3388
        %v3398 = vsel %vm893, %v3388, %v3390
        %v3399 = vsel %vm893, %v3392, %v3394
        %v3400 = vsel %vm893, %v3394, %v3396
        %v3405 = vadd.f32 %v3335, %v3397
        %v3406 = vadd.f32 %v3336, %v3398
        %v3407 = vadd.f32 %v3337, %v3399
        %v3408 = vadd.f32 %v3338, %v3400
        %s3409 = scalar_lea.vmem %s7, 39
        %v3410 = vld [vmem:[%s3409] ss:$8 sm:$0x3]
        %v3412 = vperm.slane %v3410, 0
        %v3413 = vperm.slane %v3410, 1
        %3414 = vrot.lane.b32.xlu0 %v3412, 48
        %v3415 = vpop.permute.xlu0 %3414
        %3416 = vrot.lane.b32.xlu0 %v3413, 48
        %v3417 = vpop.permute.xlu0 %3416
        %v3418 = vsel %vm2166, %v3415, %v3417
        %v3422 = vmul.f32 %v3226, %v3415
        %v3423 = vmul.f32 %v3227, %v3418
        %v3424 = vmul.f32 %v3228, %v3417
        %v3425 = vmul.f32 %v2042, %v3415
        %v3426 = vmul.f32 %v2043, %v3418
        %v3427 = vmul.f32 %v2044, %v3417
        %v3428 = vmul.f32 %v3229, %v3415
        %v3429 = vmul.f32 %v3230, %v3418
        %v3430 = vmul.f32 %v3231, %v3417
        %v3440 = vrot.slane %v3422, 4
        %v3441 = vrot.slane %v3425, 4
        %v3442 = vsel %vm1482, %v3440, %v3441
        %v3443 = vrot.slane %v3423, 4
        %v3444 = vrot.slane %v3426, 4
        %v3445 = vsel %vm1482, %v3443, %v3444
        %v3446 = vrot.slane %v3424, 4
        %v3447 = vrot.slane %v3427, 4
        %v3448 = vsel %vm1482, %v3446, %v3447
        %v3449 = vrot.slane %v3428, 4
        %v3450 = vsel %vm1482, %v3441, %v3449
        %v3451 = vrot.slane %v3429, 4
        %v3452 = vsel %vm1482, %v3444, %v3451
        %v3453 = vrot.slane %v3430, 4
        %v3454 = vsel %vm1482, %v3447, %v3453
        %3455 = vrot.lane.b32.xlu0 %v3442, 80
        %v3456 = vpop.permute.xlu0 %3455
        %3457 = vrot.lane.b32.xlu0 %v3445, 80
        %v3458 = vpop.permute.xlu0 %3457
        %3459 = vrot.lane.b32.xlu0 %v3448, 80
        %v3460 = vpop.permute.xlu0 %3459
        %3461 = vrot.lane.b32.xlu0 %v3450, 80
        %v3462 = vpop.permute.xlu0 %3461
        %3463 = vrot.lane.b32.xlu0 %v3452, 80
        %v3464 = vpop.permute.xlu0 %3463
        %3465 = vrot.lane.b32.xlu0 %v3454, 80
        %v3466 = vpop.permute.xlu0 %3465
        %v3467 = vsel %vm2195, %v3456, %v3458
        %v3468 = vsel %vm2195, %v3458, %v3460
        %v3469 = vsel %vm2195, %v3462, %v3464
        %v3470 = vsel %vm2195, %v3464, %v3466
        %v3475 = vadd.f32 %v3405, %v3467
        %v3476 = vadd.f32 %v3406, %v3468
        %v3477 = vadd.f32 %v3407, %v3469
        %v3478 = vadd.f32 %v3408, %v3470
        %s3479 = scalar_lea.vmem %s7, 48
        %v3480 = vld [vmem:[%s3479] ss:$8 sm:$0x3]
        %v3482 = vperm.slane %v3480, 0
        %v3483 = vperm.slane %v3480, 1
        %3484 = vrot.lane.b32.xlu0 %v3482, 64
        %v3485 = vpop.permute.xlu0 %3484
        %3486 = vrot.lane.b32.xlu0 %v3483, 64
        %v3487 = vpop.permute.xlu0 %3486
        %v3488 = vsel %vm2026, %v3485, %v3487
        %v3492 = vmul.f32 %v3226, %v3485
        %v3493 = vmul.f32 %v3227, %v3488
        %v3494 = vmul.f32 %v3228, %v3487
        %v3495 = vmul.f32 %v2042, %v3485
        %v3496 = vmul.f32 %v2043, %v3488
        %v3497 = vmul.f32 %v2044, %v3487
        %v3498 = vmul.f32 %v3229, %v3485
        %v3499 = vmul.f32 %v3230, %v3488
        %v3500 = vmul.f32 %v3231, %v3487
        %v3510 = vrot.slane %v3492, 4
        %v3511 = vrot.slane %v3495, 4
        %v3512 = vsel %vm1482, %v3510, %v3511
        %v3513 = vrot.slane %v3493, 4
        %v3514 = vrot.slane %v3496, 4
        %v3515 = vsel %vm1482, %v3513, %v3514
        %v3516 = vrot.slane %v3494, 4
        %v3517 = vrot.slane %v3497, 4
        %v3518 = vsel %vm1482, %v3516, %v3517
        %v3519 = vrot.slane %v3498, 4
        %v3520 = vsel %vm1482, %v3511, %v3519
        %v3521 = vrot.slane %v3499, 4
        %v3522 = vsel %vm1482, %v3514, %v3521
        %v3523 = vrot.slane %v3500, 4
        %v3524 = vsel %vm1482, %v3517, %v3523
        %3525 = vrot.lane.b32.xlu0 %v3512, 64
        %v3526 = vpop.permute.xlu0 %3525
        %3527 = vrot.lane.b32.xlu0 %v3515, 64
        %v3528 = vpop.permute.xlu0 %3527
        %3529 = vrot.lane.b32.xlu0 %v3518, 64
        %v3530 = vpop.permute.xlu0 %3529
        %3531 = vrot.lane.b32.xlu0 %v3520, 64
        %v3532 = vpop.permute.xlu0 %3531
        %3533 = vrot.lane.b32.xlu0 %v3522, 64
        %v3534 = vpop.permute.xlu0 %3533
        %3535 = vrot.lane.b32.xlu0 %v3524, 64
        %v3536 = vpop.permute.xlu0 %3535
        %v3537 = vsel %vm2026, %v3526, %v3528
        %v3538 = vsel %vm2026, %v3528, %v3530
        %v3539 = vsel %vm2026, %v3532, %v3534
        %v3540 = vsel %vm2026, %v3534, %v3536
        %v3545 = vadd.f32 %v3475, %v3537
        %v3546 = vadd.f32 %v3476, %v3538
        %v3547 = vadd.f32 %v3477, %v3539
        %v3548 = vadd.f32 %v3478, %v3540
        %v3549 = vld [vmem:[%s8] sm:$0x3]
        %v3551 = vperm.slane %v3549, 0
        %v3552 = vperm.slane %v3549, 1
        %v3555 = vadd.f32 %v3545, %v3551
        %v3556 = vadd.f32 %v3546, %v3552
        %v3557 = vadd.f32 %v3547, %v3551
        %v3558 = vadd.f32 %v3548, %v3552
        %v3559 = vadd.f32 %v1944, %v361
        %v3560 = vadd.f32 %v1972, %v362
        %v3561 = vadd.f32 %v1946, %v363
        %v3562 = vadd.f32 %v1974, %v364
        %v3563 = vpack.c.bf16 %v3560, %v3559
        %v3564 = vpack.c.bf16 %v3562, %v3561
        %3565 = vst [vmem:[%s360] sm:$0xff] %v3563
        %3566 = vst [vmem:[%s360 + $0x8] sm:$0xff] %v3564
        %v3567 = vadd.f32 %v3555, %v366
        %v3568 = vadd.f32 %v3556, %v367
        %v3569 = vadd.f32 %v3557, %v368
        %v3570 = vadd.f32 %v3558, %v369
        %v3571 = vpack.c.bf16 %v3568, %v3567
        %v3572 = vpack.c.bf16 %v3570, %v3569
        %s3573 = scalar_lea.vmem %s360, 16 [#allocation5]
        %3574 = vst [vmem:[%s3573] sm:$0xff] %v3571
        %3575 = vst [vmem:[%s3573 + $0x8] sm:$0xff] %v3572
        %s3576 = sand.u32 %s222, 1
        %s3577 = sand.u32 %s222, 1
        %s3578 = smul.addr %s3577, 32
        %s3579 = scalar_lea.vmem [#allocation5], %s3578
        // Predicated region
        $region80: #{ghost_bottleneck_forward.1} parent=74 // pred_check
          %p3580 = pneg %p232
        $region81: #{ghost_bottleneck_forward.1} parent=74 // pred_check_branch
          %3582 = sbr.rel (%p3580) target = $region83
        $region82: #{ghost_bottleneck_forward.1} parent=74 // pred_region
          %s3583 = smul.addr %s20, 4
          %s3584 = smul.addr %s3583, 4
          %s3585 = scalar_lea.vmem %s9, %s3584
          // Predicated region
          $region84: #{ghost_bottleneck_forward.1} parent=82 // pred_check
            _
          $region85: #{ghost_bottleneck_forward.1} parent=82 // pred_check_branch
            %3587 = sbr.rel (0) target = $region87
          $region86: #{ghost_bottleneck_forward.1} parent=82 // pred_region
            // Predicated region
            $region88: #{ghost_bottleneck_forward.1} parent=86 // pred_check
              _
            $region89: #{ghost_bottleneck_forward.1} parent=86 // pred_check_branch
              %3589 = sbr.rel (0) target = $region91
            $region90: #{ghost_bottleneck_forward.1} parent=86 // pred_region
              // Predicated region
              $region103: #{ghost_bottleneck_forward.1} parent=90 // pred_check
                _
              $region104: #{ghost_bottleneck_forward.1} parent=90 // pred_check_branch
                %3611 = sbr.rel (0) target = $region106
              $region105: #{ghost_bottleneck_forward.1} parent=90 // pred_region
                loop: start=0, step=1, limit=1
                $region107: #{ghost_bottleneck_forward.1} parent=105 // loop_pre_header
                  _
                $region108: #{ghost_bottleneck_forward.1} parent=105 // loop_header
                  %s3613 = sphi 0, %s3617
                  %p3614 = scmp.ge.s32.totalorder %s3613, 1
                  %s3618 = sphi %s3579, %s3579
                  %s3619 = sphi %s3585, %s3585
                $region109: #{ghost_bottleneck_forward.1} parent=105 // loop_header_branch
                  %3616 = sbr.rel (%p3614) target = $region113
                $region110: #{ghost_bottleneck_forward.1} parent=105 // loop_body
                  %v3620 = vld [vmem:[%s3618] sm:$0xff]
                  %3621 = vst [vmem:[%s3619] sm:$0xff] %v3620
                  %v3622 = vld [vmem:[%s3618 + $0x8] sm:$0xff]
                  %3623 = vst [vmem:[%s3619 + $0x8] sm:$0xff] %v3622
                  %v3624 = vld [vmem:[%s3618 + $0x10] sm:$0xff]
                  %3625 = vst [vmem:[%s3619 + $0x20] sm:$0xff] %v3624
                  %v3626 = vld [vmem:[%s3618 + $0x18] sm:$0xff]
                  %3627 = vst [vmem:[%s3619 + $0x28] sm:$0xff] %v3626
                $region111: #{ghost_bottleneck_forward.1} parent=105 // loop_footer
                  %s3617 = sadd.s32 1, %s3613
                $region112: #{ghost_bottleneck_forward.1} parent=105 // loop_footer_branch
                  %3612 = sbr.rel target = $region108
                $region113: #{ghost_bottleneck_forward.1} parent=105 // loop_exit
                  _
              $region106: #{ghost_bottleneck_forward.1} parent=90 // pred_fallthru
                _
              // Predicated region
              $region114: #{ghost_bottleneck_forward.1} parent=90 // pred_check
                _
              $region115: #{ghost_bottleneck_forward.1} parent=90 // pred_check_branch
                %3629 = sbr.rel target = $region117
              $region116: #{ghost_bottleneck_forward.1} parent=90 // pred_region
                _
              $region117: #{ghost_bottleneck_forward.1} parent=90 // pred_fallthru
                _
            $region91: #{ghost_bottleneck_forward.1} parent=86 // pred_fallthru
              _
            // Predicated region
            $region92: #{ghost_bottleneck_forward.1} parent=86 // pred_check
              _
            $region93: #{ghost_bottleneck_forward.1} parent=86 // pred_check_branch
              %3591 = sbr.rel target = $region95
            $region94: #{ghost_bottleneck_forward.1} parent=86 // pred_region
              %s3593 = ssub.s32 256, 1
              loop: start=0, step=1, limit=1
              $region96: #{ghost_bottleneck_forward.1} parent=94 // loop_pre_header
                _
              $region97: #{ghost_bottleneck_forward.1} parent=94 // loop_header
                %s3595 = sphi 0, %s3599
                %p3596 = scmp.ge.s32.totalorder %s3595, 1
                %s3600 = sphi %s3579, %s3579
                %s3601 = sphi %s3585, %s3585
              $region98: #{ghost_bottleneck_forward.1} parent=94 // loop_header_branch
                %3598 = sbr.rel (%p3596) target = $region102
              $region99: #{ghost_bottleneck_forward.1} parent=94 // loop_body
                %v3602 = vld [vmem:[%s3600] sm:%s3593]
                %3603 = vst [vmem:[%s3601] sm:%s3593] %v3602
                %v3604 = vld [vmem:[%s3600 + $0x8] sm:%s3593]
                %3605 = vst [vmem:[%s3601 + $0x8] sm:%s3593] %v3604
                %v3606 = vld [vmem:[%s3600 + $0x10] sm:%s3593]
                %3607 = vst [vmem:[%s3601 + $0x20] sm:%s3593] %v3606
                %v3608 = vld [vmem:[%s3600 + $0x18] sm:%s3593]
                %3609 = vst [vmem:[%s3601 + $0x28] sm:%s3593] %v3608
              $region100: #{ghost_bottleneck_forward.1} parent=94 // loop_footer
                %s3599 = sadd.s32 1, %s3595
              $region101: #{ghost_bottleneck_forward.1} parent=94 // loop_footer_branch
                %3594 = sbr.rel target = $region97
              $region102: #{ghost_bottleneck_forward.1} parent=94 // loop_exit
                _
            $region95: #{ghost_bottleneck_forward.1} parent=86 // pred_fallthru
              _
          $region87: #{ghost_bottleneck_forward.1} parent=82 // pred_fallthru
            _
          %3630 = vnop
        $region83: #{ghost_bottleneck_forward.1} parent=74 // pred_fallthru
          _
      $region75: #{ghost_bottleneck_forward.1} parent=5 // pred_fallthru
        _
      %p3631 = scmp.le.s32.totalorder 2, %s15
      // Predicated region
      $region118: #{ghost_bottleneck_forward.1} parent=5 // pred_check
        %p3632 = pneg %p3631
      $region119: #{ghost_bottleneck_forward.1} parent=5 // pred_check_branch
        %3634 = sbr.rel (%p3632) target = $region121
      $region120: #{ghost_bottleneck_forward.1} parent=5 // pred_region
        %s3635 = ssub.s32 %s15, 2
        // Predicated region
        $region122: #{ghost_bottleneck_forward.1} parent=120 // pred_check
          %p3636 = pneg %p238
        $region123: #{ghost_bottleneck_forward.1} parent=120 // pred_check_branch
          %3638 = sbr.rel (%p3636) target = $region125
        $region124: #{ghost_bottleneck_forward.1} parent=120 // pred_region
          %s3639 = sand.u32 %s223, 1
          %s3640 = sand.u32 %s223, 1
          %s3641 = smul.addr %s3640, 32
          %s3642 = scalar_lea.vmem [#allocation5], %s3641
        $region125: #{ghost_bottleneck_forward.1} parent=120 // pred_fallthru
          _
      $region121: #{ghost_bottleneck_forward.1} parent=5 // pred_fallthru
        _
    $region6: #{ghost_bottleneck_forward.1} parent=1 // loop_footer
      %s19 = sadd.s32 1, %s15
    $region7: #{ghost_bottleneck_forward.1} parent=1 // loop_footer_branch
      %14 = sbr.rel target = $region3
    $region8: #{ghost_bottleneck_forward.1} parent=1 // loop_exit
      _

</llo_original>
